<compile_context>
chip_gen: v6e
topology: v6e:2x2x1
jax: 0.10.0
libtpu: 0.0.40
codegen_flags: <defaults>
</compile_context>

<pallas_src>
import functools

import numpy as np
import jax
import jax.numpy as jnp
from jax.experimental import pallas as pl
from jax.experimental.pallas import tpu as pltpu

BIN_SIZES = (1, 2, 3, 6)


def _round_up(x, m):
    return ((x + m - 1) // m) * m


# ----------------------------------------------------------------------------
# Pallas kernel: fused  out = maybe_relu((A @ B) * scale + bias)
#   A: (M, K)   small "weight-like" operand (output channels on rows)
#   B: (K, Np)  large "pixel" operand, pixels on the lane (last) axis
#   scale/bias: per-row affine (folded BatchNorm / conv bias)
# Grid: (pixel tiles [parallel], K tiles [arbitrary], f32 VMEM accumulator).
# ----------------------------------------------------------------------------
def _fused_matmul_kernel(a_ref, b_ref, s_ref, c_ref, o_ref, acc_ref, *, relu):
    k = pl.program_id(1)

    @pl.when(k == 0)
    def _init():
        acc_ref[...] = jnp.zeros_like(acc_ref)

    acc_ref[...] += jnp.dot(a_ref[...], b_ref[...],
                            preferred_element_type=jnp.float32)

    @pl.when(k == pl.num_programs(1) - 1)
    def _finalize():
        out = acc_ref[...] * s_ref[...] + c_ref[...]
        if relu:
            out = jnp.maximum(out, 0.0)
        o_ref[...] = out.astype(o_ref.dtype)


def fused_matmul(a, b, scale=None, bias=None, relu=False,
                 out_dtype=jnp.float32, tn_max=512, tk_max=512):
    """maybe_relu((a @ b) * scale[:, None] + bias[:, None]) via one Pallas call.

    Operands are cast to bf16 (accumulation + epilogue stay f32).  The pixel
    axis (columns of b) is tiled onto lanes in 128-multiples up to 512 so the
    output stores are lane-dense; K > 512 is split over an accumulated grid
    axis so the weight block never has to hold the full K in VMEM.
    """
    M, K = a.shape
    K2, npix = b.shape
    assert K == K2, (a.shape, b.shape)

    if scale is None:
        scale = jnp.ones((M,), jnp.float32)
    if bias is None:
        bias = jnp.zeros((M,), jnp.float32)
    scale = jnp.asarray(scale, jnp.float32).reshape(M, 1)
    bias = jnp.asarray(bias, jnp.float32).reshape(M, 1)

    a = jnp.asarray(a, jnp.bfloat16)
    b = jnp.asarray(b, jnp.bfloat16)

    # Lane (pixel) tiling: multiples of 128, large tiles amortize grid-step cost.
    tn = min(tn_max, _round_up(npix, 128))
    n_padded = _round_up(npix, tn)
    if n_padded != npix:
        b = jnp.pad(b, ((0, 0), (0, n_padded - npix)))

    # K tiling: a single full-K block when small (full dims are exempt from the
    # (8,128) rule), otherwise 512-wide zero-padded chunks accumulated in VMEM.
    if K > tk_max:
        tk = tk_max
        k_padded = _round_up(K, tk)
        if k_padded != K:
            a = jnp.pad(a, ((0, 0), (0, k_padded - K)))
            b = jnp.pad(b, ((0, k_padded - K), (0, 0)))
    else:
        tk, k_padded = K, K
    nk = k_padded // tk

    out = pl.pallas_call(
        functools.partial(_fused_matmul_kernel, relu=relu),
        out_shape=jax.ShapeDtypeStruct((M, n_padded), out_dtype),
        grid=(n_padded // tn, nk),
        in_specs=[
            pl.BlockSpec((M, tk), lambda j, k: (0, k)),   # weight-like operand
            pl.BlockSpec((tk, tn), lambda j, k: (k, j)),  # pixel operand (lanes)
            pl.BlockSpec((M, 1), lambda j, k: (0, 0)),    # per-row scale
            pl.BlockSpec((M, 1), lambda j, k: (0, 0)),    # per-row bias
        ],
        out_specs=pl.BlockSpec((M, tn), lambda j, k: (0, j)),
        scratch_shapes=[pltpu.VMEM((M, tn), jnp.float32)],
        compiler_params=pltpu.CompilerParams(
            dimension_semantics=("parallel", "arbitrary"),
            vmem_limit_bytes=32 * 1024 * 1024),
    )(a, b, scale, bias)
    return out[:, :npix]


# ----------------------------------------------------------------------------
# Layer helpers (glue; all hot-path compute goes through fused_matmul)
# ----------------------------------------------------------------------------
def bn_fold(gamma, beta, mean, var, eps=1e-5):
    """Fold eval-mode BatchNorm2d into a per-channel (scale, bias)."""
    scale = gamma / jnp.sqrt(var + eps)
    return scale, beta - mean * scale


def conv2d(x, w, stride=1, padding=0, scale_bias=(None, None), relu=False,
           out_dtype=jnp.bfloat16):
    """Conv on channel-major activations.

    x: (Cin, N, H, W), w: PyTorch OIHW (Cout, Cin, kh, kw).
    Computed as out^T = W_mat @ patches^T so the pixel axis lands on lanes.
    Returns (Cout, N, Ho, Wo).
    """
    scale, bias = scale_bias
    cin, n, h, w_sp = x.shape
    cout, cin_w, kh, kw = w.shape
    assert cin == cin_w
    if padding:
        x = jnp.pad(x, ((0, 0), (0, 0), (padding, padding), (padding, padding)))
    hp, wp = h + 2 * padding, w_sp + 2 * padding
    ho = (hp - kh) // stride + 1
    wo = (wp - kw) // stride + 1
    # TODO(synk): the kh*kw tap shift is still materialized by XLA (strided
    # slices + stack); moving it in-kernel needs manual / Element-indexed DMA.
    taps = [x[:, :, i:i + stride * (ho - 1) + 1:stride,
              j:j + stride * (wo - 1) + 1:stride]
            for i in range(kh) for j in range(kw)]
    bmat = jnp.stack(taps, axis=0).reshape(kh * kw * cin, n * ho * wo)
    amat = jnp.transpose(w, (0, 2, 3, 1)).reshape(cout, kh * kw * cin)
    out = fused_matmul(amat, bmat, scale=scale, bias=bias, relu=relu,
                       out_dtype=out_dtype)
    return out.reshape(cout, n, ho, wo)


def maxpool_3x3_s2_p1(x):
    # TODO(synk): MaxPool2d kept as lax.reduce_window glue (tiny, non-matmul op).
    return jax.lax.reduce_window(
        x, jnp.array(-jnp.inf, dtype=x.dtype), jax.lax.max,
        window_dimensions=(1, 1, 3, 3), window_strides=(1, 1, 2, 2),
        padding=((0, 0), (0, 0), (1, 1), (1, 1)))


def _adaptive_pool_matrix(in_size, out_size):
    """Row-stochastic matrix implementing 1-D adaptive average pooling (PyTorch bins)."""
    P = np.zeros((out_size, in_size), dtype=np.float64)
    for o in range(out_size):
        start = (o * in_size) // out_size
        end = -((-(o + 1) * in_size) // out_size)  # ceil((o+1)*in/out)
        P[o, start:end] = 1.0 / (end - start)
    return P


def _interp_matrix(in_size, out_size, align_corners):
    """1-D bilinear interpolation matrix matching torch.nn.functional.interpolate."""
    out_idx = np.arange(out_size, dtype=np.float64)
    if align_corners:
        src = out_idx * ((in_size - 1) / (out_size - 1)) if out_size > 1 else np.zeros_like(out_idx)
    else:
        src = np.maximum((out_idx + 0.5) * (in_size / out_size) - 0.5, 0.0)
    i0 = np.minimum(np.floor(src).astype(np.int64), in_size - 1)
    i1 = np.minimum(i0 + 1, in_size - 1)
    lam = src - i0
    M = np.zeros((out_size, in_size), dtype=np.float64)
    np.add.at(M, (np.arange(out_size), i0), 1.0 - lam)
    np.add.at(M, (np.arange(out_size), i1), lam)
    return M


def _block_diag(blocks):
    rows = sum(b.shape[0] for b in blocks)
    cols = sum(b.shape[1] for b in blocks)
    out = np.zeros((rows, cols), dtype=np.float32)
    ro = co = 0
    for b in blocks:
        out[ro:ro + b.shape[0], co:co + b.shape[1]] = b
        ro += b.shape[0]
        co += b.shape[1]
    return out


# ----------------------------------------------------------------------------
# PSP head (pools / stage convs / upsamples each batched into ONE pallas_call)
# ----------------------------------------------------------------------------
def psp_head(x, p):
    """_PSPModule + classifier on channel-major features x: (C, N, h, w)."""
    c, n, h, w = x.shape
    out_c = c // len(BIN_SIZES)
    hw = h * w

    # 1) All four adaptive average pools in one fused matmul:
    #    (C*N, h*w) @ (h*w, sum b^2).  Pooled outputs are tiny (<= 6x6 per bin).
    pool_t = np.concatenate(
        [np.kron(_adaptive_pool_matrix(h, b), _adaptive_pool_matrix(w, b))
         for b in BIN_SIZES], axis=0).T.astype(np.float32)          # (h*w, 50)
    pooled = fused_matmul(x.reshape(c * n, hw), jnp.asarray(pool_t),
                          out_dtype=jnp.bfloat16)                   # (C*N, 50)
    pooled = pooled.reshape(c, n, -1)
    pix_off = np.cumsum([0] + [b * b for b in BIN_SIZES])
    pooled_cols = jnp.concatenate(
        [pooled[:, :, pix_off[i]:pix_off[i + 1]].reshape(c, n * BIN_SIZES[i] ** 2)
         for i in range(len(BIN_SIZES))], axis=1)                   # (C, N*50)

    # 2) All four 1x1 stage convs + folded BN + ReLU in one fused matmul
    #    (weights stacked on rows; per-row affine = per-stage folded BN).
    w_stack = jnp.concatenate(
        [p[f'stage{i}_w'].reshape(out_c, c) for i in range(len(BIN_SIZES))], axis=0)
    folds = [bn_fold(*p[f'stage{i}_bn']) for i in range(len(BIN_SIZES))]
    sc = jnp.concatenate([f[0] for f in folds])
    bi = jnp.concatenate([f[1] for f in folds])
    stage_out = fused_matmul(w_stack, pooled_cols, scale=sc, bias=bi, relu=True,
                             out_dtype=jnp.bfloat16)                # (4*out_c, N*50)

    # 3) All four bilinear upsamples (align_corners=True) in one fused matmul
    #    via a block-diagonal interpolation matrix; lanes = 4*h*w (dense).
    col_off = np.cumsum([0] + [n * b * b for b in BIN_SIZES])
    a_blocks, b_blocks = [], []
    for i, b in enumerate(BIN_SIZES):
        y_i = stage_out[i * out_c:(i + 1) * out_c,
                        col_off[i]:col_off[i + 1]].reshape(out_c * n, b * b)
        a_blocks.append(y_i)
        up = np.kron(_interp_matrix(b, h, True), _interp_matrix(b, w, True))
        b_blocks.append(up.T)                                       # (b^2, h*w)
    ups = fused_matmul(jnp.concatenate(a_blocks, axis=1),
                       jnp.asarray(_block_diag(b_blocks)),
                       out_dtype=jnp.bfloat16)                      # (out_c*N, 4*h*w)

    pyramids = [x.astype(jnp.bfloat16)]
    for i in range(len(BIN_SIZES)):
        pyramids.append(ups[:, i * hw:(i + 1) * hw].reshape(out_c, n, h, w))
    feat = jnp.concatenate(pyramids, axis=0)      # channel concat (torch dim=1)

    # 4) bottleneck 3x3 conv + BN + ReLU; Dropout2d(0.1) is identity in eval.
    y = conv2d(feat, p['bneck_w'], stride=1, padding=1,
               scale_bias=bn_fold(*p['bneck_bn']), relu=True)
    # 5) classifier 1x1 conv (with bias).
    y = conv2d(y, p['cls_w'], stride=1, padding=0,
               scale_bias=(None, p['cls_b']), relu=False, out_dtype=jnp.float32)
    return y                                      # (num_classes, N, h, w)


def bilinear_resize_nchw(y, h_out, w_out, align_corners):
    """Separable bilinear resize (two matmul passes, no Kronecker product).
    y: (C, N, h, w) -> NCHW (N, C, h_out, w_out)."""
    c, n, h, w = y.shape
    mh = jnp.asarray(_interp_matrix(h, h_out, align_corners), jnp.float32)
    mw = jnp.asarray(_interp_matrix(w, w_out, align_corners), jnp.float32)
    # H pass: (h_out, h) @ (h, C*N*w) — large flat axis on lanes.
    t = fused_matmul(mh, jnp.transpose(y, (2, 0, 1, 3)).reshape(h, c * n * w))
    # W pass: (w_out, w) @ (w, h_out*C*N)
    t = jnp.transpose(t.reshape(h_out, c, n, w), (3, 0, 1, 2)).reshape(w, h_out * c * n)
    t = fused_matmul(mw, t)
    return jnp.transpose(t.reshape(w_out, h_out, c, n), (3, 2, 1, 0))


# ----------------------------------------------------------------------------
# Parameters (deterministic, in-script)
# ----------------------------------------------------------------------------
def init_params(key, in_channels=3, m_out_sz=32, num_classes=4):
    ks = iter(jax.random.split(key, 64))

    def conv(cout, cin, k):
        fan = cin * k * k
        return jax.random.normal(next(ks), (cout, cin, k, k), jnp.float32) / np.sqrt(fan)

    def bn(c):
        gamma = 1.0 + 0.1 * jax.random.normal(next(ks), (c,), jnp.float32)
        beta = 0.1 * jax.random.normal(next(ks), (c,), jnp.float32)
        mean = 0.1 * jax.random.normal(next(ks), (c,), jnp.float32)
        var = 1.0 + 0.1 * jnp.abs(jax.random.normal(next(ks), (c,), jnp.float32))
        return (gamma, beta, mean, var)

    p = {}
    # TODO(synk): the real resnet152 backbone (external `resnet` module, not
    # provided in the reference) is replaced by a reduced conv-BN-ReLU stand-in
    # preserving the stride / channel topology that feeds the PSP head.
    c0, c1, c2, c3, c4 = 8, 8, 16, m_out_sz // 2, m_out_sz
    p['init_w'] = conv(c0, in_channels, 7); p['init_bn'] = bn(c0)
    p['layer1_w'] = conv(c1, c0, 3); p['layer1_bn'] = bn(c1)
    p['layer2_w'] = conv(c2, c1, 3); p['layer2_bn'] = bn(c2)
    p['layer3_w'] = conv(c3, c2, 3); p['layer3_bn'] = bn(c3)
    p['layer4_w'] = conv(c4, c3, 3); p['layer4_bn'] = bn(c4)

    out_c = m_out_sz // len(BIN_SIZES)
    for i, _ in enumerate(BIN_SIZES):
        p[f'stage{i}_w'] = conv(out_c, m_out_sz, 1)
        p[f'stage{i}_bn'] = bn(out_c)
    p['bneck_w'] = conv(out_c, m_out_sz + out_c * len(BIN_SIZES), 3)
    p['bneck_bn'] = bn(out_c)
    p['cls_w'] = conv(num_classes, out_c, 1)
    p['cls_b'] = 0.1 * jax.random.normal(next(ks), (num_classes,), jnp.float32)
    return p


# ----------------------------------------------------------------------------
# Forward
# ----------------------------------------------------------------------------
def pspnet_forward(x_nchw, p):
    h_in, w_in = x_nchw.shape[2], x_nchw.shape[3]
    x = jnp.transpose(x_nchw, (1, 0, 2, 3)).astype(jnp.float32)  # NCHW -> (C, N, H, W)

    # --- backbone (stand-in; see TODO in init_params) ---
    x = conv2d(x, p['init_w'], stride=2, padding=3,
               scale_bias=bn_fold(*p['init_bn']), relu=True)
    x = maxpool_3x3_s2_p1(x)
    for name, stride in (('layer1', 1), ('layer2', 2), ('layer3', 1), ('layer4', 1)):
        x = conv2d(x, p[name + '_w'], stride=stride, padding=1,
                   scale_bias=bn_fold(*p[name + '_bn']), relu=True)

    # --- _PSPModule + classifier (master branch; eval mode) ---
    y = psp_head(x, p)

    # --- final bilinear resize to input size (align_corners=False) + (no-op) crop ---
    out = bilinear_resize_nchw(y, h_in, w_in, align_corners=False)
    return out[:, :, :h_in, :w_in]


# ----------------------------------------------------------------------------
if __name__ == "__main__":
    key = jax.random.PRNGKey(0)
    k_x, k_p = jax.random.split(key)
    N, Cin, H, W = 2, 3, 48, 48
    num_classes = 4

    x = jax.random.normal(k_x, (N, Cin, H, W), jnp.float32)
    params = init_params(k_p, in_channels=Cin, m_out_sz=32, num_classes=num_classes)

    fwd = jax.jit(pspnet_forward)
    out = jax.block_until_ready(fwd(x, params))
    assert out.shape == (N, num_classes, H, W), out.shape
    assert bool(jnp.all(jnp.isfinite(out)))
    print("KERNEL_OK")
</pallas_src>

<mosaic_0001>
module attributes {stable_mosaic.version = 11 : i64} {
  func.func @_fused_matmul_kernel(%arg0: i32, %arg1: i32, %arg2: memref<8x147xbf16, #tpu.memory_space<vmem>>, %arg3: memref<147x512xbf16, #tpu.memory_space<vmem>>, %arg4: memref<8x1xf32, #tpu.memory_space<vmem>>, %arg5: memref<8x1xf32, #tpu.memory_space<vmem>>, %arg6: memref<8x512xbf16, #tpu.memory_space<vmem>>, %arg7: memref<8x512xf32, #tpu.memory_space<vmem>>) attributes {dimension_semantics = [#tpu.dimension_semantics<parallel>, #tpu.dimension_semantics<arbitrary>], iteration_bounds = array<i64: 3, 1>, scalar_prefetch = 0 : i64, scratch_operands = 1 : i64, tpu.core_type = #tpu.core_type<tc>, window_params = [{transform_indices = @transform_0, window_bounds = array<i64: 8, 147>}, {transform_indices = @transform_1, window_bounds = array<i64: 147, 512>}, {pipeline_mode = #tpu.pipeline_mode<synchronous>, transform_indices = @transform_2, window_bounds = array<i64: 8, 1>}, {pipeline_mode = #tpu.pipeline_mode<synchronous>, transform_indices = @transform_3, window_bounds = array<i64: 8, 1>}, {transform_indices = @transform_4, window_bounds = array<i64: 8, 512>}]} {
    %c0_i32 = arith.constant 0 : i32
    %0 = arith.cmpi eq, %arg1, %c0_i32 : i32
    %1 = arith.extui %0 : i1 to i32
    %c0_i32_0 = arith.constant 0 : i32
    %2 = arith.cmpi ne, %1, %c0_i32_0 : i32
    scf.if %2 {
      %cst_10 = arith.constant 0.000000e+00 : f32
      %12 = vector.broadcast %cst_10 : f32 to vector<8x512xf32>
      %c0_11 = arith.constant 0 : index
      %c0_12 = arith.constant 0 : index
      %13 = vector.load %arg7[%c0_11, %c0_12] : memref<8x512xf32, #tpu.memory_space<vmem>>, vector<8x512xf32>
      tpu.vector_store %arg7[%c0_11, %c0_12], %12 {strides = array<i32>} : memref<8x512xf32, #tpu.memory_space<vmem>>, vector<8x512xf32>,
    } else {
    }
    %c0 = arith.constant 0 : index
    %c0_1 = arith.constant 0 : index
    %3 = vector.load %arg7[%c0, %c0_1] : memref<8x512xf32, #tpu.memory_space<vmem>>, vector<8x512xf32>
    %c0_2 = arith.constant 0 : index
    %c0_3 = arith.constant 0 : index
    %4 = vector.load %arg2[%c0_2, %c0_3] : memref<8x147xbf16, #tpu.memory_space<vmem>>, vector<8x147xbf16>
    %c0_4 = arith.constant 0 : index
    %c0_5 = arith.constant 0 : index
    %5 = vector.load %arg3[%c0_4, %c0_5] : memref<147x512xbf16, #tpu.memory_space<vmem>>, vector<147x512xbf16>
    %cst = arith.constant dense<0.000000e+00> : vector<8x512xf32>
    %6 = tpu.matmul %4, %5, %cst {dimension_numbers = #tpu.dot_dimension_numbers<[1], [0], [0], [1], [0, 0, 1, 1], [], []>} : vector<8x147xbf16>, vector<147x512xbf16>, vector<8x512xf32> -> vector<8x512xf32>
    %7 = arith.addf %3, %6 : vector<8x512xf32>
    %c0_6 = arith.constant 0 : index
    %c0_7 = arith.constant 0 : index
    %8 = vector.load %arg7[%c0_6, %c0_7] : memref<8x512xf32, #tpu.memory_space<vmem>>, vector<8x512xf32>
    tpu.vector_store %arg7[%c0_6, %c0_7], %7 {strides = array<i32>} : memref<8x512xf32, #tpu.memory_space<vmem>>, vector<8x512xf32>,
    %c0_i32_8 = arith.constant 0 : i32
    %9 = arith.cmpi eq, %arg1, %c0_i32_8 : i32
    %10 = arith.extui %9 : i1 to i32
    %c0_i32_9 = arith.constant 0 : i32
    %11 = arith.cmpi ne, %10, %c0_i32_9 : i32
    scf.if %11 {
      %c0_10 = arith.constant 0 : index
      %c0_11 = arith.constant 0 : index
      %12 = vector.load %arg7[%c0_10, %c0_11] : memref<8x512xf32, #tpu.memory_space<vmem>>, vector<8x512xf32>
      %c0_12 = arith.constant 0 : index
      %c0_13 = arith.constant 0 : index
      %13 = vector.load %arg4[%c0_12, %c0_13] : memref<8x1xf32, #tpu.memory_space<vmem>>, vector<8x1xf32>
      %14 = vector.broadcast %13 : vector<8x1xf32> to vector<8x512xf32>
      %15 = arith.mulf %12, %14 : vector<8x512xf32>
      %c0_14 = arith.constant 0 : index
      %c0_15 = arith.constant 0 : index
      %16 = vector.load %arg5[%c0_14, %c0_15] : memref<8x1xf32, #tpu.memory_space<vmem>>, vector<8x1xf32>
      %17 = vector.broadcast %16 : vector<8x1xf32> to vector<8x512xf32>
      %18 = arith.addf %15, %17 : vector<8x512xf32>
      %cst_16 = arith.constant 0.000000e+00 : f32
      %19 = vector.broadcast %cst_16 : f32 to vector<8x512xf32>
      %20 = arith.maximumf %18, %19 : vector<8x512xf32>
      %21 = arith.truncf %20 : vector<8x512xf32> to vector<8x512xbf16>
      %c0_17 = arith.constant 0 : index
      %c0_18 = arith.constant 0 : index
      %22 = vector.load %arg6[%c0_17, %c0_18] : memref<8x512xbf16, #tpu.memory_space<vmem>>, vector<8x512xbf16>
      tpu.vector_store %arg6[%c0_17, %c0_18], %21 {strides = array<i32>} : memref<8x512xbf16, #tpu.memory_space<vmem>>, vector<8x512xbf16>,
    } else {
    }
    return
  }
  func.func @transform_0(%arg0: i32, %arg1: i32) -> (i32, i32) {
    %c0_i32 = arith.constant 0 : i32
    %c0_i32_0 = arith.constant 0 : i32
    return %c0_i32, %arg1 : i32, i32
  }
  func.func @transform_1(%arg0: i32, %arg1: i32) -> (i32, i32) {
    %c0_i32 = arith.constant 0 : i32
    return %arg1, %arg0 : i32, i32
  }
  func.func @transform_2(%arg0: i32, %arg1: i32) -> (i32, i32) {
    %c0_i32 = arith.constant 0 : i32
    %c0_i32_0 = arith.constant 0 : i32
    %c0_i32_1 = arith.constant 0 : i32
    return %c0_i32, %c0_i32_0 : i32, i32
  }
  func.func @transform_3(%arg0: i32, %arg1: i32) -> (i32, i32) {
    %c0_i32 = arith.constant 0 : i32
    %c0_i32_0 = arith.constant 0 : i32
    %c0_i32_1 = arith.constant 0 : i32
    return %c0_i32, %c0_i32_0 : i32, i32
  }
  func.func @transform_4(%arg0: i32, %arg1: i32) -> (i32, i32) {
    %c0_i32 = arith.constant 0 : i32
    %c0_i32_0 = arith.constant 0 : i32
    return %c0_i32, %arg0 : i32, i32
  }
}

module attributes {stable_mosaic.version = 11 : i64} {
  func.func @_fused_matmul_kernel(%arg0: i32, %arg1: i32, %arg2: memref<8x72xbf16, #tpu.memory_space<vmem>>, %arg3: memref<72x384xbf16, #tpu.memory_space<vmem>>, %arg4: memref<8x1xf32, #tpu.memory_space<vmem>>, %arg5: memref<8x1xf32, #tpu.memory_space<vmem>>, %arg6: memref<8x384xbf16, #tpu.memory_space<vmem>>, %arg7: memref<8x384xf32, #tpu.memory_space<vmem>>) attributes {dimension_semantics = [#tpu.dimension_semantics<parallel>, #tpu.dimension_semantics<arbitrary>], iteration_bounds = array<i64: 1, 1>, scalar_prefetch = 0 : i64, scratch_operands = 1 : i64, tpu.core_type = #tpu.core_type<tc>, window_params = [{transform_indices = @transform_0, window_bounds = array<i64: 8, 72>}, {transform_indices = @transform_1, window_bounds = array<i64: 72, 384>}, {pipeline_mode = #tpu.pipeline_mode<synchronous>, transform_indices = @transform_2, window_bounds = array<i64: 8, 1>}, {pipeline_mode = #tpu.pipeline_mode<synchronous>, transform_indices = @transform_3, window_bounds = array<i64: 8, 1>}, {transform_indices = @transform_4, window_bounds = array<i64: 8, 384>}]} {
    %c0_i32 = arith.constant 0 : i32
    %0 = arith.cmpi eq, %arg1, %c0_i32 : i32
    %1 = arith.extui %0 : i1 to i32
    %c0_i32_0 = arith.constant 0 : i32
    %2 = arith.cmpi ne, %1, %c0_i32_0 : i32
    scf.if %2 {
      %cst_10 = arith.constant 0.000000e+00 : f32
      %12 = vector.broadcast %cst_10 : f32 to vector<8x384xf32>
      %c0_11 = arith.constant 0 : index
      %c0_12 = arith.constant 0 : index
      %13 = vector.load %arg7[%c0_11, %c0_12] : memref<8x384xf32, #tpu.memory_space<vmem>>, vector<8x384xf32>
      tpu.vector_store %arg7[%c0_11, %c0_12], %12 {strides = array<i32>} : memref<8x384xf32, #tpu.memory_space<vmem>>, vector<8x384xf32>,
    } else {
    }
    %c0 = arith.constant 0 : index
    %c0_1 = arith.constant 0 : index
    %3 = vector.load %arg7[%c0, %c0_1] : memref<8x384xf32, #tpu.memory_space<vmem>>, vector<8x384xf32>
    %c0_2 = arith.constant 0 : index
    %c0_3 = arith.constant 0 : index
    %4 = vector.load %arg2[%c0_2, %c0_3] : memref<8x72xbf16, #tpu.memory_space<vmem>>, vector<8x72xbf16>
    %c0_4 = arith.constant 0 : index
    %c0_5 = arith.constant 0 : index
    %5 = vector.load %arg3[%c0_4, %c0_5] : memref<72x384xbf16, #tpu.memory_space<vmem>>, vector<72x384xbf16>
    %cst = arith.constant dense<0.000000e+00> : vector<8x384xf32>
    %6 = tpu.matmul %4, %5, %cst {dimension_numbers = #tpu.dot_dimension_numbers<[1], [0], [0], [1], [0, 0, 1, 1], [], []>} : vector<8x72xbf16>, vector<72x384xbf16>, vector<8x384xf32> -> vector<8x384xf32>
    %7 = arith.addf %3, %6 : vector<8x384xf32>
    %c0_6 = arith.constant 0 : index
    %c0_7 = arith.constant 0 : index
    %8 = vector.load %arg7[%c0_6, %c0_7] : memref<8x384xf32, #tpu.memory_space<vmem>>, vector<8x384xf32>
    tpu.vector_store %arg7[%c0_6, %c0_7], %7 {strides = array<i32>} : memref<8x384xf32, #tpu.memory_space<vmem>>, vector<8x384xf32>,
    %c0_i32_8 = arith.constant 0 : i32
    %9 = arith.cmpi eq, %arg1, %c0_i32_8 : i32
    %10 = arith.extui %9 : i1 to i32
    %c0_i32_9 = arith.constant 0 : i32
    %11 = arith.cmpi ne, %10, %c0_i32_9 : i32
    scf.if %11 {
      %c0_10 = arith.constant 0 : index
      %c0_11 = arith.constant 0 : index
      %12 = vector.load %arg7[%c0_10, %c0_11] : memref<8x384xf32, #tpu.memory_space<vmem>>, vector<8x384xf32>
      %c0_12 = arith.constant 0 : index
      %c0_13 = arith.constant 0 : index
      %13 = vector.load %arg4[%c0_12, %c0_13] : memref<8x1xf32, #tpu.memory_space<vmem>>, vector<8x1xf32>
      %14 = vector.broadcast %13 : vector<8x1xf32> to vector<8x384xf32>
      %15 = arith.mulf %12, %14 : vector<8x384xf32>
      %c0_14 = arith.constant 0 : index
      %c0_15 = arith.constant 0 : index
      %16 = vector.load %arg5[%c0_14, %c0_15] : memref<8x1xf32, #tpu.memory_space<vmem>>, vector<8x1xf32>
      %17 = vector.broadcast %16 : vector<8x1xf32> to vector<8x384xf32>
      %18 = arith.addf %15, %17 : vector<8x384xf32>
      %cst_16 = arith.constant 0.000000e+00 : f32
      %19 = vector.broadcast %cst_16 : f32 to vector<8x384xf32>
      %20 = arith.maximumf %18, %19 : vector<8x384xf32>
      %21 = arith.truncf %20 : vector<8x384xf32> to vector<8x384xbf16>
      %c0_17 = arith.constant 0 : index
      %c0_18 = arith.constant 0 : index
      %22 = vector.load %arg6[%c0_17, %c0_18] : memref<8x384xbf16, #tpu.memory_space<vmem>>, vector<8x384xbf16>
      tpu.vector_store %arg6[%c0_17, %c0_18], %21 {strides = array<i32>} : memref<8x384xbf16, #tpu.memory_space<vmem>>, vector<8x384xbf16>,
    } else {
    }
    return
  }
  func.func @transform_0(%arg0: i32, %arg1: i32) -> (i32, i32) {
    %c0_i32 = arith.constant 0 : i32
    %c0_i32_0 = arith.constant 0 : i32
    return %c0_i32, %arg1 : i32, i32
  }
  func.func @transform_1(%arg0: i32, %arg1: i32) -> (i32, i32) {
    %c0_i32 = arith.constant 0 : i32
    return %arg1, %arg0 : i32, i32
  }
  func.func @transform_2(%arg0: i32, %arg1: i32) -> (i32, i32) {
    %c0_i32 = arith.constant 0 : i32
    %c0_i32_0 = arith.constant 0 : i32
    %c0_i32_1 = arith.constant 0 : i32
    return %c0_i32, %c0_i32_0 : i32, i32
  }
  func.func @transform_3(%arg0: i32, %arg1: i32) -> (i32, i32) {
    %c0_i32 = arith.constant 0 : i32
    %c0_i32_0 = arith.constant 0 : i32
    %c0_i32_1 = arith.constant 0 : i32
    return %c0_i32, %c0_i32_0 : i32, i32
  }
  func.func @transform_4(%arg0: i32, %arg1: i32) -> (i32, i32) {
    %c0_i32 = arith.constant 0 : i32
    %c0_i32_0 = arith.constant 0 : i32
    return %c0_i32, %arg0 : i32, i32
  }
}

module attributes {stable_mosaic.version = 11 : i64} {
  func.func @_fused_matmul_kernel(%arg0: i32, %arg1: i32, %arg2: memref<16x72xbf16, #tpu.memory_space<vmem>>, %arg3: memref<72x128xbf16, #tpu.memory_space<vmem>>, %arg4: memref<16x1xf32, #tpu.memory_space<vmem>>, %arg5: memref<16x1xf32, #tpu.memory_space<vmem>>, %arg6: memref<16x128xbf16, #tpu.memory_space<vmem>>, %arg7: memref<16x128xf32, #tpu.memory_space<vmem>>) attributes {dimension_semantics = [#tpu.dimension_semantics<parallel>, #tpu.dimension_semantics<arbitrary>], iteration_bounds = array<i64: 1, 1>, scalar_prefetch = 0 : i64, scratch_operands = 1 : i64, tpu.core_type = #tpu.core_type<tc>, window_params = [{transform_indices = @transform_0, window_bounds = array<i64: 16, 72>}, {transform_indices = @transform_1, window_bounds = array<i64: 72, 128>}, {pipeline_mode = #tpu.pipeline_mode<synchronous>, transform_indices = @transform_2, window_bounds = array<i64: 16, 1>}, {pipeline_mode = #tpu.pipeline_mode<synchronous>, transform_indices = @transform_3, window_bounds = array<i64: 16, 1>}, {transform_indices = @transform_4, window_bounds = array<i64: 16, 128>}]} {
    %c0_i32 = arith.constant 0 : i32
    %0 = arith.cmpi eq, %arg1, %c0_i32 : i32
    %1 = arith.extui %0 : i1 to i32
    %c0_i32_0 = arith.constant 0 : i32
    %2 = arith.cmpi ne, %1, %c0_i32_0 : i32
    scf.if %2 {
      %cst_10 = arith.constant 0.000000e+00 : f32
      %12 = vector.broadcast %cst_10 : f32 to vector<16x128xf32>
      %c0_11 = arith.constant 0 : index
      %c0_12 = arith.constant 0 : index
      %13 = vector.load %arg7[%c0_11, %c0_12] : memref<16x128xf32, #tpu.memory_space<vmem>>, vector<16x128xf32>
      tpu.vector_store %arg7[%c0_11, %c0_12], %12 {strides = array<i32>} : memref<16x128xf32, #tpu.memory_space<vmem>>, vector<16x128xf32>,
    } else {
    }
    %c0 = arith.constant 0 : index
    %c0_1 = arith.constant 0 : index
    %3 = vector.load %arg7[%c0, %c0_1] : memref<16x128xf32, #tpu.memory_space<vmem>>, vector<16x128xf32>
    %c0_2 = arith.constant 0 : index
    %c0_3 = arith.constant 0 : index
    %4 = vector.load %arg2[%c0_2, %c0_3] : memref<16x72xbf16, #tpu.memory_space<vmem>>, vector<16x72xbf16>
    %c0_4 = arith.constant 0 : index
    %c0_5 = arith.constant 0 : index
    %5 = vector.load %arg3[%c0_4, %c0_5] : memref<72x128xbf16, #tpu.memory_space<vmem>>, vector<72x128xbf16>
    %cst = arith.constant dense<0.000000e+00> : vector<16x128xf32>
    %6 = tpu.matmul %4, %5, %cst {dimension_numbers = #tpu.dot_dimension_numbers<[1], [0], [0], [1], [0, 0, 1, 1], [], []>} : vector<16x72xbf16>, vector<72x128xbf16>, vector<16x128xf32> -> vector<16x128xf32>
    %7 = arith.addf %3, %6 : vector<16x128xf32>
    %c0_6 = arith.constant 0 : index
    %c0_7 = arith.constant 0 : index
    %8 = vector.load %arg7[%c0_6, %c0_7] : memref<16x128xf32, #tpu.memory_space<vmem>>, vector<16x128xf32>
    tpu.vector_store %arg7[%c0_6, %c0_7], %7 {strides = array<i32>} : memref<16x128xf32, #tpu.memory_space<vmem>>, vector<16x128xf32>,
    %c0_i32_8 = arith.constant 0 : i32
    %9 = arith.cmpi eq, %arg1, %c0_i32_8 : i32
    %10 = arith.extui %9 : i1 to i32
    %c0_i32_9 = arith.constant 0 : i32
    %11 = arith.cmpi ne, %10, %c0_i32_9 : i32
    scf.if %11 {
      %c0_10 = arith.constant 0 : index
      %c0_11 = arith.constant 0 : index
      %12 = vector.load %arg7[%c0_10, %c0_11] : memref<16x128xf32, #tpu.memory_space<vmem>>, vector<16x128xf32>
      %c0_12 = arith.constant 0 : index
      %c0_13 = arith.constant 0 : index
      %13 = vector.load %arg4[%c0_12, %c0_13] : memref<16x1xf32, #tpu.memory_space<vmem>>, vector<16x1xf32>
      %14 = vector.broadcast %13 : vector<16x1xf32> to vector<16x128xf32>
      %15 = arith.mulf %12, %14 : vector<16x128xf32>
      %c0_14 = arith.constant 0 : index
      %c0_15 = arith.constant 0 : index
      %16 = vector.load %arg5[%c0_14, %c0_15] : memref<16x1xf32, #tpu.memory_space<vmem>>, vector<16x1xf32>
      %17 = vector.broadcast %16 : vector<16x1xf32> to vector<16x128xf32>
      %18 = arith.addf %15, %17 : vector<16x128xf32>
      %cst_16 = arith.constant 0.000000e+00 : f32
      %19 = vector.broadcast %cst_16 : f32 to vector<16x128xf32>
      %20 = arith.maximumf %18, %19 : vector<16x128xf32>
      %21 = arith.truncf %20 : vector<16x128xf32> to vector<16x128xbf16>
      %c0_17 = arith.constant 0 : index
      %c0_18 = arith.constant 0 : index
      %22 = vector.load %arg6[%c0_17, %c0_18] : memref<16x128xbf16, #tpu.memory_space<vmem>>, vector<16x128xbf16>
      tpu.vector_store %arg6[%c0_17, %c0_18], %21 {strides = array<i32>} : memref<16x128xbf16, #tpu.memory_space<vmem>>, vector<16x128xbf16>,
    } else {
    }
    return
  }
  func.func @transform_0(%arg0: i32, %arg1: i32) -> (i32, i32) {
    %c0_i32 = arith.constant 0 : i32
    %c0_i32_0 = arith.constant 0 : i32
    return %c0_i32, %arg1 : i32, i32
  }
  func.func @transform_1(%arg0: i32, %arg1: i32) -> (i32, i32) {
    %c0_i32 = arith.constant 0 : i32
    return %arg1, %arg0 : i32, i32
  }
  func.func @transform_2(%arg0: i32, %arg1: i32) -> (i32, i32) {
    %c0_i32 = arith.constant 0 : i32
    %c0_i32_0 = arith.constant 0 : i32
    %c0_i32_1 = arith.constant 0 : i32
    return %c0_i32, %c0_i32_0 : i32, i32
  }
  func.func @transform_3(%arg0: i32, %arg1: i32) -> (i32, i32) {
    %c0_i32 = arith.constant 0 : i32
    %c0_i32_0 = arith.constant 0 : i32
    %c0_i32_1 = arith.constant 0 : i32
    return %c0_i32, %c0_i32_0 : i32, i32
  }
  func.func @transform_4(%arg0: i32, %arg1: i32) -> (i32, i32) {
    %c0_i32 = arith.constant 0 : i32
    %c0_i32_0 = arith.constant 0 : i32
    return %c0_i32, %arg0 : i32, i32
  }
}

module attributes {stable_mosaic.version = 11 : i64} {
  func.func @_fused_matmul_kernel(%arg0: i32, %arg1: i32, %arg2: memref<16x144xbf16, #tpu.memory_space<vmem>>, %arg3: memref<144x128xbf16, #tpu.memory_space<vmem>>, %arg4: memref<16x1xf32, #tpu.memory_space<vmem>>, %arg5: memref<16x1xf32, #tpu.memory_space<vmem>>, %arg6: memref<16x128xbf16, #tpu.memory_space<vmem>>, %arg7: memref<16x128xf32, #tpu.memory_space<vmem>>) attributes {dimension_semantics = [#tpu.dimension_semantics<parallel>, #tpu.dimension_semantics<arbitrary>], iteration_bounds = array<i64: 1, 1>, scalar_prefetch = 0 : i64, scratch_operands = 1 : i64, tpu.core_type = #tpu.core_type<tc>, window_params = [{transform_indices = @transform_0, window_bounds = array<i64: 16, 144>}, {transform_indices = @transform_1, window_bounds = array<i64: 144, 128>}, {pipeline_mode = #tpu.pipeline_mode<synchronous>, transform_indices = @transform_2, window_bounds = array<i64: 16, 1>}, {pipeline_mode = #tpu.pipeline_mode<synchronous>, transform_indices = @transform_3, window_bounds = array<i64: 16, 1>}, {transform_indices = @transform_4, window_bounds = array<i64: 16, 128>}]} {
    %c0_i32 = arith.constant 0 : i32
    %0 = arith.cmpi eq, %arg1, %c0_i32 : i32
    %1 = arith.extui %0 : i1 to i32
    %c0_i32_0 = arith.constant 0 : i32
    %2 = arith.cmpi ne, %1, %c0_i32_0 : i32
    scf.if %2 {
      %cst_10 = arith.constant 0.000000e+00 : f32
      %12 = vector.broadcast %cst_10 : f32 to vector<16x128xf32>
      %c0_11 = arith.constant 0 : index
      %c0_12 = arith.constant 0 : index
      %13 = vector.load %arg7[%c0_11, %c0_12] : memref<16x128xf32, #tpu.memory_space<vmem>>, vector<16x128xf32>
      tpu.vector_store %arg7[%c0_11, %c0_12], %12 {strides = array<i32>} : memref<16x128xf32, #tpu.memory_space<vmem>>, vector<16x128xf32>,
    } else {
    }
    %c0 = arith.constant 0 : index
    %c0_1 = arith.constant 0 : index
    %3 = vector.load %arg7[%c0, %c0_1] : memref<16x128xf32, #tpu.memory_space<vmem>>, vector<16x128xf32>
    %c0_2 = arith.constant 0 : index
    %c0_3 = arith.constant 0 : index
    %4 = vector.load %arg2[%c0_2, %c0_3] : memref<16x144xbf16, #tpu.memory_space<vmem>>, vector<16x144xbf16>
    %c0_4 = arith.constant 0 : index
    %c0_5 = arith.constant 0 : index
    %5 = vector.load %arg3[%c0_4, %c0_5] : memref<144x128xbf16, #tpu.memory_space<vmem>>, vector<144x128xbf16>
    %cst = arith.constant dense<0.000000e+00> : vector<16x128xf32>
    %6 = tpu.matmul %4, %5, %cst {dimension_numbers = #tpu.dot_dimension_numbers<[1], [0], [0], [1], [0, 0, 1, 1], [], []>} : vector<16x144xbf16>, vector<144x128xbf16>, vector<16x128xf32> -> vector<16x128xf32>
    %7 = arith.addf %3, %6 : vector<16x128xf32>
    %c0_6 = arith.constant 0 : index
    %c0_7 = arith.constant 0 : index
    %8 = vector.load %arg7[%c0_6, %c0_7] : memref<16x128xf32, #tpu.memory_space<vmem>>, vector<16x128xf32>
    tpu.vector_store %arg7[%c0_6, %c0_7], %7 {strides = array<i32>} : memref<16x128xf32, #tpu.memory_space<vmem>>, vector<16x128xf32>,
    %c0_i32_8 = arith.constant 0 : i32
    %9 = arith.cmpi eq, %arg1, %c0_i32_8 : i32
    %10 = arith.extui %9 : i1 to i32
    %c0_i32_9 = arith.constant 0 : i32
    %11 = arith.cmpi ne, %10, %c0_i32_9 : i32
    scf.if %11 {
      %c0_10 = arith.constant 0 : index
      %c0_11 = arith.constant 0 : index
      %12 = vector.load %arg7[%c0_10, %c0_11] : memref<16x128xf32, #tpu.memory_space<vmem>>, vector<16x128xf32>
      %c0_12 = arith.constant 0 : index
      %c0_13 = arith.constant 0 : index
      %13 = vector.load %arg4[%c0_12, %c0_13] : memref<16x1xf32, #tpu.memory_space<vmem>>, vector<16x1xf32>
      %14 = vector.broadcast %13 : vector<16x1xf32> to vector<16x128xf32>
      %15 = arith.mulf %12, %14 : vector<16x128xf32>
      %c0_14 = arith.constant 0 : index
      %c0_15 = arith.constant 0 : index
      %16 = vector.load %arg5[%c0_14, %c0_15] : memref<16x1xf32, #tpu.memory_space<vmem>>, vector<16x1xf32>
      %17 = vector.broadcast %16 : vector<16x1xf32> to vector<16x128xf32>
      %18 = arith.addf %15, %17 : vector<16x128xf32>
      %cst_16 = arith.constant 0.000000e+00 : f32
      %19 = vector.broadcast %cst_16 : f32 to vector<16x128xf32>
      %20 = arith.maximumf %18, %19 : vector<16x128xf32>
      %21 = arith.truncf %20 : vector<16x128xf32> to vector<16x128xbf16>
      %c0_17 = arith.constant 0 : index
      %c0_18 = arith.constant 0 : index
      %22 = vector.load %arg6[%c0_17, %c0_18] : memref<16x128xbf16, #tpu.memory_space<vmem>>, vector<16x128xbf16>
      tpu.vector_store %arg6[%c0_17, %c0_18], %21 {strides = array<i32>} : memref<16x128xbf16, #tpu.memory_space<vmem>>, vector<16x128xbf16>,
    } else {
    }
    return
  }
  func.func @transform_0(%arg0: i32, %arg1: i32) -> (i32, i32) {
    %c0_i32 = arith.constant 0 : i32
    %c0_i32_0 = arith.constant 0 : i32
    return %c0_i32, %arg1 : i32, i32
  }
  func.func @transform_1(%arg0: i32, %arg1: i32) -> (i32, i32) {
    %c0_i32 = arith.constant 0 : i32
    return %arg1, %arg0 : i32, i32
  }
  func.func @transform_2(%arg0: i32, %arg1: i32) -> (i32, i32) {
    %c0_i32 = arith.constant 0 : i32
    %c0_i32_0 = arith.constant 0 : i32
    %c0_i32_1 = arith.constant 0 : i32
    return %c0_i32, %c0_i32_0 : i32, i32
  }
  func.func @transform_3(%arg0: i32, %arg1: i32) -> (i32, i32) {
    %c0_i32 = arith.constant 0 : i32
    %c0_i32_0 = arith.constant 0 : i32
    %c0_i32_1 = arith.constant 0 : i32
    return %c0_i32, %c0_i32_0 : i32, i32
  }
  func.func @transform_4(%arg0: i32, %arg1: i32) -> (i32, i32) {
    %c0_i32 = arith.constant 0 : i32
    %c0_i32_0 = arith.constant 0 : i32
    return %c0_i32, %arg0 : i32, i32
  }
}

module attributes {stable_mosaic.version = 11 : i64} {
  func.func @_fused_matmul_kernel(%arg0: i32, %arg1: i32, %arg2: memref<64x36xbf16, #tpu.memory_space<vmem>>, %arg3: memref<36x128xbf16, #tpu.memory_space<vmem>>, %arg4: memref<64x1xf32, #tpu.memory_space<vmem>>, %arg5: memref<64x1xf32, #tpu.memory_space<vmem>>, %arg6: memref<64x128xbf16, #tpu.memory_space<vmem>>, %arg7: memref<64x128xf32, #tpu.memory_space<vmem>>) attributes {dimension_semantics = [#tpu.dimension_semantics<parallel>, #tpu.dimension_semantics<arbitrary>], iteration_bounds = array<i64: 1, 1>, scalar_prefetch = 0 : i64, scratch_operands = 1 : i64, tpu.core_type = #tpu.core_type<tc>, window_params = [{transform_indices = @transform_0, window_bounds = array<i64: 64, 36>}, {transform_indices = @transform_1, window_bounds = array<i64: 36, 128>}, {pipeline_mode = #tpu.pipeline_mode<synchronous>, transform_indices = @transform_2, window_bounds = array<i64: 64, 1>}, {pipeline_mode = #tpu.pipeline_mode<synchronous>, transform_indices = @transform_3, window_bounds = array<i64: 64, 1>}, {transform_indices = @transform_4, window_bounds = array<i64: 64, 128>}]} {
    %c0_i32 = arith.constant 0 : i32
    %0 = arith.cmpi eq, %arg1, %c0_i32 : i32
    %1 = arith.extui %0 : i1 to i32
    %c0_i32_0 = arith.constant 0 : i32
    %2 = arith.cmpi ne, %1, %c0_i32_0 : i32
    scf.if %2 {
      %cst_10 = arith.constant 0.000000e+00 : f32
      %12 = vector.broadcast %cst_10 : f32 to vector<64x128xf32>
      %c0_11 = arith.constant 0 : index
      %c0_12 = arith.constant 0 : index
      %13 = vector.load %arg7[%c0_11, %c0_12] : memref<64x128xf32, #tpu.memory_space<vmem>>, vector<64x128xf32>
      tpu.vector_store %arg7[%c0_11, %c0_12], %12 {strides = array<i32>} : memref<64x128xf32, #tpu.memory_space<vmem>>, vector<64x128xf32>,
    } else {
    }
    %c0 = arith.constant 0 : index
    %c0_1 = arith.constant 0 : index
    %3 = vector.load %arg7[%c0, %c0_1] : memref<64x128xf32, #tpu.memory_space<vmem>>, vector<64x128xf32>
    %c0_2 = arith.constant 0 : index
    %c0_3 = arith.constant 0 : index
    %4 = vector.load %arg2[%c0_2, %c0_3] : memref<64x36xbf16, #tpu.memory_space<vmem>>, vector<64x36xbf16>
    %c0_4 = arith.constant 0 : index
    %c0_5 = arith.constant 0 : index
    %5 = vector.load %arg3[%c0_4, %c0_5] : memref<36x128xbf16, #tpu.memory_space<vmem>>, vector<36x128xbf16>
    %cst = arith.constant dense<0.000000e+00> : vector<64x128xf32>
    %6 = tpu.matmul %4, %5, %cst {dimension_numbers = #tpu.dot_dimension_numbers<[1], [0], [0], [1], [0, 0, 1, 1], [], []>} : vector<64x36xbf16>, vector<36x128xbf16>, vector<64x128xf32> -> vector<64x128xf32>
    %7 = arith.addf %3, %6 : vector<64x128xf32>
    %c0_6 = arith.constant 0 : index
    %c0_7 = arith.constant 0 : index
    %8 = vector.load %arg7[%c0_6, %c0_7] : memref<64x128xf32, #tpu.memory_space<vmem>>, vector<64x128xf32>
    tpu.vector_store %arg7[%c0_6, %c0_7], %7 {strides = array<i32>} : memref<64x128xf32, #tpu.memory_space<vmem>>, vector<64x128xf32>,
    %c0_i32_8 = arith.constant 0 : i32
    %9 = arith.cmpi eq, %arg1, %c0_i32_8 : i32
    %10 = arith.extui %9 : i1 to i32
    %c0_i32_9 = arith.constant 0 : i32
    %11 = arith.cmpi ne, %10, %c0_i32_9 : i32
    scf.if %11 {
      %c0_10 = arith.constant 0 : index
      %c0_11 = arith.constant 0 : index
      %12 = vector.load %arg7[%c0_10, %c0_11] : memref<64x128xf32, #tpu.memory_space<vmem>>, vector<64x128xf32>
      %c0_12 = arith.constant 0 : index
      %c0_13 = arith.constant 0 : index
      %13 = vector.load %arg4[%c0_12, %c0_13] : memref<64x1xf32, #tpu.memory_space<vmem>>, vector<64x1xf32>
      %14 = vector.broadcast %13 : vector<64x1xf32> to vector<64x128xf32>
      %15 = arith.mulf %12, %14 : vector<64x128xf32>
      %c0_14 = arith.constant 0 : index
      %c0_15 = arith.constant 0 : index
      %16 = vector.load %arg5[%c0_14, %c0_15] : memref<64x1xf32, #tpu.memory_space<vmem>>, vector<64x1xf32>
      %17 = vector.broadcast %16 : vector<64x1xf32> to vector<64x128xf32>
      %18 = arith.addf %15, %17 : vector<64x128xf32>
      %19 = arith.truncf %18 : vector<64x128xf32> to vector<64x128xbf16>
      %c0_16 = arith.constant 0 : index
      %c0_17 = arith.constant 0 : index
      %20 = vector.load %arg6[%c0_16, %c0_17] : memref<64x128xbf16, #tpu.memory_space<vmem>>, vector<64x128xbf16>
      tpu.vector_store %arg6[%c0_16, %c0_17], %19 {strides = array<i32>} : memref<64x128xbf16, #tpu.memory_space<vmem>>, vector<64x128xbf16>,
    } else {
    }
    return
  }
  func.func @transform_0(%arg0: i32, %arg1: i32) -> (i32, i32) {
    %c0_i32 = arith.constant 0 : i32
    %c0_i32_0 = arith.constant 0 : i32
    return %c0_i32, %arg1 : i32, i32
  }
  func.func @transform_1(%arg0: i32, %arg1: i32) -> (i32, i32) {
    %c0_i32 = arith.constant 0 : i32
    return %arg1, %arg0 : i32, i32
  }
  func.func @transform_2(%arg0: i32, %arg1: i32) -> (i32, i32) {
    %c0_i32 = arith.constant 0 : i32
    %c0_i32_0 = arith.constant 0 : i32
    %c0_i32_1 = arith.constant 0 : i32
    return %c0_i32, %c0_i32_0 : i32, i32
  }
  func.func @transform_3(%arg0: i32, %arg1: i32) -> (i32, i32) {
    %c0_i32 = arith.constant 0 : i32
    %c0_i32_0 = arith.constant 0 : i32
    %c0_i32_1 = arith.constant 0 : i32
    return %c0_i32, %c0_i32_0 : i32, i32
  }
  func.func @transform_4(%arg0: i32, %arg1: i32) -> (i32, i32) {
    %c0_i32 = arith.constant 0 : i32
    %c0_i32_0 = arith.constant 0 : i32
    return %c0_i32, %arg0 : i32, i32
  }
}

module attributes {stable_mosaic.version = 11 : i64} {
  func.func @_fused_matmul_kernel(%arg0: i32, %arg1: i32, %arg2: memref<32x144xbf16, #tpu.memory_space<vmem>>, %arg3: memref<144x128xbf16, #tpu.memory_space<vmem>>, %arg4: memref<32x1xf32, #tpu.memory_space<vmem>>, %arg5: memref<32x1xf32, #tpu.memory_space<vmem>>, %arg6: memref<32x128xbf16, #tpu.memory_space<vmem>>, %arg7: memref<32x128xf32, #tpu.memory_space<vmem>>) attributes {dimension_semantics = [#tpu.dimension_semantics<parallel>, #tpu.dimension_semantics<arbitrary>], iteration_bounds = array<i64: 1, 1>, scalar_prefetch = 0 : i64, scratch_operands = 1 : i64, tpu.core_type = #tpu.core_type<tc>, window_params = [{transform_indices = @transform_0, window_bounds = array<i64: 32, 144>}, {transform_indices = @transform_1, window_bounds = array<i64: 144, 128>}, {pipeline_mode = #tpu.pipeline_mode<synchronous>, transform_indices = @transform_2, window_bounds = array<i64: 32, 1>}, {pipeline_mode = #tpu.pipeline_mode<synchronous>, transform_indices = @transform_3, window_bounds = array<i64: 32, 1>}, {transform_indices = @transform_4, window_bounds = array<i64: 32, 128>}]} {
    %c0_i32 = arith.constant 0 : i32
    %0 = arith.cmpi eq, %arg1, %c0_i32 : i32
    %1 = arith.extui %0 : i1 to i32
    %c0_i32_0 = arith.constant 0 : i32
    %2 = arith.cmpi ne, %1, %c0_i32_0 : i32
    scf.if %2 {
      %cst_10 = arith.constant 0.000000e+00 : f32
      %12 = vector.broadcast %cst_10 : f32 to vector<32x128xf32>
      %c0_11 = arith.constant 0 : index
      %c0_12 = arith.constant 0 : index
      %13 = vector.load %arg7[%c0_11, %c0_12] : memref<32x128xf32, #tpu.memory_space<vmem>>, vector<32x128xf32>
      tpu.vector_store %arg7[%c0_11, %c0_12], %12 {strides = array<i32>} : memref<32x128xf32, #tpu.memory_space<vmem>>, vector<32x128xf32>,
    } else {
    }
    %c0 = arith.constant 0 : index
    %c0_1 = arith.constant 0 : index
    %3 = vector.load %arg7[%c0, %c0_1] : memref<32x128xf32, #tpu.memory_space<vmem>>, vector<32x128xf32>
    %c0_2 = arith.constant 0 : index
    %c0_3 = arith.constant 0 : index
    %4 = vector.load %arg2[%c0_2, %c0_3] : memref<32x144xbf16, #tpu.memory_space<vmem>>, vector<32x144xbf16>
    %c0_4 = arith.constant 0 : index
    %c0_5 = arith.constant 0 : index
    %5 = vector.load %arg3[%c0_4, %c0_5] : memref<144x128xbf16, #tpu.memory_space<vmem>>, vector<144x128xbf16>
    %cst = arith.constant dense<0.000000e+00> : vector<32x128xf32>
    %6 = tpu.matmul %4, %5, %cst {dimension_numbers = #tpu.dot_dimension_numbers<[1], [0], [0], [1], [0, 0, 1, 1], [], []>} : vector<32x144xbf16>, vector<144x128xbf16>, vector<32x128xf32> -> vector<32x128xf32>
    %7 = arith.addf %3, %6 : vector<32x128xf32>
    %c0_6 = arith.constant 0 : index
    %c0_7 = arith.constant 0 : index
    %8 = vector.load %arg7[%c0_6, %c0_7] : memref<32x128xf32, #tpu.memory_space<vmem>>, vector<32x128xf32>
    tpu.vector_store %arg7[%c0_6, %c0_7], %7 {strides = array<i32>} : memref<32x128xf32, #tpu.memory_space<vmem>>, vector<32x128xf32>,
    %c0_i32_8 = arith.constant 0 : i32
    %9 = arith.cmpi eq, %arg1, %c0_i32_8 : i32
    %10 = arith.extui %9 : i1 to i32
    %c0_i32_9 = arith.constant 0 : i32
    %11 = arith.cmpi ne, %10, %c0_i32_9 : i32
    scf.if %11 {
      %c0_10 = arith.constant 0 : index
      %c0_11 = arith.constant 0 : index
      %12 = vector.load %arg7[%c0_10, %c0_11] : memref<32x128xf32, #tpu.memory_space<vmem>>, vector<32x128xf32>
      %c0_12 = arith.constant 0 : index
      %c0_13 = arith.constant 0 : index
      %13 = vector.load %arg4[%c0_12, %c0_13] : memref<32x1xf32, #tpu.memory_space<vmem>>, vector<32x1xf32>
      %14 = vector.broadcast %13 : vector<32x1xf32> to vector<32x128xf32>
      %15 = arith.mulf %12, %14 : vector<32x128xf32>
      %c0_14 = arith.constant 0 : index
      %c0_15 = arith.constant 0 : index
      %16 = vector.load %arg5[%c0_14, %c0_15] : memref<32x1xf32, #tpu.memory_space<vmem>>, vector<32x1xf32>
      %17 = vector.broadcast %16 : vector<32x1xf32> to vector<32x128xf32>
      %18 = arith.addf %15, %17 : vector<32x128xf32>
      %cst_16 = arith.constant 0.000000e+00 : f32
      %19 = vector.broadcast %cst_16 : f32 to vector<32x128xf32>
      %20 = arith.maximumf %18, %19 : vector<32x128xf32>
      %21 = arith.truncf %20 : vector<32x128xf32> to vector<32x128xbf16>
      %c0_17 = arith.constant 0 : index
      %c0_18 = arith.constant 0 : index
      %22 = vector.load %arg6[%c0_17, %c0_18] : memref<32x128xbf16, #tpu.memory_space<vmem>>, vector<32x128xbf16>
      tpu.vector_store %arg6[%c0_17, %c0_18], %21 {strides = array<i32>} : memref<32x128xbf16, #tpu.memory_space<vmem>>, vector<32x128xbf16>,
    } else {
    }
    return
  }
  func.func @transform_0(%arg0: i32, %arg1: i32) -> (i32, i32) {
    %c0_i32 = arith.constant 0 : i32
    %c0_i32_0 = arith.constant 0 : i32
    return %c0_i32, %arg1 : i32, i32
  }
  func.func @transform_1(%arg0: i32, %arg1: i32) -> (i32, i32) {
    %c0_i32 = arith.constant 0 : i32
    return %arg1, %arg0 : i32, i32
  }
  func.func @transform_2(%arg0: i32, %arg1: i32) -> (i32, i32) {
    %c0_i32 = arith.constant 0 : i32
    %c0_i32_0 = arith.constant 0 : i32
    %c0_i32_1 = arith.constant 0 : i32
    return %c0_i32, %c0_i32_0 : i32, i32
  }
  func.func @transform_3(%arg0: i32, %arg1: i32) -> (i32, i32) {
    %c0_i32 = arith.constant 0 : i32
    %c0_i32_0 = arith.constant 0 : i32
    %c0_i32_1 = arith.constant 0 : i32
    return %c0_i32, %c0_i32_0 : i32, i32
  }
  func.func @transform_4(%arg0: i32, %arg1: i32) -> (i32, i32) {
    %c0_i32 = arith.constant 0 : i32
    %c0_i32_0 = arith.constant 0 : i32
    return %c0_i32, %arg0 : i32, i32
  }
}

module attributes {stable_mosaic.version = 11 : i64} {
  func.func @_fused_matmul_kernel(%arg0: i32, %arg1: i32, %arg2: memref<32x32xbf16, #tpu.memory_space<vmem>>, %arg3: memref<32x128xbf16, #tpu.memory_space<vmem>>, %arg4: memref<32x1xf32, #tpu.memory_space<vmem>>, %arg5: memref<32x1xf32, #tpu.memory_space<vmem>>, %arg6: memref<32x128xbf16, #tpu.memory_space<vmem>>, %arg7: memref<32x128xf32, #tpu.memory_space<vmem>>) attributes {dimension_semantics = [#tpu.dimension_semantics<parallel>, #tpu.dimension_semantics<arbitrary>], iteration_bounds = array<i64: 1, 1>, scalar_prefetch = 0 : i64, scratch_operands = 1 : i64, tpu.core_type = #tpu.core_type<tc>, window_params = [{transform_indices = @transform_0, window_bounds = array<i64: 32, 32>}, {transform_indices = @transform_1, window_bounds = array<i64: 32, 128>}, {pipeline_mode = #tpu.pipeline_mode<synchronous>, transform_indices = @transform_2, window_bounds = array<i64: 32, 1>}, {pipeline_mode = #tpu.pipeline_mode<synchronous>, transform_indices = @transform_3, window_bounds = array<i64: 32, 1>}, {transform_indices = @transform_4, window_bounds = array<i64: 32, 128>}]} {
    %c0_i32 = arith.constant 0 : i32
    %0 = arith.cmpi eq, %arg1, %c0_i32 : i32
    %1 = arith.extui %0 : i1 to i32
    %c0_i32_0 = arith.constant 0 : i32
    %2 = arith.cmpi ne, %1, %c0_i32_0 : i32
    scf.if %2 {
      %cst_10 = arith.constant 0.000000e+00 : f32
      %12 = vector.broadcast %cst_10 : f32 to vector<32x128xf32>
      %c0_11 = arith.constant 0 : index
      %c0_12 = arith.constant 0 : index
      %13 = vector.load %arg7[%c0_11, %c0_12] : memref<32x128xf32, #tpu.memory_space<vmem>>, vector<32x128xf32>
      tpu.vector_store %arg7[%c0_11, %c0_12], %12 {strides = array<i32>} : memref<32x128xf32, #tpu.memory_space<vmem>>, vector<32x128xf32>,
    } else {
    }
    %c0 = arith.constant 0 : index
    %c0_1 = arith.constant 0 : index
    %3 = vector.load %arg7[%c0, %c0_1] : memref<32x128xf32, #tpu.memory_space<vmem>>, vector<32x128xf32>
    %c0_2 = arith.constant 0 : index
    %c0_3 = arith.constant 0 : index
    %4 = vector.load %arg2[%c0_2, %c0_3] : memref<32x32xbf16, #tpu.memory_space<vmem>>, vector<32x32xbf16>
    %c0_4 = arith.constant 0 : index
    %c0_5 = arith.constant 0 : index
    %5 = vector.load %arg3[%c0_4, %c0_5] : memref<32x128xbf16, #tpu.memory_space<vmem>>, vector<32x128xbf16>
    %cst = arith.constant dense<0.000000e+00> : vector<32x128xf32>
    %6 = tpu.matmul %4, %5, %cst {dimension_numbers = #tpu.dot_dimension_numbers<[1], [0], [0], [1], [0, 0, 1, 1], [], []>} : vector<32x32xbf16>, vector<32x128xbf16>, vector<32x128xf32> -> vector<32x128xf32>
    %7 = arith.addf %3, %6 : vector<32x128xf32>
    %c0_6 = arith.constant 0 : index
    %c0_7 = arith.constant 0 : index
    %8 = vector.load %arg7[%c0_6, %c0_7] : memref<32x128xf32, #tpu.memory_space<vmem>>, vector<32x128xf32>
    tpu.vector_store %arg7[%c0_6, %c0_7], %7 {strides = array<i32>} : memref<32x128xf32, #tpu.memory_space<vmem>>, vector<32x128xf32>,
    %c0_i32_8 = arith.constant 0 : i32
    %9 = arith.cmpi eq, %arg1, %c0_i32_8 : i32
    %10 = arith.extui %9 : i1 to i32
    %c0_i32_9 = arith.constant 0 : i32
    %11 = arith.cmpi ne, %10, %c0_i32_9 : i32
    scf.if %11 {
      %c0_10 = arith.constant 0 : index
      %c0_11 = arith.constant 0 : index
      %12 = vector.load %arg7[%c0_10, %c0_11] : memref<32x128xf32, #tpu.memory_space<vmem>>, vector<32x128xf32>
      %c0_12 = arith.constant 0 : index
      %c0_13 = arith.constant 0 : index
      %13 = vector.load %arg4[%c0_12, %c0_13] : memref<32x1xf32, #tpu.memory_space<vmem>>, vector<32x1xf32>
      %14 = vector.broadcast %13 : vector<32x1xf32> to vector<32x128xf32>
      %15 = arith.mulf %12, %14 : vector<32x128xf32>
      %c0_14 = arith.constant 0 : index
      %c0_15 = arith.constant 0 : index
      %16 = vector.load %arg5[%c0_14, %c0_15] : memref<32x1xf32, #tpu.memory_space<vmem>>, vector<32x1xf32>
      %17 = vector.broadcast %16 : vector<32x1xf32> to vector<32x128xf32>
      %18 = arith.addf %15, %17 : vector<32x128xf32>
      %cst_16 = arith.constant 0.000000e+00 : f32
      %19 = vector.broadcast %cst_16 : f32 to vector<32x128xf32>
      %20 = arith.maximumf %18, %19 : vector<32x128xf32>
      %21 = arith.truncf %20 : vector<32x128xf32> to vector<32x128xbf16>
      %c0_17 = arith.constant 0 : index
      %c0_18 = arith.constant 0 : index
      %22 = vector.load %arg6[%c0_17, %c0_18] : memref<32x128xbf16, #tpu.memory_space<vmem>>, vector<32x128xbf16>
      tpu.vector_store %arg6[%c0_17, %c0_18], %21 {strides = array<i32>} : memref<32x128xbf16, #tpu.memory_space<vmem>>, vector<32x128xbf16>,
    } else {
    }
    return
  }
  func.func @transform_0(%arg0: i32, %arg1: i32) -> (i32, i32) {
    %c0_i32 = arith.constant 0 : i32
    %c0_i32_0 = arith.constant 0 : i32
    return %c0_i32, %arg1 : i32, i32
  }
  func.func @transform_1(%arg0: i32, %arg1: i32) -> (i32, i32) {
    %c0_i32 = arith.constant 0 : i32
    return %arg1, %arg0 : i32, i32
  }
  func.func @transform_2(%arg0: i32, %arg1: i32) -> (i32, i32) {
    %c0_i32 = arith.constant 0 : i32
    %c0_i32_0 = arith.constant 0 : i32
    %c0_i32_1 = arith.constant 0 : i32
    return %c0_i32, %c0_i32_0 : i32, i32
  }
  func.func @transform_3(%arg0: i32, %arg1: i32) -> (i32, i32) {
    %c0_i32 = arith.constant 0 : i32
    %c0_i32_0 = arith.constant 0 : i32
    %c0_i32_1 = arith.constant 0 : i32
    return %c0_i32, %c0_i32_0 : i32, i32
  }
  func.func @transform_4(%arg0: i32, %arg1: i32) -> (i32, i32) {
    %c0_i32 = arith.constant 0 : i32
    %c0_i32_0 = arith.constant 0 : i32
    return %c0_i32, %arg0 : i32, i32
  }
}

module attributes {stable_mosaic.version = 11 : i64} {
  func.func @_fused_matmul_kernel(%arg0: i32, %arg1: i32, %arg2: memref<16x50xbf16, #tpu.memory_space<vmem>>, %arg3: memref<50x256xbf16, #tpu.memory_space<vmem>>, %arg4: memref<16x1xf32, #tpu.memory_space<vmem>>, %arg5: memref<16x1xf32, #tpu.memory_space<vmem>>, %arg6: memref<16x256xbf16, #tpu.memory_space<vmem>>, %arg7: memref<16x256xf32, #tpu.memory_space<vmem>>) attributes {dimension_semantics = [#tpu.dimension_semantics<parallel>, #tpu.dimension_semantics<arbitrary>], iteration_bounds = array<i64: 1, 1>, scalar_prefetch = 0 : i64, scratch_operands = 1 : i64, tpu.core_type = #tpu.core_type<tc>, window_params = [{transform_indices = @transform_0, window_bounds = array<i64: 16, 50>}, {transform_indices = @transform_1, window_bounds = array<i64: 50, 256>}, {pipeline_mode = #tpu.pipeline_mode<synchronous>, transform_indices = @transform_2, window_bounds = array<i64: 16, 1>}, {pipeline_mode = #tpu.pipeline_mode<synchronous>, transform_indices = @transform_3, window_bounds = array<i64: 16, 1>}, {transform_indices = @transform_4, window_bounds = array<i64: 16, 256>}]} {
    %c0_i32 = arith.constant 0 : i32
    %0 = arith.cmpi eq, %arg1, %c0_i32 : i32
    %1 = arith.extui %0 : i1 to i32
    %c0_i32_0 = arith.constant 0 : i32
    %2 = arith.cmpi ne, %1, %c0_i32_0 : i32
    scf.if %2 {
      %cst_10 = arith.constant 0.000000e+00 : f32
      %12 = vector.broadcast %cst_10 : f32 to vector<16x256xf32>
      %c0_11 = arith.constant 0 : index
      %c0_12 = arith.constant 0 : index
      %13 = vector.load %arg7[%c0_11, %c0_12] : memref<16x256xf32, #tpu.memory_space<vmem>>, vector<16x256xf32>
      tpu.vector_store %arg7[%c0_11, %c0_12], %12 {strides = array<i32>} : memref<16x256xf32, #tpu.memory_space<vmem>>, vector<16x256xf32>,
    } else {
    }
    %c0 = arith.constant 0 : index
    %c0_1 = arith.constant 0 : index
    %3 = vector.load %arg7[%c0, %c0_1] : memref<16x256xf32, #tpu.memory_space<vmem>>, vector<16x256xf32>
    %c0_2 = arith.constant 0 : index
    %c0_3 = arith.constant 0 : index
    %4 = vector.load %arg2[%c0_2, %c0_3] : memref<16x50xbf16, #tpu.memory_space<vmem>>, vector<16x50xbf16>
    %c0_4 = arith.constant 0 : index
    %c0_5 = arith.constant 0 : index
    %5 = vector.load %arg3[%c0_4, %c0_5] : memref<50x256xbf16, #tpu.memory_space<vmem>>, vector<50x256xbf16>
    %cst = arith.constant dense<0.000000e+00> : vector<16x256xf32>
    %6 = tpu.matmul %4, %5, %cst {dimension_numbers = #tpu.dot_dimension_numbers<[1], [0], [0], [1], [0, 0, 1, 1], [], []>} : vector<16x50xbf16>, vector<50x256xbf16>, vector<16x256xf32> -> vector<16x256xf32>
    %7 = arith.addf %3, %6 : vector<16x256xf32>
    %c0_6 = arith.constant 0 : index
    %c0_7 = arith.constant 0 : index
    %8 = vector.load %arg7[%c0_6, %c0_7] : memref<16x256xf32, #tpu.memory_space<vmem>>, vector<16x256xf32>
    tpu.vector_store %arg7[%c0_6, %c0_7], %7 {strides = array<i32>} : memref<16x256xf32, #tpu.memory_space<vmem>>, vector<16x256xf32>,
    %c0_i32_8 = arith.constant 0 : i32
    %9 = arith.cmpi eq, %arg1, %c0_i32_8 : i32
    %10 = arith.extui %9 : i1 to i32
    %c0_i32_9 = arith.constant 0 : i32
    %11 = arith.cmpi ne, %10, %c0_i32_9 : i32
    scf.if %11 {
      %c0_10 = arith.constant 0 : index
      %c0_11 = arith.constant 0 : index
      %12 = vector.load %arg7[%c0_10, %c0_11] : memref<16x256xf32, #tpu.memory_space<vmem>>, vector<16x256xf32>
      %c0_12 = arith.constant 0 : index
      %c0_13 = arith.constant 0 : index
      %13 = vector.load %arg4[%c0_12, %c0_13] : memref<16x1xf32, #tpu.memory_space<vmem>>, vector<16x1xf32>
      %14 = vector.broadcast %13 : vector<16x1xf32> to vector<16x256xf32>
      %15 = arith.mulf %12, %14 : vector<16x256xf32>
      %c0_14 = arith.constant 0 : index
      %c0_15 = arith.constant 0 : index
      %16 = vector.load %arg5[%c0_14, %c0_15] : memref<16x1xf32, #tpu.memory_space<vmem>>, vector<16x1xf32>
      %17 = vector.broadcast %16 : vector<16x1xf32> to vector<16x256xf32>
      %18 = arith.addf %15, %17 : vector<16x256xf32>
      %19 = arith.truncf %18 : vector<16x256xf32> to vector<16x256xbf16>
      %c0_16 = arith.constant 0 : index
      %c0_17 = arith.constant 0 : index
      %20 = vector.load %arg6[%c0_16, %c0_17] : memref<16x256xbf16, #tpu.memory_space<vmem>>, vector<16x256xbf16>
      tpu.vector_store %arg6[%c0_16, %c0_17], %19 {strides = array<i32>} : memref<16x256xbf16, #tpu.memory_space<vmem>>, vector<16x256xbf16>,
    } else {
    }
    return
  }
  func.func @transform_0(%arg0: i32, %arg1: i32) -> (i32, i32) {
    %c0_i32 = arith.constant 0 : i32
    %c0_i32_0 = arith.constant 0 : i32
    return %c0_i32, %arg1 : i32, i32
  }
  func.func @transform_1(%arg0: i32, %arg1: i32) -> (i32, i32) {
    %c0_i32 = arith.constant 0 : i32
    return %arg1, %arg0 : i32, i32
  }
  func.func @transform_2(%arg0: i32, %arg1: i32) -> (i32, i32) {
    %c0_i32 = arith.constant 0 : i32
    %c0_i32_0 = arith.constant 0 : i32
    %c0_i32_1 = arith.constant 0 : i32
    return %c0_i32, %c0_i32_0 : i32, i32
  }
  func.func @transform_3(%arg0: i32, %arg1: i32) -> (i32, i32) {
    %c0_i32 = arith.constant 0 : i32
    %c0_i32_0 = arith.constant 0 : i32
    %c0_i32_1 = arith.constant 0 : i32
    return %c0_i32, %c0_i32_0 : i32, i32
  }
  func.func @transform_4(%arg0: i32, %arg1: i32) -> (i32, i32) {
    %c0_i32 = arith.constant 0 : i32
    %c0_i32_0 = arith.constant 0 : i32
    return %c0_i32, %arg0 : i32, i32
  }
}

module attributes {stable_mosaic.version = 11 : i64} {
  func.func @_fused_matmul_kernel(%arg0: i32, %arg1: i32, %arg2: memref<8x512xbf16, #tpu.memory_space<vmem>>, %arg3: memref<512x128xbf16, #tpu.memory_space<vmem>>, %arg4: memref<8x1xf32, #tpu.memory_space<vmem>>, %arg5: memref<8x1xf32, #tpu.memory_space<vmem>>, %arg6: memref<8x128xbf16, #tpu.memory_space<vmem>>, %arg7: memref<8x128xf32, #tpu.memory_space<vmem>>) attributes {dimension_semantics = [#tpu.dimension_semantics<parallel>, #tpu.dimension_semantics<arbitrary>], iteration_bounds = array<i64: 1, 2>, scalar_prefetch = 0 : i64, scratch_operands = 1 : i64, tpu.core_type = #tpu.core_type<tc>, window_params = [{transform_indices = @transform_0, window_bounds = array<i64: 8, 512>}, {transform_indices = @transform_1, window_bounds = array<i64: 512, 128>}, {pipeline_mode = #tpu.pipeline_mode<synchronous>, transform_indices = @transform_2, window_bounds = array<i64: 8, 1>}, {pipeline_mode = #tpu.pipeline_mode<synchronous>, transform_indices = @transform_3, window_bounds = array<i64: 8, 1>}, {transform_indices = @transform_4, window_bounds = array<i64: 8, 128>}]} {
    %c0_i32 = arith.constant 0 : i32
    %0 = arith.cmpi eq, %arg1, %c0_i32 : i32
    %1 = arith.extui %0 : i1 to i32
    %c0_i32_0 = arith.constant 0 : i32
    %2 = arith.cmpi ne, %1, %c0_i32_0 : i32
    scf.if %2 {
      %cst_9 = arith.constant 0.000000e+00 : f32
      %12 = vector.broadcast %cst_9 : f32 to vector<8x128xf32>
      %c0_10 = arith.constant 0 : index
      %c0_11 = arith.constant 0 : index
      %13 = vector.load %arg7[%c0_10, %c0_11] : memref<8x128xf32, #tpu.memory_space<vmem>>, vector<8x128xf32>
      tpu.vector_store %arg7[%c0_10, %c0_11], %12 {strides = array<i32>} : memref<8x128xf32, #tpu.memory_space<vmem>>, vector<8x128xf32>,
    } else {
    }
    %c0 = arith.constant 0 : index
    %c0_1 = arith.constant 0 : index
    %3 = vector.load %arg7[%c0, %c0_1] : memref<8x128xf32, #tpu.memory_space<vmem>>, vector<8x128xf32>
    %c0_2 = arith.constant 0 : index
    %c0_3 = arith.constant 0 : index
    %4 = vector.load %arg2[%c0_2, %c0_3] : memref<8x512xbf16, #tpu.memory_space<vmem>>, vector<8x512xbf16>
    %c0_4 = arith.constant 0 : index
    %c0_5 = arith.constant 0 : index
    %5 = vector.load %arg3[%c0_4, %c0_5] : memref<512x128xbf16, #tpu.memory_space<vmem>>, vector<512x128xbf16>
    %cst = arith.constant dense<0.000000e+00> : vector<8x128xf32>
    %6 = tpu.matmul %4, %5, %cst {dimension_numbers = #tpu.dot_dimension_numbers<[1], [0], [0], [1], [0, 0, 1, 1], [], []>} : vector<8x512xbf16>, vector<512x128xbf16>, vector<8x128xf32> -> vector<8x128xf32>
    %7 = arith.addf %3, %6 : vector<8x128xf32>
    %c0_6 = arith.constant 0 : index
    %c0_7 = arith.constant 0 : index
    %8 = vector.load %arg7[%c0_6, %c0_7] : memref<8x128xf32, #tpu.memory_space<vmem>>, vector<8x128xf32>
    tpu.vector_store %arg7[%c0_6, %c0_7], %7 {strides = array<i32>} : memref<8x128xf32, #tpu.memory_space<vmem>>, vector<8x128xf32>,
    %c1_i32 = arith.constant 1 : i32
    %9 = arith.cmpi eq, %arg1, %c1_i32 : i32
    %10 = arith.extui %9 : i1 to i32
    %c0_i32_8 = arith.constant 0 : i32
    %11 = arith.cmpi ne, %10, %c0_i32_8 : i32
    scf.if %11 {
      %c0_9 = arith.constant 0 : index
      %c0_10 = arith.constant 0 : index
      %12 = vector.load %arg7[%c0_9, %c0_10] : memref<8x128xf32, #tpu.memory_space<vmem>>, vector<8x128xf32>
      %c0_11 = arith.constant 0 : index
      %c0_12 = arith.constant 0 : index
      %13 = vector.load %arg4[%c0_11, %c0_12] : memref<8x1xf32, #tpu.memory_space<vmem>>, vector<8x1xf32>
      %14 = vector.broadcast %13 : vector<8x1xf32> to vector<8x128xf32>
      %15 = arith.mulf %12, %14 : vector<8x128xf32>
      %c0_13 = arith.constant 0 : index
      %c0_14 = arith.constant 0 : index
      %16 = vector.load %arg5[%c0_13, %c0_14] : memref<8x1xf32, #tpu.memory_space<vmem>>, vector<8x1xf32>
      %17 = vector.broadcast %16 : vector<8x1xf32> to vector<8x128xf32>
      %18 = arith.addf %15, %17 : vector<8x128xf32>
      %cst_15 = arith.constant 0.000000e+00 : f32
      %19 = vector.broadcast %cst_15 : f32 to vector<8x128xf32>
      %20 = arith.maximumf %18, %19 : vector<8x128xf32>
      %21 = arith.truncf %20 : vector<8x128xf32> to vector<8x128xbf16>
      %c0_16 = arith.constant 0 : index
      %c0_17 = arith.constant 0 : index
      %22 = vector.load %arg6[%c0_16, %c0_17] : memref<8x128xbf16, #tpu.memory_space<vmem>>, vector<8x128xbf16>
      tpu.vector_store %arg6[%c0_16, %c0_17], %21 {strides = array<i32>} : memref<8x128xbf16, #tpu.memory_space<vmem>>, vector<8x128xbf16>,
    } else {
    }
    return
  }
  func.func @transform_0(%arg0: i32, %arg1: i32) -> (i32, i32) {
    %c0_i32 = arith.constant 0 : i32
    %c0_i32_0 = arith.constant 0 : i32
    return %c0_i32, %arg1 : i32, i32
  }
  func.func @transform_1(%arg0: i32, %arg1: i32) -> (i32, i32) {
    %c0_i32 = arith.constant 0 : i32
    return %arg1, %arg0 : i32, i32
  }
  func.func @transform_2(%arg0: i32, %arg1: i32) -> (i32, i32) {
    %c0_i32 = arith.constant 0 : i32
    %c0_i32_0 = arith.constant 0 : i32
    %c0_i32_1 = arith.constant 0 : i32
    return %c0_i32, %c0_i32_0 : i32, i32
  }
  func.func @transform_3(%arg0: i32, %arg1: i32) -> (i32, i32) {
    %c0_i32 = arith.constant 0 : i32
    %c0_i32_0 = arith.constant 0 : i32
    %c0_i32_1 = arith.constant 0 : i32
    return %c0_i32, %c0_i32_0 : i32, i32
  }
  func.func @transform_4(%arg0: i32, %arg1: i32) -> (i32, i32) {
    %c0_i32 = arith.constant 0 : i32
    %c0_i32_0 = arith.constant 0 : i32
    return %c0_i32, %arg0 : i32, i32
  }
}

module attributes {stable_mosaic.version = 11 : i64} {
  func.func @_fused_matmul_kernel(%arg0: i32, %arg1: i32, %arg2: memref<4x8xbf16, #tpu.memory_space<vmem>>, %arg3: memref<8x128xbf16, #tpu.memory_space<vmem>>, %arg4: memref<4x1xf32, #tpu.memory_space<vmem>>, %arg5: memref<4x1xf32, #tpu.memory_space<vmem>>, %arg6: memref<4x128xf32, #tpu.memory_space<vmem>>, %arg7: memref<4x128xf32, #tpu.memory_space<vmem>>) attributes {dimension_semantics = [#tpu.dimension_semantics<parallel>, #tpu.dimension_semantics<arbitrary>], iteration_bounds = array<i64: 1, 1>, scalar_prefetch = 0 : i64, scratch_operands = 1 : i64, tpu.core_type = #tpu.core_type<tc>, window_params = [{transform_indices = @transform_0, window_bounds = array<i64: 4, 8>}, {transform_indices = @transform_1, window_bounds = array<i64: 8, 128>}, {pipeline_mode = #tpu.pipeline_mode<synchronous>, transform_indices = @transform_2, window_bounds = array<i64: 4, 1>}, {pipeline_mode = #tpu.pipeline_mode<synchronous>, transform_indices = @transform_3, window_bounds = array<i64: 4, 1>}, {transform_indices = @transform_4, window_bounds = array<i64: 4, 128>}]} {
    %c0_i32 = arith.constant 0 : i32
    %0 = arith.cmpi eq, %arg1, %c0_i32 : i32
    %1 = arith.extui %0 : i1 to i32
    %c0_i32_0 = arith.constant 0 : i32
    %2 = arith.cmpi ne, %1, %c0_i32_0 : i32
    scf.if %2 {
      %cst_10 = arith.constant 0.000000e+00 : f32
      %12 = vector.broadcast %cst_10 : f32 to vector<4x128xf32>
      %c0_11 = arith.constant 0 : index
      %c0_12 = arith.constant 0 : index
      %13 = vector.load %arg7[%c0_11, %c0_12] : memref<4x128xf32, #tpu.memory_space<vmem>>, vector<4x128xf32>
      tpu.vector_store %arg7[%c0_11, %c0_12], %12 {strides = array<i32>} : memref<4x128xf32, #tpu.memory_space<vmem>>, vector<4x128xf32>,
    } else {
    }
    %c0 = arith.constant 0 : index
    %c0_1 = arith.constant 0 : index
    %3 = vector.load %arg7[%c0, %c0_1] : memref<4x128xf32, #tpu.memory_space<vmem>>, vector<4x128xf32>
    %c0_2 = arith.constant 0 : index
    %c0_3 = arith.constant 0 : index
    %4 = vector.load %arg2[%c0_2, %c0_3] : memref<4x8xbf16, #tpu.memory_space<vmem>>, vector<4x8xbf16>
    %c0_4 = arith.constant 0 : index
    %c0_5 = arith.constant 0 : index
    %5 = vector.load %arg3[%c0_4, %c0_5] : memref<8x128xbf16, #tpu.memory_space<vmem>>, vector<8x128xbf16>
    %cst = arith.constant dense<0.000000e+00> : vector<4x128xf32>
    %6 = tpu.matmul %4, %5, %cst {dimension_numbers = #tpu.dot_dimension_numbers<[1], [0], [0], [1], [0, 0, 1, 1], [], []>} : vector<4x8xbf16>, vector<8x128xbf16>, vector<4x128xf32> -> vector<4x128xf32>
    %7 = arith.addf %3, %6 : vector<4x128xf32>
    %c0_6 = arith.constant 0 : index
    %c0_7 = arith.constant 0 : index
    %8 = vector.load %arg7[%c0_6, %c0_7] : memref<4x128xf32, #tpu.memory_space<vmem>>, vector<4x128xf32>
    tpu.vector_store %arg7[%c0_6, %c0_7], %7 {strides = array<i32>} : memref<4x128xf32, #tpu.memory_space<vmem>>, vector<4x128xf32>,
    %c0_i32_8 = arith.constant 0 : i32
    %9 = arith.cmpi eq, %arg1, %c0_i32_8 : i32
    %10 = arith.extui %9 : i1 to i32
    %c0_i32_9 = arith.constant 0 : i32
    %11 = arith.cmpi ne, %10, %c0_i32_9 : i32
    scf.if %11 {
      %c0_10 = arith.constant 0 : index
      %c0_11 = arith.constant 0 : index
      %12 = vector.load %arg7[%c0_10, %c0_11] : memref<4x128xf32, #tpu.memory_space<vmem>>, vector<4x128xf32>
      %c0_12 = arith.constant 0 : index
      %c0_13 = arith.constant 0 : index
      %13 = vector.load %arg4[%c0_12, %c0_13] : memref<4x1xf32, #tpu.memory_space<vmem>>, vector<4x1xf32>
      %14 = vector.broadcast %13 : vector<4x1xf32> to vector<4x128xf32>
      %15 = arith.mulf %12, %14 : vector<4x128xf32>
      %c0_14 = arith.constant 0 : index
      %c0_15 = arith.constant 0 : index
      %16 = vector.load %arg5[%c0_14, %c0_15] : memref<4x1xf32, #tpu.memory_space<vmem>>, vector<4x1xf32>
      %17 = vector.broadcast %16 : vector<4x1xf32> to vector<4x128xf32>
      %18 = arith.addf %15, %17 : vector<4x128xf32>
      %c0_16 = arith.constant 0 : index
      %c0_17 = arith.constant 0 : index
      %19 = vector.load %arg6[%c0_16, %c0_17] : memref<4x128xf32, #tpu.memory_space<vmem>>, vector<4x128xf32>
      tpu.vector_store %arg6[%c0_16, %c0_17], %18 {strides = array<i32>} : memref<4x128xf32, #tpu.memory_space<vmem>>, vector<4x128xf32>,
    } else {
    }
    return
  }
  func.func @transform_0(%arg0: i32, %arg1: i32) -> (i32, i32) {
    %c0_i32 = arith.constant 0 : i32
    %c0_i32_0 = arith.constant 0 : i32
    return %c0_i32, %arg1 : i32, i32
  }
  func.func @transform_1(%arg0: i32, %arg1: i32) -> (i32, i32) {
    %c0_i32 = arith.constant 0 : i32
    return %arg1, %arg0 : i32, i32
  }
  func.func @transform_2(%arg0: i32, %arg1: i32) -> (i32, i32) {
    %c0_i32 = arith.constant 0 : i32
    %c0_i32_0 = arith.constant 0 : i32
    %c0_i32_1 = arith.constant 0 : i32
    return %c0_i32, %c0_i32_0 : i32, i32
  }
  func.func @transform_3(%arg0: i32, %arg1: i32) -> (i32, i32) {
    %c0_i32 = arith.constant 0 : i32
    %c0_i32_0 = arith.constant 0 : i32
    %c0_i32_1 = arith.constant 0 : i32
    return %c0_i32, %c0_i32_0 : i32, i32
  }
  func.func @transform_4(%arg0: i32, %arg1: i32) -> (i32, i32) {
    %c0_i32 = arith.constant 0 : i32
    %c0_i32_0 = arith.constant 0 : i32
    return %c0_i32, %arg0 : i32, i32
  }
}

module attributes {stable_mosaic.version = 11 : i64} {
  func.func @_fused_matmul_kernel(%arg0: i32, %arg1: i32, %arg2: memref<48x6xbf16, #tpu.memory_space<vmem>>, %arg3: memref<6x128xbf16, #tpu.memory_space<vmem>>, %arg4: memref<48x1xf32, #tpu.memory_space<vmem>>, %arg5: memref<48x1xf32, #tpu.memory_space<vmem>>, %arg6: memref<48x128xf32, #tpu.memory_space<vmem>>, %arg7: memref<48x128xf32, #tpu.memory_space<vmem>>) attributes {dimension_semantics = [#tpu.dimension_semantics<parallel>, #tpu.dimension_semantics<arbitrary>], iteration_bounds = array<i64: 1, 1>, scalar_prefetch = 0 : i64, scratch_operands = 1 : i64, tpu.core_type = #tpu.core_type<tc>, window_params = [{transform_indices = @transform_0, window_bounds = array<i64: 48, 6>}, {transform_indices = @transform_1, window_bounds = array<i64: 6, 128>}, {pipeline_mode = #tpu.pipeline_mode<synchronous>, transform_indices = @transform_2, window_bounds = array<i64: 48, 1>}, {pipeline_mode = #tpu.pipeline_mode<synchronous>, transform_indices = @transform_3, window_bounds = array<i64: 48, 1>}, {transform_indices = @transform_4, window_bounds = array<i64: 48, 128>}]} {
    %c0_i32 = arith.constant 0 : i32
    %0 = arith.cmpi eq, %arg1, %c0_i32 : i32
    %1 = arith.extui %0 : i1 to i32
    %c0_i32_0 = arith.constant 0 : i32
    %2 = arith.cmpi ne, %1, %c0_i32_0 : i32
    scf.if %2 {
      %cst_10 = arith.constant 0.000000e+00 : f32
      %12 = vector.broadcast %cst_10 : f32 to vector<48x128xf32>
      %c0_11 = arith.constant 0 : index
      %c0_12 = arith.constant 0 : index
      %13 = vector.load %arg7[%c0_11, %c0_12] : memref<48x128xf32, #tpu.memory_space<vmem>>, vector<48x128xf32>
      tpu.vector_store %arg7[%c0_11, %c0_12], %12 {strides = array<i32>} : memref<48x128xf32, #tpu.memory_space<vmem>>, vector<48x128xf32>,
    } else {
    }
    %c0 = arith.constant 0 : index
    %c0_1 = arith.constant 0 : index
    %3 = vector.load %arg7[%c0, %c0_1] : memref<48x128xf32, #tpu.memory_space<vmem>>, vector<48x128xf32>
    %c0_2 = arith.constant 0 : index
    %c0_3 = arith.constant 0 : index
    %4 = vector.load %arg2[%c0_2, %c0_3] : memref<48x6xbf16, #tpu.memory_space<vmem>>, vector<48x6xbf16>
    %c0_4 = arith.constant 0 : index
    %c0_5 = arith.constant 0 : index
    %5 = vector.load %arg3[%c0_4, %c0_5] : memref<6x128xbf16, #tpu.memory_space<vmem>>, vector<6x128xbf16>
    %cst = arith.constant dense<0.000000e+00> : vector<48x128xf32>
    %6 = tpu.matmul %4, %5, %cst {dimension_numbers = #tpu.dot_dimension_numbers<[1], [0], [0], [1], [0, 0, 1, 1], [], []>} : vector<48x6xbf16>, vector<6x128xbf16>, vector<48x128xf32> -> vector<48x128xf32>
    %7 = arith.addf %3, %6 : vector<48x128xf32>
    %c0_6 = arith.constant 0 : index
    %c0_7 = arith.constant 0 : index
    %8 = vector.load %arg7[%c0_6, %c0_7] : memref<48x128xf32, #tpu.memory_space<vmem>>, vector<48x128xf32>
    tpu.vector_store %arg7[%c0_6, %c0_7], %7 {strides = array<i32>} : memref<48x128xf32, #tpu.memory_space<vmem>>, vector<48x128xf32>,
    %c0_i32_8 = arith.constant 0 : i32
    %9 = arith.cmpi eq, %arg1, %c0_i32_8 : i32
    %10 = arith.extui %9 : i1 to i32
    %c0_i32_9 = arith.constant 0 : i32
    %11 = arith.cmpi ne, %10, %c0_i32_9 : i32
    scf.if %11 {
      %c0_10 = arith.constant 0 : index
      %c0_11 = arith.constant 0 : index
      %12 = vector.load %arg7[%c0_10, %c0_11] : memref<48x128xf32, #tpu.memory_space<vmem>>, vector<48x128xf32>
      %c0_12 = arith.constant 0 : index
      %c0_13 = arith.constant 0 : index
      %13 = vector.load %arg4[%c0_12, %c0_13] : memref<48x1xf32, #tpu.memory_space<vmem>>, vector<48x1xf32>
      %14 = vector.broadcast %13 : vector<48x1xf32> to vector<48x128xf32>
      %15 = arith.mulf %12, %14 : vector<48x128xf32>
      %c0_14 = arith.constant 0 : index
      %c0_15 = arith.constant 0 : index
      %16 = vector.load %arg5[%c0_14, %c0_15] : memref<48x1xf32, #tpu.memory_space<vmem>>, vector<48x1xf32>
      %17 = vector.broadcast %16 : vector<48x1xf32> to vector<48x128xf32>
      %18 = arith.addf %15, %17 : vector<48x128xf32>
      %c0_16 = arith.constant 0 : index
      %c0_17 = arith.constant 0 : index
      %19 = vector.load %arg6[%c0_16, %c0_17] : memref<48x128xf32, #tpu.memory_space<vmem>>, vector<48x128xf32>
      tpu.vector_store %arg6[%c0_16, %c0_17], %18 {strides = array<i32>} : memref<48x128xf32, #tpu.memory_space<vmem>>, vector<48x128xf32>,
    } else {
    }
    return
  }
  func.func @transform_0(%arg0: i32, %arg1: i32) -> (i32, i32) {
    %c0_i32 = arith.constant 0 : i32
    %c0_i32_0 = arith.constant 0 : i32
    return %c0_i32, %arg1 : i32, i32
  }
  func.func @transform_1(%arg0: i32, %arg1: i32) -> (i32, i32) {
    %c0_i32 = arith.constant 0 : i32
    return %arg1, %arg0 : i32, i32
  }
  func.func @transform_2(%arg0: i32, %arg1: i32) -> (i32, i32) {
    %c0_i32 = arith.constant 0 : i32
    %c0_i32_0 = arith.constant 0 : i32
    %c0_i32_1 = arith.constant 0 : i32
    return %c0_i32, %c0_i32_0 : i32, i32
  }
  func.func @transform_3(%arg0: i32, %arg1: i32) -> (i32, i32) {
    %c0_i32 = arith.constant 0 : i32
    %c0_i32_0 = arith.constant 0 : i32
    %c0_i32_1 = arith.constant 0 : i32
    return %c0_i32, %c0_i32_0 : i32, i32
  }
  func.func @transform_4(%arg0: i32, %arg1: i32) -> (i32, i32) {
    %c0_i32 = arith.constant 0 : i32
    %c0_i32_0 = arith.constant 0 : i32
    return %c0_i32, %arg0 : i32, i32
  }
}

module attributes {stable_mosaic.version = 11 : i64} {
  func.func @_fused_matmul_kernel(%arg0: i32, %arg1: i32, %arg2: memref<48x6xbf16, #tpu.memory_space<vmem>>, %arg3: memref<6x384xbf16, #tpu.memory_space<vmem>>, %arg4: memref<48x1xf32, #tpu.memory_space<vmem>>, %arg5: memref<48x1xf32, #tpu.memory_space<vmem>>, %arg6: memref<48x384xf32, #tpu.memory_space<vmem>>, %arg7: memref<48x384xf32, #tpu.memory_space<vmem>>) attributes {dimension_semantics = [#tpu.dimension_semantics<parallel>, #tpu.dimension_semantics<arbitrary>], iteration_bounds = array<i64: 1, 1>, scalar_prefetch = 0 : i64, scratch_operands = 1 : i64, tpu.core_type = #tpu.core_type<tc>, window_params = [{transform_indices = @transform_0, window_bounds = array<i64: 48, 6>}, {transform_indices = @transform_1, window_bounds = array<i64: 6, 384>}, {pipeline_mode = #tpu.pipeline_mode<synchronous>, transform_indices = @transform_2, window_bounds = array<i64: 48, 1>}, {pipeline_mode = #tpu.pipeline_mode<synchronous>, transform_indices = @transform_3, window_bounds = array<i64: 48, 1>}, {transform_indices = @transform_4, window_bounds = array<i64: 48, 384>}]} {
    %c0_i32 = arith.constant 0 : i32
    %0 = arith.cmpi eq, %arg1, %c0_i32 : i32
    %1 = arith.extui %0 : i1 to i32
    %c0_i32_0 = arith.constant 0 : i32
    %2 = arith.cmpi ne, %1, %c0_i32_0 : i32
    scf.if %2 {
      %cst_10 = arith.constant 0.000000e+00 : f32
      %12 = vector.broadcast %cst_10 : f32 to vector<48x384xf32>
      %c0_11 = arith.constant 0 : index
      %c0_12 = arith.constant 0 : index
      %13 = vector.load %arg7[%c0_11, %c0_12] : memref<48x384xf32, #tpu.memory_space<vmem>>, vector<48x384xf32>
      tpu.vector_store %arg7[%c0_11, %c0_12], %12 {strides = array<i32>} : memref<48x384xf32, #tpu.memory_space<vmem>>, vector<48x384xf32>,
    } else {
    }
    %c0 = arith.constant 0 : index
    %c0_1 = arith.constant 0 : index
    %3 = vector.load %arg7[%c0, %c0_1] : memref<48x384xf32, #tpu.memory_space<vmem>>, vector<48x384xf32>
    %c0_2 = arith.constant 0 : index
    %c0_3 = arith.constant 0 : index
    %4 = vector.load %arg2[%c0_2, %c0_3] : memref<48x6xbf16, #tpu.memory_space<vmem>>, vector<48x6xbf16>
    %c0_4 = arith.constant 0 : index
    %c0_5 = arith.constant 0 : index
    %5 = vector.load %arg3[%c0_4, %c0_5] : memref<6x384xbf16, #tpu.memory_space<vmem>>, vector<6x384xbf16>
    %cst = arith.constant dense<0.000000e+00> : vector<48x384xf32>
    %6 = tpu.matmul %4, %5, %cst {dimension_numbers = #tpu.dot_dimension_numbers<[1], [0], [0], [1], [0, 0, 1, 1], [], []>} : vector<48x6xbf16>, vector<6x384xbf16>, vector<48x384xf32> -> vector<48x384xf32>
    %7 = arith.addf %3, %6 : vector<48x384xf32>
    %c0_6 = arith.constant 0 : index
    %c0_7 = arith.constant 0 : index
    %8 = vector.load %arg7[%c0_6, %c0_7] : memref<48x384xf32, #tpu.memory_space<vmem>>, vector<48x384xf32>
    tpu.vector_store %arg7[%c0_6, %c0_7], %7 {strides = array<i32>} : memref<48x384xf32, #tpu.memory_space<vmem>>, vector<48x384xf32>,
    %c0_i32_8 = arith.constant 0 : i32
    %9 = arith.cmpi eq, %arg1, %c0_i32_8 : i32
    %10 = arith.extui %9 : i1 to i32
    %c0_i32_9 = arith.constant 0 : i32
    %11 = arith.cmpi ne, %10, %c0_i32_9 : i32
    scf.if %11 {
      %c0_10 = arith.constant 0 : index
      %c0_11 = arith.constant 0 : index
      %12 = vector.load %arg7[%c0_10, %c0_11] : memref<48x384xf32, #tpu.memory_space<vmem>>, vector<48x384xf32>
      %c0_12 = arith.constant 0 : index
      %c0_13 = arith.constant 0 : index
      %13 = vector.load %arg4[%c0_12, %c0_13] : memref<48x1xf32, #tpu.memory_space<vmem>>, vector<48x1xf32>
      %14 = vector.broadcast %13 : vector<48x1xf32> to vector<48x384xf32>
      %15 = arith.mulf %12, %14 : vector<48x384xf32>
      %c0_14 = arith.constant 0 : index
      %c0_15 = arith.constant 0 : index
      %16 = vector.load %arg5[%c0_14, %c0_15] : memref<48x1xf32, #tpu.memory_space<vmem>>, vector<48x1xf32>
      %17 = vector.broadcast %16 : vector<48x1xf32> to vector<48x384xf32>
      %18 = arith.addf %15, %17 : vector<48x384xf32>
      %c0_16 = arith.constant 0 : index
      %c0_17 = arith.constant 0 : index
      %19 = vector.load %arg6[%c0_16, %c0_17] : memref<48x384xf32, #tpu.memory_space<vmem>>, vector<48x384xf32>
      tpu.vector_store %arg6[%c0_16, %c0_17], %18 {strides = array<i32>} : memref<48x384xf32, #tpu.memory_space<vmem>>, vector<48x384xf32>,
    } else {
    }
    return
  }
  func.func @transform_0(%arg0: i32, %arg1: i32) -> (i32, i32) {
    %c0_i32 = arith.constant 0 : i32
    %c0_i32_0 = arith.constant 0 : i32
    return %c0_i32, %arg1 : i32, i32
  }
  func.func @transform_1(%arg0: i32, %arg1: i32) -> (i32, i32) {
    %c0_i32 = arith.constant 0 : i32
    return %arg1, %arg0 : i32, i32
  }
  func.func @transform_2(%arg0: i32, %arg1: i32) -> (i32, i32) {
    %c0_i32 = arith.constant 0 : i32
    %c0_i32_0 = arith.constant 0 : i32
    %c0_i32_1 = arith.constant 0 : i32
    return %c0_i32, %c0_i32_0 : i32, i32
  }
  func.func @transform_3(%arg0: i32, %arg1: i32) -> (i32, i32) {
    %c0_i32 = arith.constant 0 : i32
    %c0_i32_0 = arith.constant 0 : i32
    %c0_i32_1 = arith.constant 0 : i32
    return %c0_i32, %c0_i32_0 : i32, i32
  }
  func.func @transform_4(%arg0: i32, %arg1: i32) -> (i32, i32) {
    %c0_i32 = arith.constant 0 : i32
    %c0_i32_0 = arith.constant 0 : i32
    return %c0_i32, %arg0 : i32, i32
  }
}

</mosaic_0001>

<llo_original>
// kernel: pspnet_forward.12
$region0: #{pspnet_forward.12}
  #allocation0 [shape = 'u32[]', space=smem, size = 0x4, offset = 0x4, fixed_abs, tag = 'smem constant byte address 0x4 - core index']
  #allocation1 [shape = 'u32[144,128]{1,0:T(1,128)}', space=vmem, size = 0x12000, scoped, tag = 'internal scratch']
  #allocation2 [shape = 'f32[8,512]{1,0:T(8,128)}', space=vmem, size = 0x4000, scoped, tag = 'scratch operand']
  %s0 = inlined_call_operand.vmem [shape: bf16[8,147], index: 0, kind: input, shape index: {}]
  %s1 = inlined_call_operand.vmem [shape: bf16[147,1536], index: 1, kind: input, shape index: {}]
  %s2 = inlined_call_operand.vmem [shape: f32[8,1], index: 2, kind: input, shape index: {}]
  %s3 = inlined_call_operand.vmem [shape: f32[8,1], index: 3, kind: input, shape index: {}]
  %s4 = inlined_call_operand.vmem [shape: bf16[8,1536], index: 4, kind: output, shape index: {}]
  %s5 = sld [smem:[#allocation0]]
  $region80: #{pspnet_forward.12} parent=0
    _
  %s7 = ssub.s32 1, %s5
  %s8 = scalar_select 0, %s7, %s5
  $region1: #{pspnet_forward.12} parent=0
    #allocation3 [shape = 'u8[311296]{0}', space=vmem, size = 0x4c000, scoped, tag = 'input window, operand 1']
    loop: start=0, step=1, limit=5
    $region2: #{pspnet_forward.12} parent=1 // loop_pre_header
      _
    $region3: #{pspnet_forward.12} parent=1 // loop_header
      %s10 = sphi 0, %s14
      %p11 = scmp.ge.s32.totalorder %s10, 5
      %s17 = sphi 0, %s29
      %s18 = sphi 0, %s25
      %s19 = sphi 0, %s17
      %s20 = sphi 0, %s18
      %s21 = sphi 0, %s19
      %s22 = sphi 0, %s20
      %s32 = sphi 0, %s34
      %s35 = sphi 0, %s32
      %s36 = sphi 0, %s35
      %s52 = sphi 0, %s36
      %s60 = sphi 0, %s62
      %s63 = sphi 0, %s60
      %s64 = sphi 0, %s63
      %s80 = sphi 0, %s64
      %s84 = sphi 0, %s84
      %s86 = sphi 0, %s84
      %s87 = sphi 0, %s86
      %s101 = sphi 0, %s87
      %s105 = sphi 0, %s105
      %s107 = sphi 0, %s105
      %s108 = sphi 0, %s107
      %s122 = sphi 0, %s108
      %s128 = sphi 0, %s130
      %s131 = sphi 0, %s128
      %s132 = sphi 0, %s131
      %s148 = sphi 0, %s132
    $region4: #{pspnet_forward.12} parent=1 // loop_header_branch
      %13 = sbr.rel (%p11) target = $region8
    $region5: #{pspnet_forward.12} parent=1 // loop_body
      %s15 = ssub.s32 %s10, 1
      %s16 = ssub.s32 %s10, 2
      %s23 = sadd.s32 1, %s18
      %p24 = scmp.ge.s32.totalorder %s23, 1
      %s25 = scalar_select %p24, 0, %s23
      %s26 = sadd.s32 1, %s17
      %s27 = scalar_select %p24, %s26, %s17
      %p28 = scmp.ge.s32.totalorder %s27, 3
      %s29 = scalar_select %p28, 0, %s27
      %s30 = ssub.s32 %s18, %s25
      %p31 = scmp.eq.s32.totalorder %s30, 0
      %s33 = sadd.s32 %s32, 1
      %s34 = scalar_select %p31, %s32, %s33
      %p37 = pneg %p31
      %p38 = scmp.eq.s32.totalorder %s10, 2
      %p39 = por %p37, %p38
      %p40 = scmp.ne.s32.totalorder %s32, %s35
      %p41 = scmp.eq.s32.totalorder %s10, 0
      %p42 = por %p40, %p41
      %p43 = scmp.ne.s32.totalorder %s32, %s35
      %p44 = scmp.eq.s32.totalorder %s15, 2
      %p45 = por %p43, %p44
      %p46 = scmp.ne.s32.totalorder %s35, %s36
      %p47 = scmp.eq.s32.totalorder %s15, 0
      %p48 = por %p46, %p47
      %p49 = scmp.ne.s32.totalorder %s35, %s36
      %p50 = scmp.eq.s32.totalorder %s16, 2
      %p51 = por %p49, %p50
      %p53 = scmp.ne.s32.totalorder %s36, %s52
      %p54 = scmp.eq.s32.totalorder %s16, 0
      %p55 = por %p53, %p54
      %s56 = ssub.s32 %s18, %s25
      %s57 = ssub.s32 %s17, %s29
      %s58 = sor.u32 %s56, %s57
      %p59 = scmp.eq.s32.totalorder %s58, 0
      %s61 = sadd.s32 %s60, 1
      %s62 = scalar_select %p59, %s60, %s61
      %p65 = pneg %p59
      %p66 = scmp.eq.s32.totalorder %s10, 2
      %p67 = por %p65, %p66
      %p68 = scmp.ne.s32.totalorder %s60, %s63
      %p69 = scmp.eq.s32.totalorder %s10, 0
      %p70 = por %p68, %p69
      %p71 = scmp.ne.s32.totalorder %s60, %s63
      %p72 = scmp.eq.s32.totalorder %s15, 2
      %p73 = por %p71, %p72
      %p74 = scmp.ne.s32.totalorder %s63, %s64
      %p75 = scmp.eq.s32.totalorder %s15, 0
      %p76 = por %p74, %p75
      %p77 = scmp.ne.s32.totalorder %s63, %s64
      %p78 = scmp.eq.s32.totalorder %s16, 2
      %p79 = por %p77, %p78
      %p81 = scmp.ne.s32.totalorder %s64, %s80
      %p82 = scmp.eq.s32.totalorder %s16, 0
      %p83 = por %p81, %p82
      %s85 = sadd.s32 %s84, 1
      %p88 = scmp.eq.s32.totalorder %s10, 2
      %p89 = scmp.ne.s32.totalorder %s84, %s86
      %p90 = scmp.eq.s32.totalorder %s10, 0
      %p91 = por %p89, %p90
      %p92 = scmp.ne.s32.totalorder %s84, %s86
      %p93 = scmp.eq.s32.totalorder %s15, 2
      %p94 = por %p92, %p93
      %p95 = scmp.ne.s32.totalorder %s86, %s87
      %p96 = scmp.eq.s32.totalorder %s15, 0
      %p97 = por %p95, %p96
      %p98 = scmp.ne.s32.totalorder %s86, %s87
      %p99 = scmp.eq.s32.totalorder %s16, 2
      %p100 = por %p98, %p99
      %p102 = scmp.ne.s32.totalorder %s87, %s101
      %p103 = scmp.eq.s32.totalorder %s16, 0
      %p104 = por %p102, %p103
      %s106 = sadd.s32 %s105, 1
      %p109 = scmp.eq.s32.totalorder %s10, 2
      %p110 = scmp.ne.s32.totalorder %s105, %s107
      %p111 = scmp.eq.s32.totalorder %s10, 0
      %p112 = por %p110, %p111
      %p113 = scmp.ne.s32.totalorder %s105, %s107
      %p114 = scmp.eq.s32.totalorder %s15, 2
      %p115 = por %p113, %p114
      %p116 = scmp.ne.s32.totalorder %s107, %s108
      %p117 = scmp.eq.s32.totalorder %s15, 0
      %p118 = por %p116, %p117
      %p119 = scmp.ne.s32.totalorder %s107, %s108
      %p120 = scmp.eq.s32.totalorder %s16, 2
      %p121 = por %p119, %p120
      %p123 = scmp.ne.s32.totalorder %s108, %s122
      %p124 = scmp.eq.s32.totalorder %s16, 0
      %p125 = por %p123, %p124
      %s126 = ssub.s32 %s17, %s29
      %p127 = scmp.eq.s32.totalorder %s126, 0
      %s129 = sadd.s32 %s128, 1
      %s130 = scalar_select %p127, %s128, %s129
      %p133 = pneg %p127
      %p134 = scmp.eq.s32.totalorder %s10, 2
      %p135 = por %p133, %p134
      %p136 = scmp.ne.s32.totalorder %s128, %s131
      %p137 = scmp.eq.s32.totalorder %s10, 0
      %p138 = por %p136, %p137
      %p139 = scmp.ne.s32.totalorder %s128, %s131
      %p140 = scmp.eq.s32.totalorder %s15, 2
      %p141 = por %p139, %p140
      %p142 = scmp.ne.s32.totalorder %s131, %s132
      %p143 = scmp.eq.s32.totalorder %s15, 0
      %p144 = por %p142, %p143
      %p145 = scmp.ne.s32.totalorder %s131, %s132
      %p146 = scmp.eq.s32.totalorder %s16, 2
      %p147 = por %p145, %p146
      %p149 = scmp.ne.s32.totalorder %s132, %s148
      %p150 = scmp.eq.s32.totalorder %s16, 0
      %p151 = por %p149, %p150
      %p152 = scmp.le.s32.totalorder 1, %s10
      %p153 = scmp.lt.s32.totalorder %s10, 4
      %p154 = pnand %p152, %p153
      %p155 = pneg %p154
      // Predicated region
      $region9: #{pspnet_forward.12} parent=5 // pred_check
        _
      $region10: #{pspnet_forward.12} parent=5 // pred_check_branch
        %157 = sbr.rel (%p154) target = $region12
      $region11: #{pspnet_forward.12} parent=5 // pred_region
        %s158 = ssub.s32 %s10, 1
        // Predicated region
        $region13: #{pspnet_forward.12} parent=11 // pred_check
          %p159 = pneg %p48
        $region14: #{pspnet_forward.12} parent=11 // pred_check_branch
          %161 = sbr.rel (%p159) target = $region16
        $region15: #{pspnet_forward.12} parent=11 // pred_region
          %s162 = smul.u32 2, %s20
          %p163 = scmp.lt.s32.totalorder %s162, 1
          %s164 = scalar_select %p163, %s162, 1
          %s165 = smul.addr %s164, 4
          %s166 = scalar_lea.vmem %s0, %s165
          %s167 = smul.u32 2, %s20
        $region16: #{pspnet_forward.12} parent=11 // pred_fallthru
          _
        // Predicated region
        $region17: #{pspnet_forward.12} parent=11 // pred_check
          %p168 = pneg %p97
        $region18: #{pspnet_forward.12} parent=11 // pred_check_branch
          %170 = sbr.rel (%p168) target = $region20
        $region19: #{pspnet_forward.12} parent=11 // pred_region
          _
        $region20: #{pspnet_forward.12} parent=11 // pred_fallthru
          _
        // Predicated region
        $region21: #{pspnet_forward.12} parent=11 // pred_check
          %p171 = pneg %p118
        $region22: #{pspnet_forward.12} parent=11 // pred_check_branch
          %173 = sbr.rel (%p171) target = $region24
        $region23: #{pspnet_forward.12} parent=11 // pred_region
          _
        $region24: #{pspnet_forward.12} parent=11 // pred_fallthru
          _
      $region12: #{pspnet_forward.12} parent=5 // pred_fallthru
        _
      %p174 = scmp.lt.s32.totalorder %s10, 3
      // Predicated region
      $region25: #{pspnet_forward.12} parent=5 // pred_check
        %p175 = pneg %p174
      $region26: #{pspnet_forward.12} parent=5 // pred_check_branch
        %177 = sbr.rel (%p175) target = $region28
      $region27: #{pspnet_forward.12} parent=5 // pred_region
        // Predicated region
        $region29: #{pspnet_forward.12} parent=27 // pred_check
          %p178 = pneg %p70
        $region30: #{pspnet_forward.12} parent=27 // pred_check_branch
          %180 = sbr.rel (%p178) target = $region32
        $region31: #{pspnet_forward.12} parent=27 // pred_region
          %s181 = sand.u32 %s60, 1
          %s182 = sand.u32 %s60, 1
          %s183 = smul.addr %s182, 304
          %s184 = scalar_lea.vmem [#allocation3], %s183
          %s185 = smul.u32 19, %s18
          %s186 = smul.u32 4, %s17
          %s187 = smul.addr %s185, 12
          %s188 = sadd.s32 %s186, %s187
          %s189 = smul.addr %s188, 4
          %s190 = scalar_lea.vmem %s1, %s189
          // Predicated region
          $region33: #{pspnet_forward.12} parent=31 // pred_check
            _
          $region34: #{pspnet_forward.12} parent=31 // pred_check_branch
            %192 = sbr.rel (0) target = $region36
          $region35: #{pspnet_forward.12} parent=31 // pred_region
            // Predicated region
            $region37: #{pspnet_forward.12} parent=35 // pred_check
              _
            $region38: #{pspnet_forward.12} parent=35 // pred_check_branch
              %194 = sbr.rel (0) target = $region40
            $region39: #{pspnet_forward.12} parent=35 // pred_region
              loop: start=0, step=1, limit=1
              $region41: #{pspnet_forward.12} parent=39 // loop_pre_header
                _
              $region42: #{pspnet_forward.12} parent=39 // loop_header
                %s196 = sphi 0, %s200
                %p197 = scmp.ge.s32.totalorder %s196, 1
                %s201 = sphi %s190, %s190
                %s202 = sphi %s184, %s184
              $region43: #{pspnet_forward.12} parent=39 // loop_header_branch
                %199 = sbr.rel (%p197) target = $region47
              $region44: #{pspnet_forward.12} parent=39 // loop_body
                %v203 = vld [vmem:[%s201] sm:$0xff]
                %204 = vst [vmem:[%s202] sm:$0xff] %v203
                %v205 = vld [vmem:[%s201 + $0x8] sm:$0xff]
                %206 = vst [vmem:[%s202 + $0x8] sm:$0xff] %v205
                %v207 = vld [vmem:[%s201 + $0x30] sm:$0xff]
                %208 = vst [vmem:[%s202 + $0x10] sm:$0xff] %v207
                %v209 = vld [vmem:[%s201 + $0x38] sm:$0xff]
                %210 = vst [vmem:[%s202 + $0x18] sm:$0xff] %v209
                %v211 = vld [vmem:[%s201 + $0x60] sm:$0xff]
                %212 = vst [vmem:[%s202 + $0x20] sm:$0xff] %v211
                %v213 = vld [vmem:[%s201 + $0x68] sm:$0xff]
                %214 = vst [vmem:[%s202 + $0x28] sm:$0xff] %v213
                %v215 = vld [vmem:[%s201 + $0x90] sm:$0xff]
                %216 = vst [vmem:[%s202 + $0x30] sm:$0xff] %v215
                %v217 = vld [vmem:[%s201 + $0x98] sm:$0xff]
                %218 = vst [vmem:[%s202 + $0x38] sm:$0xff] %v217
                %v219 = vld [vmem:[%s201 + $0xc0] sm:$0xff]
                %220 = vst [vmem:[%s202 + $0x40] sm:$0xff] %v219
                %v221 = vld [vmem:[%s201 + $0xc8] sm:$0xff]
                %222 = vst [vmem:[%s202 + $0x48] sm:$0xff] %v221
                %v223 = vld [vmem:[%s201 + $0xf0] sm:$0xff]
                %224 = vst [vmem:[%s202 + $0x50] sm:$0xff] %v223
                %v225 = vld [vmem:[%s201 + $0xf8] sm:$0xff]
                %226 = vst [vmem:[%s202 + $0x58] sm:$0xff] %v225
                %v227 = vld [vmem:[%s201 + $0x120] sm:$0xff]
                %228 = vst [vmem:[%s202 + $0x60] sm:$0xff] %v227
                %v229 = vld [vmem:[%s201 + $0x128] sm:$0xff]
                %230 = vst [vmem:[%s202 + $0x68] sm:$0xff] %v229
                %v231 = vld [vmem:[%s201 + $0x150] sm:$0xff]
                %232 = vst [vmem:[%s202 + $0x70] sm:$0xff] %v231
                %v233 = vld [vmem:[%s201 + $0x158] sm:$0xff]
                %234 = vst [vmem:[%s202 + $0x78] sm:$0xff] %v233
                %v235 = vld [vmem:[%s201 + $0x180] sm:$0xff]
                %236 = vst [vmem:[%s202 + $0x80] sm:$0xff] %v235
                %v237 = vld [vmem:[%s201 + $0x188] sm:$0xff]
                %238 = vst [vmem:[%s202 + $0x88] sm:$0xff] %v237
                %v239 = vld [vmem:[%s201 + $0x1b0] sm:$0xff]
                %240 = vst [vmem:[%s202 + $0x90] sm:$0xff] %v239
                %v241 = vld [vmem:[%s201 + $0x1b8] sm:$0xff]
                %242 = vst [vmem:[%s202 + $0x98] sm:$0xff] %v241
                %v243 = vld [vmem:[%s201 + $0x1e0] sm:$0xff]
                %244 = vst [vmem:[%s202 + $0xa0] sm:$0xff] %v243
                %v245 = vld [vmem:[%s201 + $0x1e8] sm:$0xff]
                %246 = vst [vmem:[%s202 + $0xa8] sm:$0xff] %v245
                %v247 = vld [vmem:[%s201 + $0x210] sm:$0xff]
                %248 = vst [vmem:[%s202 + $0xb0] sm:$0xff] %v247
                %v249 = vld [vmem:[%s201 + $0x218] sm:$0xff]
                %250 = vst [vmem:[%s202 + $0xb8] sm:$0xff] %v249
                %v251 = vld [vmem:[%s201 + $0x240] sm:$0xff]
                %252 = vst [vmem:[%s202 + $0xc0] sm:$0xff] %v251
                %v253 = vld [vmem:[%s201 + $0x248] sm:$0xff]
                %254 = vst [vmem:[%s202 + $0xc8] sm:$0xff] %v253
                %v255 = vld [vmem:[%s201 + $0x270] sm:$0xff]
                %256 = vst [vmem:[%s202 + $0xd0] sm:$0xff] %v255
                %v257 = vld [vmem:[%s201 + $0x278] sm:$0xff]
                %258 = vst [vmem:[%s202 + $0xd8] sm:$0xff] %v257
                %v259 = vld [vmem:[%s201 + $0x2a0] sm:$0xff]
                %260 = vst [vmem:[%s202 + $0xe0] sm:$0xff] %v259
                %v261 = vld [vmem:[%s201 + $0x2a8] sm:$0xff]
                %262 = vst [vmem:[%s202 + $0xe8] sm:$0xff] %v261
                %v263 = vld [vmem:[%s201 + $0x2d0] sm:$0xff]
                %264 = vst [vmem:[%s202 + $0xf0] sm:$0xff] %v263
                %v265 = vld [vmem:[%s201 + $0x2d8] sm:$0xff]
                %266 = vst [vmem:[%s202 + $0xf8] sm:$0xff] %v265
                %v267 = vld [vmem:[%s201 + $0x300] sm:$0xff]
                %268 = vst [vmem:[%s202 + $0x100] sm:$0xff] %v267
                %v269 = vld [vmem:[%s201 + $0x308] sm:$0xff]
                %270 = vst [vmem:[%s202 + $0x108] sm:$0xff] %v269
                %v271 = vld [vmem:[%s201 + $0x330] sm:$0xff]
                %272 = vst [vmem:[%s202 + $0x110] sm:$0xff] %v271
                %v273 = vld [vmem:[%s201 + $0x338] sm:$0xff]
                %274 = vst [vmem:[%s202 + $0x118] sm:$0xff] %v273
                %v275 = vld [vmem:[%s201 + $0x360] sm:$0xff]
                %276 = vst [vmem:[%s202 + $0x120] sm:$0xff] %v275
                %v277 = vld [vmem:[%s201 + $0x368] sm:$0xff]
                %278 = vst [vmem:[%s202 + $0x128] sm:$0xff] %v277
              $region45: #{pspnet_forward.12} parent=39 // loop_footer
                %s200 = sadd.s32 1, %s196
              $region46: #{pspnet_forward.12} parent=39 // loop_footer_branch
                %195 = sbr.rel target = $region42
              $region47: #{pspnet_forward.12} parent=39 // loop_exit
                _
            $region40: #{pspnet_forward.12} parent=35 // pred_fallthru
              _
            // Predicated region
            $region48: #{pspnet_forward.12} parent=35 // pred_check
              _
            $region49: #{pspnet_forward.12} parent=35 // pred_check_branch
              %280 = sbr.rel target = $region51
            $region50: #{pspnet_forward.12} parent=35 // pred_region
              _
            $region51: #{pspnet_forward.12} parent=35 // pred_fallthru
              _
          $region36: #{pspnet_forward.12} parent=31 // pred_fallthru
            _
          %281 = vnop
        $region32: #{pspnet_forward.12} parent=27 // pred_fallthru
          _
      $region28: #{pspnet_forward.12} parent=5 // pred_fallthru
        _
      %p282 = scmp.le.s32.totalorder 1, %s10
      %p283 = scmp.lt.s32.totalorder %s10, 4
      %p284 = pnand %p282, %p283
      %p285 = pneg %p284
      // Predicated region
      $region52: #{pspnet_forward.12} parent=5 // pred_check
        _
      $region53: #{pspnet_forward.12} parent=5 // pred_check_branch
        %287 = sbr.rel (%p284) target = $region55
      $region54: #{pspnet_forward.12} parent=5 // pred_region
        %s288 = ssub.s32 %s10, 1
        %s289 = sand.u32 %s63, 1
        %s290 = sand.u32 %s63, 1
        %s291 = smul.addr %s290, 304
        %s292 = scalar_lea.vmem [#allocation3], %s291
        // Predicated region
        $region56: #{pspnet_forward.12} parent=54 // pred_check
          %p293 = pneg %p76
        $region57: #{pspnet_forward.12} parent=54 // pred_check_branch
          %295 = sbr.rel (%p293) target = $region59
        $region58: #{pspnet_forward.12} parent=54 // pred_region
          _
        $region59: #{pspnet_forward.12} parent=54 // pred_fallthru
          _
        %s296 = smul.u32 2, %s20
        %p297 = scmp.lt.s32.totalorder %s296, 1
        %s298 = scalar_select %p297, %s296, 1
        %s299 = smul.addr %s298, 4
        %s300 = scalar_lea.vmem %s0, %s299
        %p301 = pneg %p48
        %p302 = pneg %p45
        %s303 = sand.u32 %s63, 1
        %s304 = sand.u32 %s63, 1
        %s305 = smul.addr %s304, 304
        %s306 = scalar_lea.vmem [#allocation3], %s305
        %p307 = pneg %p76
        %p308 = pneg %p73
        %p309 = pneg %p97
        %p310 = pneg %p94
        %p311 = pneg %p118
        %p312 = pneg %p115
        %p313 = pneg %p144
        %p314 = pneg %p141
        %s315 = smul.u32 4, %s19
        %p316 = scmp.lt.s32.totalorder %s315, 11
        %s317 = scalar_select %p316, %s315, 11
        %s318 = smul.addr %s317, 4
        %s319 = scalar_lea.vmem %s4, %s318
        %s320 = smul.u32 2, %s20
        %p321 = scmp.lt.s32.totalorder %s320, 1
        %s322 = scalar_select %p321, %s320, 1
        %s323 = smul.addr %s322, 4
        %s324 = scalar_lea.vmem %s0, %s323
        %s325 = smul.u32 2, %s20
        %s326 = smul.u32 19, %s20
        %s327 = smul.u32 4, %s19
        %s328 = smul.u32 4, %s19
        %p329 = scmp.lt.s32.totalorder %s328, 11
        %s330 = scalar_select %p329, %s328, 11
        %s331 = smul.addr %s330, 4
        %s332 = scalar_lea.vmem %s4, %s331
        %s333 = smul.u32 4, %s19
        %p335 = scmp.eq.s32.totalorder %s20, 0
        // Predicated region
        $region60: #{pspnet_forward.12} parent=54 // pred_check
          %p336 = pneg %p335
        $region61: #{pspnet_forward.12} parent=54 // pred_check_branch
          %338 = sbr.rel (%p336) target = $region63
        $region62: #{pspnet_forward.12} parent=54 // pred_region
          %339 = vst [vmem:[#allocation2] sm:$0xff] 0.0
          %340 = vst [vmem:[#allocation2 + $0x8] sm:$0xff] 0.0
          %341 = vst [vmem:[#allocation2 + $0x10] sm:$0xff] 0.0
          %342 = vst [vmem:[#allocation2 + $0x18] sm:$0xff] 0.0
        $region63: #{pspnet_forward.12} parent=54 // pred_fallthru
          _
        %v343 = vld [vmem:[#allocation2] sm:$0xff]
        %v344 = vld [vmem:[#allocation2 + $0x8] sm:$0xff]
        %v345 = vld [vmem:[#allocation2 + $0x10] sm:$0xff]
        %v346 = vld [vmem:[#allocation2 + $0x18] sm:$0xff]
        %v347 = vld [vmem:[%s324] sm:$0xff]
        %v348 = vld [vmem:[%s292] sm:$0xff]
        %v349 = vld [vmem:[%s292 + $0x8] sm:$0xff]
        %v350 = vld [vmem:[%s292 + $0x10] sm:$0xff]
        %v351 = vld [vmem:[%s292 + $0x18] sm:$0xff]
        %v352 = vld [vmem:[%s292 + $0x20] sm:$0xff]
        %v353 = vld [vmem:[%s292 + $0x28] sm:$0xff]
        %v354 = vld [vmem:[%s292 + $0x30] sm:$0xff]
        %v355 = vld [vmem:[%s292 + $0x38] sm:$0xff]
        %v356 = vld [vmem:[%s292 + $0x40] sm:$0xff]
        %v357 = vld [vmem:[%s292 + $0x48] sm:$0xff]
        %v358 = vld [vmem:[%s292 + $0x50] sm:$0xff]
        %v359 = vld [vmem:[%s292 + $0x58] sm:$0xff]
        %v360 = vld [vmem:[%s292 + $0x60] sm:$0xff]
        %v361 = vld [vmem:[%s292 + $0x68] sm:$0xff]
        %v362 = vld [vmem:[%s292 + $0x70] sm:$0xff]
        %v363 = vld [vmem:[%s292 + $0x78] sm:$0xff]
        %v364 = vld [vmem:[%s292 + $0x80] sm:$0xff]
        %v365 = vld [vmem:[%s292 + $0x88] sm:$0xff]
        %v366 = vld [vmem:[%s292 + $0x90] sm:$0xff]
        %v367 = vld [vmem:[%s292 + $0x98] sm:$0xff]
        %v368 = vld [vmem:[%s292 + $0xa0] sm:$0xff]
        %v369 = vld [vmem:[%s292 + $0xa8] sm:$0xff]
        %v370 = vld [vmem:[%s292 + $0xb0] sm:$0xff]
        %v371 = vld [vmem:[%s292 + $0xb8] sm:$0xff]
        %v372 = vld [vmem:[%s292 + $0xc0] sm:$0xff]
        %v373 = vld [vmem:[%s292 + $0xc8] sm:$0xff]
        %v374 = vld [vmem:[%s292 + $0xd0] sm:$0xff]
        %v375 = vld [vmem:[%s292 + $0xd8] sm:$0xff]
        %v376 = vld [vmem:[%s292 + $0xe0] sm:$0xff]
        %v377 = vld [vmem:[%s292 + $0xe8] sm:$0xff]
        %v378 = vld [vmem:[%s292 + $0xf0] sm:$0xff]
        %v379 = vld [vmem:[%s292 + $0xf8] sm:$0xff]
        %v380 = vld [vmem:[%s292 + $0x100] sm:$0xff]
        %v381 = vld [vmem:[%s292 + $0x108] sm:$0xff]
        %v382 = vld [vmem:[%s292 + $0x110] sm:$0xff]
        %v383 = vld [vmem:[%s292 + $0x118] sm:$0xff]
        %v384 = vld [vmem:[%s292 + $0x120] sm:$0x33]
        %v385 = vld [vmem:[%s292 + $0x128] sm:$0x33]
        %v387 = vunpack.c.l.b16 %v347
        %v388 = vunpack.c.h.b16 %v347
        %v389 = vpack.c.b16 %v387, %v387
        %v390 = vpack.c.b16 %v388, %v388
        %v430 = vunpack.c.l.b16 %v348
        %v431 = vunpack.c.h.b16 %v348
        %v432 = vunpack.c.l.b16 %v349
        %v433 = vunpack.c.h.b16 %v349
        %v434 = vunpack.c.l.b16 %v350
        %v435 = vunpack.c.h.b16 %v350
        %v436 = vunpack.c.l.b16 %v351
        %v437 = vunpack.c.h.b16 %v351
        %v438 = vunpack.c.l.b16 %v352
        %v439 = vunpack.c.h.b16 %v352
        %v440 = vunpack.c.l.b16 %v353
        %v441 = vunpack.c.h.b16 %v353
        %v442 = vunpack.c.l.b16 %v354
        %v443 = vunpack.c.h.b16 %v354
        %v444 = vunpack.c.l.b16 %v355
        %v445 = vunpack.c.h.b16 %v355
        %v446 = vunpack.c.l.b16 %v356
        %v447 = vunpack.c.h.b16 %v356
        %v448 = vunpack.c.l.b16 %v357
        %v449 = vunpack.c.h.b16 %v357
        %v450 = vunpack.c.l.b16 %v358
        %v451 = vunpack.c.h.b16 %v358
        %v452 = vunpack.c.l.b16 %v359
        %v453 = vunpack.c.h.b16 %v359
        %v454 = vunpack.c.l.b16 %v360
        %v455 = vunpack.c.h.b16 %v360
        %v456 = vunpack.c.l.b16 %v361
        %v457 = vunpack.c.h.b16 %v361
        %v458 = vunpack.c.l.b16 %v362
        %v459 = vunpack.c.h.b16 %v362
        %v460 = vunpack.c.l.b16 %v363
        %v461 = vunpack.c.h.b16 %v363
        %v462 = vunpack.c.l.b16 %v364
        %v463 = vunpack.c.h.b16 %v364
        %v464 = vunpack.c.l.b16 %v365
        %v465 = vunpack.c.h.b16 %v365
        %v466 = vunpack.c.l.b16 %v366
        %v467 = vunpack.c.h.b16 %v366
        %v468 = vunpack.c.l.b16 %v367
        %v469 = vunpack.c.h.b16 %v367
        %v470 = vunpack.c.l.b16 %v368
        %v471 = vunpack.c.h.b16 %v368
        %v472 = vunpack.c.l.b16 %v369
        %v473 = vunpack.c.h.b16 %v369
        %v474 = vunpack.c.l.b16 %v370
        %v475 = vunpack.c.h.b16 %v370
        %v476 = vunpack.c.l.b16 %v371
        %v477 = vunpack.c.h.b16 %v371
        %v478 = vunpack.c.l.b16 %v372
        %v479 = vunpack.c.h.b16 %v372
        %v480 = vunpack.c.l.b16 %v373
        %v481 = vunpack.c.h.b16 %v373
        %v482 = vunpack.c.l.b16 %v374
        %v483 = vunpack.c.h.b16 %v374
        %v484 = vunpack.c.l.b16 %v375
        %v485 = vunpack.c.h.b16 %v375
        %v486 = vunpack.c.l.b16 %v376
        %v487 = vunpack.c.h.b16 %v376
        %v488 = vunpack.c.l.b16 %v377
        %v489 = vunpack.c.h.b16 %v377
        %v490 = vunpack.c.l.b16 %v378
        %v491 = vunpack.c.h.b16 %v378
        %v492 = vunpack.c.l.b16 %v379
        %v493 = vunpack.c.h.b16 %v379
        %v494 = vunpack.c.l.b16 %v380
        %v495 = vunpack.c.h.b16 %v380
        %v496 = vunpack.c.l.b16 %v381
        %v497 = vunpack.c.h.b16 %v381
        %v498 = vunpack.c.l.b16 %v382
        %v499 = vunpack.c.h.b16 %v382
        %v500 = vunpack.c.l.b16 %v383
        %v501 = vunpack.c.h.b16 %v383
        %v502 = vunpack.c.l.b16 %v384
        %v503 = vunpack.c.h.b16 %v384
        %v504 = vunpack.c.l.b16 %v385
        %v505 = vunpack.c.h.b16 %v385
        %v506 = vpack.c.b16 %v434, %v430
        %v507 = vpack.c.b16 %v435, %v431
        %v508 = vpack.c.b16 %v436, %v432
        %v509 = vpack.c.b16 %v437, %v433
        %v510 = vpack.c.b16 %v442, %v438
        %v511 = vpack.c.b16 %v443, %v439
        %v512 = vpack.c.b16 %v444, %v440
        %v513 = vpack.c.b16 %v445, %v441
        %v514 = vpack.c.b16 %v450, %v446
        %v515 = vpack.c.b16 %v451, %v447
        %v516 = vpack.c.b16 %v452, %v448
        %v517 = vpack.c.b16 %v453, %v449
        %v518 = vpack.c.b16 %v458, %v454
        %v519 = vpack.c.b16 %v459, %v455
        %v520 = vpack.c.b16 %v460, %v456
        %v521 = vpack.c.b16 %v461, %v457
        %v522 = vpack.c.b16 %v466, %v462
        %v523 = vpack.c.b16 %v467, %v463
        %v524 = vpack.c.b16 %v468, %v464
        %v525 = vpack.c.b16 %v469, %v465
        %v526 = vpack.c.b16 %v474, %v470
        %v527 = vpack.c.b16 %v475, %v471
        %v528 = vpack.c.b16 %v476, %v472
        %v529 = vpack.c.b16 %v477, %v473
        %v530 = vpack.c.b16 %v482, %v478
        %v531 = vpack.c.b16 %v483, %v479
        %v532 = vpack.c.b16 %v484, %v480
        %v533 = vpack.c.b16 %v485, %v481
        %v534 = vpack.c.b16 %v490, %v486
        %v535 = vpack.c.b16 %v491, %v487
        %v536 = vpack.c.b16 %v492, %v488
        %v537 = vpack.c.b16 %v493, %v489
        %v538 = vpack.c.b16 %v498, %v494
        %v539 = vpack.c.b16 %v499, %v495
        %v540 = vpack.c.b16 %v500, %v496
        %v541 = vpack.c.b16 %v501, %v497
        %v542 = vpack.c.b16 %v502, %v502
        %v543 = vpack.c.b16 %v503, %v503
        %v544 = vpack.c.b16 %v504, %v504
        %v545 = vpack.c.b16 %v505, %v505
        %vm582 = vcmask 154624
        %v584 = vsel %vm582, %v390, 0
        %vm586 = vcmask 1040384
        %vm587 = vcmask 1041408
        %v588 = vsel %vm586, 4294967295, 65535
        %v589 = vsel %vm587, %v588, 0
        %v591 = vand.u32 %v542, %v589
        %v594 = vand.u32 %v543, %v589
        %v597 = vand.u32 %v544, %v589
        %v600 = vand.u32 %v545, %v589
        %602 = vmatprep.subr.bf16.mxu0 %v535
        %603 = vmatpush1.bf16.msra.mxu0 %v534
        %604 = vmatprep.subr.bf16.mxu0 %v531
        %605 = vmatpush1.bf16.msra.mxu0 %v530
        %606 = vmatprep.subr.bf16.mxu0 %v527
        %607 = vmatpush1.bf16.msra.mxu0 %v526
        %608 = vmatprep.subr.bf16.mxu0 %v523
        %609 = vmatpush1.bf16.msra.mxu0 %v522
        %610 = vmatprep.subr.bf16.mxu0 %v519
        %611 = vmatpush1.bf16.msra.mxu0 %v518
        %612 = vmatprep.subr.bf16.mxu0 %v515
        %613 = vmatpush1.bf16.msra.mxu0 %v514
        %614 = vmatprep.subr.bf16.mxu0 %v511
        %615 = vmatpush1.bf16.msra.mxu0 %v510
        %616 = vmatprep.subr.bf16.mxu0 %v507
        %617 = vmatpush1.bf16.msra.mxu0 %v506
        %618 = vmatprep.subr.bf16.mxu0 0
        %619 = vmatpush2.bf16.msra.mxu0 0
        %620 = vmatprep.subr.bf16.mxu0 0
        %621 = vmatpush2.bf16.msra.mxu0 0
        %622 = vmatprep.subr.bf16.mxu0 0
        %623 = vmatpush2.bf16.msra.mxu0 0
        %624 = vmatprep.subr.bf16.mxu0 0
        %625 = vmatpush2.bf16.msra.mxu0 0
        %626 = vmatprep.subr.bf16.mxu0 0
        %627 = vmatpush2.bf16.msra.mxu0 0
        %628 = vmatprep.subr.bf16.mxu0 0
        %629 = vmatpush2.bf16.msra.mxu0 0
        %630 = vmatprep.subr.bf16.mxu0 %v594
        %631 = vmatpush2.bf16.msra.mxu0 %v591
        %632 = vmatprep.subr.bf16.mxu0 %v539
        %633 = vmatpush2.bf16.msra.mxu0 %v538
        %634 = vmatprep.mubr.bf16.mxu0 %v584
        %635 = vmatmul.mubr.bf16.gmra.mxu0 %v389
        %v636 = vpop.f32.mrf.mxu0
        %v637 = vadd.f32 0.0, %v636
        %v638 = vpop.f32.mrf.mxu0
        %v639 = vadd.f32 0.0, %v638
        %v640 = vpop.f32.mrf.mxu0
        %v641 = vpop.f32.mrf.mxu0
        %642 = vdwg.mxu0
        %643 = vmatprep.subr.bf16.mxu0 %v537
        %644 = vmatpush1.bf16.msra.mxu0 %v536
        %645 = vmatprep.subr.bf16.mxu0 %v533
        %646 = vmatpush1.bf16.msra.mxu0 %v532
        %647 = vmatprep.subr.bf16.mxu0 %v529
        %648 = vmatpush1.bf16.msra.mxu0 %v528
        %649 = vmatprep.subr.bf16.mxu0 %v525
        %650 = vmatpush1.bf16.msra.mxu0 %v524
        %651 = vmatprep.subr.bf16.mxu0 %v521
        %652 = vmatpush1.bf16.msra.mxu0 %v520
        %653 = vmatprep.subr.bf16.mxu0 %v517
        %654 = vmatpush1.bf16.msra.mxu0 %v516
        %655 = vmatprep.subr.bf16.mxu0 %v513
        %656 = vmatpush1.bf16.msra.mxu0 %v512
        %657 = vmatprep.subr.bf16.mxu0 %v509
        %658 = vmatpush1.bf16.msra.mxu0 %v508
        %659 = vmatprep.subr.bf16.mxu0 0
        %660 = vmatpush2.bf16.msra.mxu0 0
        %661 = vmatprep.subr.bf16.mxu0 0
        %662 = vmatpush2.bf16.msra.mxu0 0
        %663 = vmatprep.subr.bf16.mxu0 0
        %664 = vmatpush2.bf16.msra.mxu0 0
        %665 = vmatprep.subr.bf16.mxu0 0
        %666 = vmatpush2.bf16.msra.mxu0 0
        %667 = vmatprep.subr.bf16.mxu0 0
        %668 = vmatpush2.bf16.msra.mxu0 0
        %669 = vmatprep.subr.bf16.mxu0 0
        %670 = vmatpush2.bf16.msra.mxu0 0
        %671 = vmatprep.subr.bf16.mxu0 %v600
        %672 = vmatpush2.bf16.msra.mxu0 %v597
        %673 = vmatprep.subr.bf16.mxu0 %v541
        %674 = vmatpush2.bf16.msra.mxu0 %v540
        %675 = vmatprep.mubr.bf16.mxu0 %v584
        %676 = vmatmul.mubr.bf16.gmra.mxu0 %v389
        %v677 = vpop.f32.mrf.mxu0
        %v678 = vadd.f32 0.0, %v677
        %v679 = vpop.f32.mrf.mxu0
        %v680 = vadd.f32 0.0, %v679
        %v681 = vpop.f32.mrf.mxu0
        %v682 = vpop.f32.mrf.mxu0
        %683 = vdwg.mxu0
        %v684 = vadd.f32 %v343, %v637
        %v685 = vadd.f32 %v344, %v639
        %v686 = vadd.f32 %v345, %v678
        %v687 = vadd.f32 %v346, %v680
        %688 = vst [vmem:[#allocation2] sm:$0xff] %v684
        %689 = vst [vmem:[#allocation2 + $0x8] sm:$0xff] %v685
        %690 = vst [vmem:[#allocation2 + $0x10] sm:$0xff] %v686
        %691 = vst [vmem:[#allocation2 + $0x18] sm:$0xff] %v687
        // Predicated region
        $region64: #{pspnet_forward.12} parent=54 // pred_check
          %p692 = pneg %p335
        $region65: #{pspnet_forward.12} parent=54 // pred_check_branch
          %694 = sbr.rel (%p692) target = $region67
        $region66: #{pspnet_forward.12} parent=54 // pred_region
          %v695 = vld [vmem:[#allocation2] sm:$0xff]
          %v696 = vld [vmem:[#allocation2 + $0x8] sm:$0xff]
          %v697 = vld [vmem:[#allocation2 + $0x10] sm:$0xff]
          %v698 = vld [vmem:[#allocation2 + $0x18] sm:$0xff]
          %v699 = vld [vmem:[%s2] sm:$0xff]
          %701 = vset.pattern.permute.xlu0 0
          %702 = vperm.xlu0 %701, %v699
          %v703 = vpop.permute.xlu0 %702
          %v705 = vmul.f32 %v695, %v703
          %v706 = vmul.f32 %v696, %v703
          %v707 = vmul.f32 %v697, %v703
          %v708 = vmul.f32 %v698, %v703
          %v709 = vld [vmem:[%s3] sm:$0xff]
          %711 = vset.pattern.permute.xlu0 0
          %712 = vperm.xlu0 %711, %v709
          %v713 = vpop.permute.xlu0 %712
          %v715 = vadd.f32 %v705, %v713
          %v716 = vadd.f32 %v706, %v713
          %v717 = vadd.f32 %v707, %v713
          %v718 = vadd.f32 %v708, %v713
          %v719 = vmax.f32 %v715, 0.0
          %v720 = vmax.f32 %v716, 0.0
          %v721 = vmax.f32 %v717, 0.0
          %v722 = vmax.f32 %v718, 0.0
          %v723 = vpack.c.bf16 %v719, %v719
          %v724 = vpack.c.bf16 %v720, %v720
          %v725 = vpack.c.bf16 %v721, %v721
          %v726 = vpack.c.bf16 %v722, %v722
          %v731 = vunpack.c.l.b16 %v723
          %v732 = vunpack.c.l.b16 %v724
          %v733 = vunpack.c.l.b16 %v725
          %v734 = vunpack.c.l.b16 %v726
          %v735 = vpack.c.b16 %v732, %v731
          %v736 = vpack.c.b16 %v734, %v733
          %739 = vst [vmem:[%s332] sm:$0xff] %v735
          %740 = vst [vmem:[%s332 + $0x8] sm:$0xff] %v736
        $region67: #{pspnet_forward.12} parent=54 // pred_fallthru
          _
        %s741 = smul.u32 4, %s19
        %p742 = scmp.lt.s32.totalorder %s741, 11
        %s743 = scalar_select %p742, %s741, 11
        %s744 = smul.addr %s743, 4
        %s745 = scalar_lea.vmem %s4, %s744
        // Predicated region
        $region68: #{pspnet_forward.12} parent=54 // pred_check
          %p746 = pneg %p141
        $region69: #{pspnet_forward.12} parent=54 // pred_check_branch
          %748 = sbr.rel (%p746) target = $region71
        $region70: #{pspnet_forward.12} parent=54 // pred_region
          %s749 = smul.u32 4, %s19
        $region71: #{pspnet_forward.12} parent=54 // pred_fallthru
          _
      $region55: #{pspnet_forward.12} parent=5 // pred_fallthru
        _
      %p750 = scmp.le.s32.totalorder 2, %s10
      // Predicated region
      $region72: #{pspnet_forward.12} parent=5 // pred_check
        %p751 = pneg %p750
      $region73: #{pspnet_forward.12} parent=5 // pred_check_branch
        %753 = sbr.rel (%p751) target = $region75
      $region74: #{pspnet_forward.12} parent=5 // pred_region
        %s754 = ssub.s32 %s10, 2
        // Predicated region
        $region76: #{pspnet_forward.12} parent=74 // pred_check
          %p755 = pneg %p147
        $region77: #{pspnet_forward.12} parent=74 // pred_check_branch
          %757 = sbr.rel (%p755) target = $region79
        $region78: #{pspnet_forward.12} parent=74 // pred_region
          %s758 = smul.u32 4, %s21
          %p759 = scmp.lt.s32.totalorder %s758, 11
          %s760 = scalar_select %p759, %s758, 11
          %s761 = smul.addr %s760, 4
          %s762 = scalar_lea.vmem %s4, %s761
        $region79: #{pspnet_forward.12} parent=74 // pred_fallthru
          _
      $region75: #{pspnet_forward.12} parent=5 // pred_fallthru
        _
    $region6: #{pspnet_forward.12} parent=1 // loop_footer
      %s14 = sadd.s32 1, %s10
    $region7: #{pspnet_forward.12} parent=1 // loop_footer_branch
      %9 = sbr.rel target = $region3
    $region8: #{pspnet_forward.12} parent=1 // loop_exit
      _

// kernel: pspnet_forward.13
$region0: #{pspnet_forward.13}
  #allocation0 [shape = 'u32[]', space=smem, size = 0x4, offset = 0x4, fixed_abs, tag = 'smem constant byte address 0x4 - core index']
  #allocation1 [shape = 'u32[144,128]{1,0:T(1,128)}', space=vmem, size = 0x12000, scoped, tag = 'internal scratch']
  #allocation2 [shape = 'f32[8,384]{1,0:T(8,128)}', space=vmem, size = 0x3000, scoped, tag = 'scratch operand']
  %s0 = inlined_call_operand.vmem [shape: bf16[8,72], index: 0, kind: input, shape index: {}]
  %s1 = inlined_call_operand.vmem [shape: bf16[72,384], index: 1, kind: input, shape index: {}]
  %s2 = inlined_call_operand.vmem [shape: f32[8,1], index: 2, kind: input, shape index: {}]
  %s3 = inlined_call_operand.vmem [shape: f32[8,1], index: 3, kind: input, shape index: {}]
  %s4 = inlined_call_operand.vmem [shape: bf16[8,384], index: 4, kind: output, shape index: {}]
  %s5 = sld [smem:[#allocation0]]
  $region34: #{pspnet_forward.13} parent=0
    _
  %s7 = ssub.s32 1, %s5
  %s8 = scalar_select 0, %s7, %s5
  // Predicated region
  $region2: #{pspnet_forward.13} parent=0 // pred_check
    _
  $region3: #{pspnet_forward.13} parent=0 // pred_check_branch
    %10 = sbr.rel (0) target = $region5
  $region4: #{pspnet_forward.13} parent=0 // pred_region
    _
  $region5: #{pspnet_forward.13} parent=0 // pred_fallthru
    _
  // Predicated region
  $region6: #{pspnet_forward.13} parent=0 // pred_check
    _
  $region7: #{pspnet_forward.13} parent=0 // pred_check_branch
    %12 = sbr.rel (0) target = $region9
  $region8: #{pspnet_forward.13} parent=0 // pred_region
    _
  $region9: #{pspnet_forward.13} parent=0 // pred_fallthru
    _
  // Predicated region
  $region10: #{pspnet_forward.13} parent=0 // pred_check
    _
  $region11: #{pspnet_forward.13} parent=0 // pred_check_branch
    %14 = sbr.rel (0) target = $region13
  $region12: #{pspnet_forward.13} parent=0 // pred_region
    _
  $region13: #{pspnet_forward.13} parent=0 // pred_fallthru
    _
  // Predicated region
  $region14: #{pspnet_forward.13} parent=0 // pred_check
    _
  $region15: #{pspnet_forward.13} parent=0 // pred_check_branch
    %16 = sbr.rel (0) target = $region17
  $region16: #{pspnet_forward.13} parent=0 // pred_region
    _
  $region17: #{pspnet_forward.13} parent=0 // pred_fallthru
    _
  %p18 = scmp.eq.s32.totalorder 0, 0
  // Predicated region
  $region18: #{pspnet_forward.13} parent=0 // pred_check
    %p19 = pneg %p18
  $region19: #{pspnet_forward.13} parent=0 // pred_check_branch
    %21 = sbr.rel (%p19) target = $region21
  $region20: #{pspnet_forward.13} parent=0 // pred_region
    %22 = vst [vmem:[#allocation2] sm:$0xff] 0.0
    %23 = vst [vmem:[#allocation2 + $0x8] sm:$0xff] 0.0
    %24 = vst [vmem:[#allocation2 + $0x10] sm:$0xff] 0.0
  $region21: #{pspnet_forward.13} parent=0 // pred_fallthru
    _
  %v25 = vld [vmem:[#allocation2] sm:$0xff]
  %v26 = vld [vmem:[#allocation2 + $0x8] sm:$0xff]
  %v27 = vld [vmem:[#allocation2 + $0x10] sm:$0xff]
  %v28 = vld [vmem:[%s0] sm:$0xf]
  %v29 = vld [vmem:[%s1] sm:$0xff]
  %v30 = vld [vmem:[%s1 + $0x8] sm:$0xf]
  %v31 = vld [vmem:[%s1 + $0xc] sm:$0xff]
  %v32 = vld [vmem:[%s1 + $0x14] sm:$0xf]
  %v33 = vld [vmem:[%s1 + $0x18] sm:$0xff]
  %v34 = vld [vmem:[%s1 + $0x20] sm:$0xf]
  %v35 = vld [vmem:[%s1 + $0x24] sm:$0xff]
  %v36 = vld [vmem:[%s1 + $0x2c] sm:$0xf]
  %v37 = vld [vmem:[%s1 + $0x30] sm:$0xff]
  %v38 = vld [vmem:[%s1 + $0x38] sm:$0xf]
  %v39 = vld [vmem:[%s1 + $0x3c] sm:$0xff]
  %v40 = vld [vmem:[%s1 + $0x44] sm:$0xf]
  %v41 = vld [vmem:[%s1 + $0x48] sm:$0xff]
  %v42 = vld [vmem:[%s1 + $0x50] sm:$0xf]
  %v43 = vld [vmem:[%s1 + $0x54] sm:$0xff]
  %v44 = vld [vmem:[%s1 + $0x5c] sm:$0xf]
  %v45 = vld [vmem:[%s1 + $0x60] sm:$0xff]
  %v46 = vld [vmem:[%s1 + $0x68] sm:$0xf]
  %v65 = vunpack.c.l.b16 %v29
  %v66 = vunpack.c.h.b16 %v29
  %v67 = vunpack.c.l.b16 %v30
  %v68 = vunpack.c.l.b16 %v31
  %v69 = vunpack.c.h.b16 %v31
  %v70 = vunpack.c.l.b16 %v32
  %v71 = vunpack.c.l.b16 %v33
  %v72 = vunpack.c.h.b16 %v33
  %v73 = vunpack.c.l.b16 %v34
  %v74 = vunpack.c.l.b16 %v35
  %v75 = vunpack.c.h.b16 %v35
  %v76 = vunpack.c.l.b16 %v36
  %v77 = vunpack.c.l.b16 %v37
  %v78 = vunpack.c.h.b16 %v37
  %v79 = vunpack.c.l.b16 %v38
  %v80 = vunpack.c.l.b16 %v39
  %v81 = vunpack.c.h.b16 %v39
  %v82 = vunpack.c.l.b16 %v40
  %v83 = vunpack.c.l.b16 %v41
  %v84 = vunpack.c.h.b16 %v41
  %v85 = vunpack.c.l.b16 %v42
  %v86 = vunpack.c.l.b16 %v43
  %v87 = vunpack.c.h.b16 %v43
  %v88 = vunpack.c.l.b16 %v44
  %v89 = vunpack.c.l.b16 %v45
  %v90 = vunpack.c.h.b16 %v45
  %v91 = vunpack.c.l.b16 %v46
  %v92 = vpack.c.b16 %v68, %v65
  %v93 = vpack.c.b16 %v69, %v66
  %v94 = vpack.c.b16 %v70, %v67
  %v95 = vpack.c.b16 %v74, %v71
  %v96 = vpack.c.b16 %v75, %v72
  %v97 = vpack.c.b16 %v76, %v73
  %v98 = vpack.c.b16 %v80, %v77
  %v99 = vpack.c.b16 %v81, %v78
  %v100 = vpack.c.b16 %v82, %v79
  %v101 = vpack.c.b16 %v86, %v83
  %v102 = vpack.c.b16 %v87, %v84
  %v103 = vpack.c.b16 %v88, %v85
  %v104 = vpack.c.b16 %v89, %v89
  %v105 = vpack.c.b16 %v90, %v90
  %v106 = vpack.c.b16 %v91, %v91
  %vm119 = vcmask 588800
  %v121 = vsel %vm119, %v28, 0
  %vm123 = vcmask 1043456
  %v125 = vsel %vm123, %v104, 0
  %v128 = vsel %vm123, %v105, 0
  %v131 = vsel %vm123, %v106, 0
  %133 = vmatprep.subr.bf16.mxu0 0
  %134 = vmatpush1.bf16.msra.mxu0 0
  %135 = vmatprep.subr.bf16.mxu0 0
  %136 = vmatpush1.bf16.msra.mxu0 0
  %137 = vmatprep.subr.bf16.mxu0 0
  %138 = vmatpush1.bf16.msra.mxu0 0
  %139 = vmatprep.subr.bf16.mxu0 %v128
  %140 = vmatpush1.bf16.msra.mxu0 %v125
  %141 = vmatprep.subr.bf16.mxu0 %v102
  %142 = vmatpush1.bf16.msra.mxu0 %v101
  %143 = vmatprep.subr.bf16.mxu0 %v99
  %144 = vmatpush1.bf16.msra.mxu0 %v98
  %145 = vmatprep.subr.bf16.mxu0 %v96
  %146 = vmatpush1.bf16.msra.mxu0 %v95
  %147 = vmatprep.subr.bf16.mxu0 %v93
  %148 = vmatpush1.bf16.msra.mxu0 %v92
  %149 = vmatprep.subr.bf16.mxu0 0
  %150 = vmatpush2.bf16.msra.mxu0 0
  %151 = vmatprep.subr.bf16.mxu0 0
  %152 = vmatpush2.bf16.msra.mxu0 0
  %153 = vmatprep.subr.bf16.mxu0 0
  %154 = vmatpush2.bf16.msra.mxu0 0
  %155 = vmatprep.subr.bf16.mxu0 0
  %156 = vmatpush2.bf16.msra.mxu0 0
  %157 = vmatprep.subr.bf16.mxu0 0
  %158 = vmatpush2.bf16.msra.mxu0 0
  %159 = vmatprep.subr.bf16.mxu0 0
  %160 = vmatpush2.bf16.msra.mxu0 0
  %161 = vmatprep.subr.bf16.mxu0 0
  %162 = vmatpush2.bf16.msra.mxu0 0
  %163 = vmatprep.subr.bf16.mxu0 0
  %164 = vmatpush2.bf16.msra.mxu0 0
  %165 = vmatprep.mubr.bf16.mxu0 0
  %166 = vmatmul.mubr.bf16.gmra.mxu0 %v121
  %v167 = vpop.f32.mrf.mxu0
  %v168 = vadd.f32 0.0, %v167
  %v169 = vpop.f32.mrf.mxu0
  %v170 = vadd.f32 0.0, %v169
  %v171 = vpop.f32.mrf.mxu0
  %v172 = vpop.f32.mrf.mxu0
  %173 = vdwg.mxu0
  %174 = vmatprep.subr.bf16.mxu0 0
  %175 = vmatpush1.bf16.msra.mxu0 0
  %176 = vmatprep.subr.bf16.mxu0 0
  %177 = vmatpush1.bf16.msra.mxu0 0
  %178 = vmatprep.subr.bf16.mxu0 0
  %179 = vmatpush1.bf16.msra.mxu0 0
  %180 = vmatprep.subr.bf16.mxu0 0
  %181 = vmatpush1.bf16.msra.mxu0 %v131
  %182 = vmatprep.subr.bf16.mxu0 0
  %183 = vmatpush1.bf16.msra.mxu0 %v103
  %184 = vmatprep.subr.bf16.mxu0 0
  %185 = vmatpush1.bf16.msra.mxu0 %v100
  %186 = vmatprep.subr.bf16.mxu0 0
  %187 = vmatpush1.bf16.msra.mxu0 %v97
  %188 = vmatprep.subr.bf16.mxu0 0
  %189 = vmatpush1.bf16.msra.mxu0 %v94
  %190 = vmatprep.subr.bf16.mxu0 0
  %191 = vmatpush2.bf16.msra.mxu0 0
  %192 = vmatprep.subr.bf16.mxu0 0
  %193 = vmatpush2.bf16.msra.mxu0 0
  %194 = vmatprep.subr.bf16.mxu0 0
  %195 = vmatpush2.bf16.msra.mxu0 0
  %196 = vmatprep.subr.bf16.mxu0 0
  %197 = vmatpush2.bf16.msra.mxu0 0
  %198 = vmatprep.subr.bf16.mxu0 0
  %199 = vmatpush2.bf16.msra.mxu0 0
  %200 = vmatprep.subr.bf16.mxu0 0
  %201 = vmatpush2.bf16.msra.mxu0 0
  %202 = vmatprep.subr.bf16.mxu0 0
  %203 = vmatpush2.bf16.msra.mxu0 0
  %204 = vmatprep.subr.bf16.mxu0 0
  %205 = vmatpush2.bf16.msra.mxu0 0
  %206 = vmatprep.mubr.bf16.mxu0 0
  %207 = vmatmul.mubr.bf16.gmra.mxu0 %v121
  %v208 = vpop.f32.mrf.mxu0
  %v209 = vadd.f32 0.0, %v208
  %v210 = vpop.f32.mrf.mxu0
  %v211 = vpop.f32.mrf.mxu0
  %v212 = vpop.f32.mrf.mxu0
  %213 = vdwg.mxu0
  %v214 = vadd.f32 %v25, %v168
  %v215 = vadd.f32 %v26, %v170
  %v216 = vadd.f32 %v27, %v209
  %217 = vst [vmem:[#allocation2] sm:$0xff] %v214
  %218 = vst [vmem:[#allocation2 + $0x8] sm:$0xff] %v215
  %219 = vst [vmem:[#allocation2 + $0x10] sm:$0xff] %v216
  // Predicated region
  $region22: #{pspnet_forward.13} parent=0 // pred_check
    %p220 = pneg %p18
  $region23: #{pspnet_forward.13} parent=0 // pred_check_branch
    %222 = sbr.rel (%p220) target = $region25
  $region24: #{pspnet_forward.13} parent=0 // pred_region
    %v223 = vld [vmem:[#allocation2] sm:$0xff]
    %v224 = vld [vmem:[#allocation2 + $0x8] sm:$0xff]
    %v225 = vld [vmem:[#allocation2 + $0x10] sm:$0xff]
    %v226 = vld [vmem:[%s2] sm:$0xff]
    %228 = vset.pattern.permute.xlu0 0
    %229 = vperm.xlu0 %228, %v226
    %v230 = vpop.permute.xlu0 %229
    %v232 = vmul.f32 %v223, %v230
    %v233 = vmul.f32 %v224, %v230
    %v234 = vmul.f32 %v225, %v230
    %v235 = vld [vmem:[%s3] sm:$0xff]
    %237 = vset.pattern.permute.xlu0 0
    %238 = vperm.xlu0 %237, %v235
    %v239 = vpop.permute.xlu0 %238
    %v241 = vadd.f32 %v232, %v239
    %v242 = vadd.f32 %v233, %v239
    %v243 = vadd.f32 %v234, %v239
    %v244 = vmax.f32 %v241, 0.0
    %v245 = vmax.f32 %v242, 0.0
    %v246 = vmax.f32 %v243, 0.0
    %v247 = vpack.c.bf16 %v244, %v244
    %v248 = vpack.c.bf16 %v245, %v245
    %v249 = vpack.c.bf16 %v246, %v246
    %v253 = vunpack.c.l.b16 %v247
    %v254 = vunpack.c.l.b16 %v248
    %v255 = vunpack.c.l.b16 %v249
    %v256 = vpack.c.b16 %v254, %v253
    %v257 = vpack.c.b16 %v255, %v255
    %260 = vst [vmem:[%s4] sm:$0xff] %v256
    %261 = vst [vmem:[%s4 + $0x8] sm:$0xf] %v257
  $region25: #{pspnet_forward.13} parent=0 // pred_fallthru
    _
  // Predicated region
  $region26: #{pspnet_forward.13} parent=0 // pred_check
    _
  $region27: #{pspnet_forward.13} parent=0 // pred_check_branch
    %263 = sbr.rel (0) target = $region29
  $region28: #{pspnet_forward.13} parent=0 // pred_region
    _
  $region29: #{pspnet_forward.13} parent=0 // pred_fallthru
    _
  // Predicated region
  $region30: #{pspnet_forward.13} parent=0 // pred_check
    _
  $region31: #{pspnet_forward.13} parent=0 // pred_check_branch
    %265 = sbr.rel (0) target = $region33
  $region32: #{pspnet_forward.13} parent=0 // pred_region
    _
  $region33: #{pspnet_forward.13} parent=0 // pred_fallthru
    _

// kernel: pspnet_forward.14
$region0: #{pspnet_forward.14}
  #allocation0 [shape = 'u32[]', space=smem, size = 0x4, offset = 0x4, fixed_abs, tag = 'smem constant byte address 0x4 - core index']
  #allocation1 [shape = 'u32[144,128]{1,0:T(1,128)}', space=vmem, size = 0x12000, scoped, tag = 'internal scratch']
  #allocation2 [shape = 'f32[16,128]{1,0:T(8,128)}', space=vmem, size = 0x2000, scoped, tag = 'scratch operand']
  %s0 = inlined_call_operand.vmem [shape: bf16[16,72], index: 0, kind: input, shape index: {}]
  %s1 = inlined_call_operand.vmem [shape: bf16[72,128], index: 1, kind: input, shape index: {}]
  %s2 = inlined_call_operand.vmem [shape: f32[16,1], index: 2, kind: input, shape index: {}]
  %s3 = inlined_call_operand.vmem [shape: f32[16,1], index: 3, kind: input, shape index: {}]
  %s4 = inlined_call_operand.vmem [shape: bf16[16,128], index: 4, kind: output, shape index: {}]
  %s5 = sld [smem:[#allocation0]]
  $region34: #{pspnet_forward.14} parent=0
    _
  %s7 = ssub.s32 1, %s5
  %s8 = scalar_select 0, %s7, %s5
  // Predicated region
  $region2: #{pspnet_forward.14} parent=0 // pred_check
    _
  $region3: #{pspnet_forward.14} parent=0 // pred_check_branch
    %10 = sbr.rel (0) target = $region5
  $region4: #{pspnet_forward.14} parent=0 // pred_region
    _
  $region5: #{pspnet_forward.14} parent=0 // pred_fallthru
    _
  // Predicated region
  $region6: #{pspnet_forward.14} parent=0 // pred_check
    _
  $region7: #{pspnet_forward.14} parent=0 // pred_check_branch
    %12 = sbr.rel (0) target = $region9
  $region8: #{pspnet_forward.14} parent=0 // pred_region
    _
  $region9: #{pspnet_forward.14} parent=0 // pred_fallthru
    _
  // Predicated region
  $region10: #{pspnet_forward.14} parent=0 // pred_check
    _
  $region11: #{pspnet_forward.14} parent=0 // pred_check_branch
    %14 = sbr.rel (0) target = $region13
  $region12: #{pspnet_forward.14} parent=0 // pred_region
    _
  $region13: #{pspnet_forward.14} parent=0 // pred_fallthru
    _
  // Predicated region
  $region14: #{pspnet_forward.14} parent=0 // pred_check
    _
  $region15: #{pspnet_forward.14} parent=0 // pred_check_branch
    %16 = sbr.rel (0) target = $region17
  $region16: #{pspnet_forward.14} parent=0 // pred_region
    _
  $region17: #{pspnet_forward.14} parent=0 // pred_fallthru
    _
  %p18 = scmp.eq.s32.totalorder 0, 0
  // Predicated region
  $region18: #{pspnet_forward.14} parent=0 // pred_check
    %p19 = pneg %p18
  $region19: #{pspnet_forward.14} parent=0 // pred_check_branch
    %21 = sbr.rel (%p19) target = $region21
  $region20: #{pspnet_forward.14} parent=0 // pred_region
    %22 = vst [vmem:[#allocation2] sm:$0xff] 0.0
    %23 = vst [vmem:[#allocation2 + $0x8] sm:$0xff] 0.0
  $region21: #{pspnet_forward.14} parent=0 // pred_fallthru
    _
  %v24 = vld [vmem:[#allocation2] sm:$0xff]
  %v25 = vld [vmem:[#allocation2 + $0x8] sm:$0xff]
  %v26 = vld [vmem:[%s0] sm:$0xf]
  %v27 = vld [vmem:[%s0 + $0x4] sm:$0xf]
  %v28 = vld [vmem:[%s1] sm:$0xf]
  %v29 = vld [vmem:[%s1 + $0x4] sm:$0xf]
  %v30 = vld [vmem:[%s1 + $0x8] sm:$0xf]
  %v31 = vld [vmem:[%s1 + $0xc] sm:$0xf]
  %v32 = vld [vmem:[%s1 + $0x10] sm:$0xf]
  %v33 = vld [vmem:[%s1 + $0x14] sm:$0xf]
  %v34 = vld [vmem:[%s1 + $0x18] sm:$0xf]
  %v35 = vld [vmem:[%s1 + $0x1c] sm:$0xf]
  %v36 = vld [vmem:[%s1 + $0x20] sm:$0xf]
  %v39 = vunpack.c.l.b16 %v26
  %v40 = vunpack.c.l.b16 %v27
  %v41 = vpack.c.b16 %v40, %v39
  %v51 = vunpack.c.l.b16 %v28
  %v52 = vunpack.c.l.b16 %v29
  %v53 = vunpack.c.l.b16 %v30
  %v54 = vunpack.c.l.b16 %v31
  %v55 = vunpack.c.l.b16 %v32
  %v56 = vunpack.c.l.b16 %v33
  %v57 = vunpack.c.l.b16 %v34
  %v58 = vunpack.c.l.b16 %v35
  %v59 = vunpack.c.l.b16 %v36
  %v60 = vpack.c.b16 %v52, %v51
  %v61 = vpack.c.b16 %v54, %v53
  %v62 = vpack.c.b16 %v56, %v55
  %v63 = vpack.c.b16 %v58, %v57
  %v64 = vpack.c.b16 %v59, %v59
  %vm69 = vcmask 588800
  %v71 = vsel %vm69, %v41, 0
  %vm73 = vcmask 1043456
  %v75 = vsel %vm73, %v64, 0
  %77 = vmatprep.subr.bf16.mxu0 0
  %78 = vmatpush1.bf16.msra.mxu0 0
  %79 = vmatprep.subr.bf16.mxu0 0
  %80 = vmatpush1.bf16.msra.mxu0 0
  %81 = vmatprep.subr.bf16.mxu0 0
  %82 = vmatpush1.bf16.msra.mxu0 0
  %83 = vmatprep.subr.bf16.mxu0 0
  %84 = vmatpush1.bf16.msra.mxu0 %v75
  %85 = vmatprep.subr.bf16.mxu0 0
  %86 = vmatpush1.bf16.msra.mxu0 %v63
  %87 = vmatprep.subr.bf16.mxu0 0
  %88 = vmatpush1.bf16.msra.mxu0 %v62
  %89 = vmatprep.subr.bf16.mxu0 0
  %90 = vmatpush1.bf16.msra.mxu0 %v61
  %91 = vmatprep.subr.bf16.mxu0 0
  %92 = vmatpush1.bf16.msra.mxu0 %v60
  %93 = vmatprep.subr.bf16.mxu0 0
  %94 = vmatpush2.bf16.msra.mxu0 0
  %95 = vmatprep.subr.bf16.mxu0 0
  %96 = vmatpush2.bf16.msra.mxu0 0
  %97 = vmatprep.subr.bf16.mxu0 0
  %98 = vmatpush2.bf16.msra.mxu0 0
  %99 = vmatprep.subr.bf16.mxu0 0
  %100 = vmatpush2.bf16.msra.mxu0 0
  %101 = vmatprep.subr.bf16.mxu0 0
  %102 = vmatpush2.bf16.msra.mxu0 0
  %103 = vmatprep.subr.bf16.mxu0 0
  %104 = vmatpush2.bf16.msra.mxu0 0
  %105 = vmatprep.subr.bf16.mxu0 0
  %106 = vmatpush2.bf16.msra.mxu0 0
  %107 = vmatprep.subr.bf16.mxu0 0
  %108 = vmatpush2.bf16.msra.mxu0 0
  %109 = vmatprep.mubr.bf16.mxu0 0
  %110 = vmatmul.mubr.bf16.gmra.mxu0 %v71
  %v111 = vpop.f32.mrf.mxu0
  %v112 = vadd.f32 0.0, %v111
  %v113 = vpop.f32.mrf.mxu0
  %v114 = vpop.f32.mrf.mxu0
  %v115 = vadd.f32 0.0, %v114
  %v116 = vpop.f32.mrf.mxu0
  %117 = vdwg.mxu0
  %v118 = vadd.f32 %v24, %v112
  %v119 = vadd.f32 %v25, %v115
  %120 = vst [vmem:[#allocation2] sm:$0xff] %v118
  %121 = vst [vmem:[#allocation2 + $0x8] sm:$0xff] %v119
  // Predicated region
  $region22: #{pspnet_forward.14} parent=0 // pred_check
    %p122 = pneg %p18
  $region23: #{pspnet_forward.14} parent=0 // pred_check_branch
    %124 = sbr.rel (%p122) target = $region25
  $region24: #{pspnet_forward.14} parent=0 // pred_region
    %v125 = vld [vmem:[#allocation2] sm:$0xff]
    %v126 = vld [vmem:[#allocation2 + $0x8] sm:$0xff]
    %v127 = vld [vmem:[%s2] sm:$0xff]
    %v128 = vld [vmem:[%s2 + $0x8] sm:$0xff]
    %130 = vset.pattern.permute.xlu0 0
    %131 = vperm.xlu0 %130, %v127
    %v132 = vpop.permute.xlu0 %131
    %135 = vset.pattern.permute.xlu0 0
    %136 = vperm.xlu0 %135, %v128
    %v137 = vpop.permute.xlu0 %136
    %v139 = vmul.f32 %v125, %v132
    %v140 = vmul.f32 %v126, %v137
    %v141 = vld [vmem:[%s3] sm:$0xff]
    %v142 = vld [vmem:[%s3 + $0x8] sm:$0xff]
    %144 = vset.pattern.permute.xlu0 0
    %145 = vperm.xlu0 %144, %v141
    %v146 = vpop.permute.xlu0 %145
    %149 = vset.pattern.permute.xlu0 0
    %150 = vperm.xlu0 %149, %v142
    %v151 = vpop.permute.xlu0 %150
    %v153 = vadd.f32 %v139, %v146
    %v154 = vadd.f32 %v140, %v151
    %v155 = vmax.f32 %v153, 0.0
    %v156 = vmax.f32 %v154, 0.0
    %v157 = vpack.c.bf16 %v156, %v155
    %v159 = vunpack.c.l.b16 %v157
    %v160 = vunpack.c.h.b16 %v157
    %v161 = vpack.c.b16 %v159, %v159
    %v162 = vpack.c.b16 %v160, %v160
    %165 = vst [vmem:[%s4] sm:$0xf] %v161
    %166 = vst [vmem:[%s4 + $0x4] sm:$0xf] %v162
  $region25: #{pspnet_forward.14} parent=0 // pred_fallthru
    _
  // Predicated region
  $region26: #{pspnet_forward.14} parent=0 // pred_check
    _
  $region27: #{pspnet_forward.14} parent=0 // pred_check_branch
    %168 = sbr.rel (0) target = $region29
  $region28: #{pspnet_forward.14} parent=0 // pred_region
    _
  $region29: #{pspnet_forward.14} parent=0 // pred_fallthru
    _
  // Predicated region
  $region30: #{pspnet_forward.14} parent=0 // pred_check
    _
  $region31: #{pspnet_forward.14} parent=0 // pred_check_branch
    %170 = sbr.rel (0) target = $region33
  $region32: #{pspnet_forward.14} parent=0 // pred_region
    _
  $region33: #{pspnet_forward.14} parent=0 // pred_fallthru
    _

// kernel: pspnet_forward.15
$region0: #{pspnet_forward.15}
  #allocation0 [shape = 'u32[]', space=smem, size = 0x4, offset = 0x4, fixed_abs, tag = 'smem constant byte address 0x4 - core index']
  #allocation1 [shape = 'u32[144,128]{1,0:T(1,128)}', space=vmem, size = 0x12000, scoped, tag = 'internal scratch']
  #allocation2 [shape = 'f32[16,128]{1,0:T(8,128)}', space=vmem, size = 0x2000, scoped, tag = 'scratch operand']
  %s0 = inlined_call_operand.vmem [shape: bf16[16,144], index: 0, kind: input, shape index: {}]
  %s1 = inlined_call_operand.vmem [shape: bf16[144,128], index: 1, kind: input, shape index: {}]
  %s2 = inlined_call_operand.vmem [shape: f32[16,1], index: 2, kind: input, shape index: {}]
  %s3 = inlined_call_operand.vmem [shape: f32[16,1], index: 3, kind: input, shape index: {}]
  %s4 = inlined_call_operand.vmem [shape: bf16[16,128], index: 4, kind: output, shape index: {}]
  %s5 = sld [smem:[#allocation0]]
  $region34: #{pspnet_forward.15} parent=0
    _
  %s7 = ssub.s32 1, %s5
  %s8 = scalar_select 0, %s7, %s5
  // Predicated region
  $region2: #{pspnet_forward.15} parent=0 // pred_check
    _
  $region3: #{pspnet_forward.15} parent=0 // pred_check_branch
    %10 = sbr.rel (0) target = $region5
  $region4: #{pspnet_forward.15} parent=0 // pred_region
    _
  $region5: #{pspnet_forward.15} parent=0 // pred_fallthru
    _
  // Predicated region
  $region6: #{pspnet_forward.15} parent=0 // pred_check
    _
  $region7: #{pspnet_forward.15} parent=0 // pred_check_branch
    %12 = sbr.rel (0) target = $region9
  $region8: #{pspnet_forward.15} parent=0 // pred_region
    _
  $region9: #{pspnet_forward.15} parent=0 // pred_fallthru
    _
  // Predicated region
  $region10: #{pspnet_forward.15} parent=0 // pred_check
    _
  $region11: #{pspnet_forward.15} parent=0 // pred_check_branch
    %14 = sbr.rel (0) target = $region13
  $region12: #{pspnet_forward.15} parent=0 // pred_region
    _
  $region13: #{pspnet_forward.15} parent=0 // pred_fallthru
    _
  // Predicated region
  $region14: #{pspnet_forward.15} parent=0 // pred_check
    _
  $region15: #{pspnet_forward.15} parent=0 // pred_check_branch
    %16 = sbr.rel (0) target = $region17
  $region16: #{pspnet_forward.15} parent=0 // pred_region
    _
  $region17: #{pspnet_forward.15} parent=0 // pred_fallthru
    _
  %p18 = scmp.eq.s32.totalorder 0, 0
  // Predicated region
  $region18: #{pspnet_forward.15} parent=0 // pred_check
    %p19 = pneg %p18
  $region19: #{pspnet_forward.15} parent=0 // pred_check_branch
    %21 = sbr.rel (%p19) target = $region21
  $region20: #{pspnet_forward.15} parent=0 // pred_region
    %22 = vst [vmem:[#allocation2] sm:$0xff] 0.0
    %23 = vst [vmem:[#allocation2 + $0x8] sm:$0xff] 0.0
  $region21: #{pspnet_forward.15} parent=0 // pred_fallthru
    _
  %v24 = vld [vmem:[#allocation2] sm:$0xff]
  %v25 = vld [vmem:[#allocation2 + $0x8] sm:$0xff]
  %v26 = vld [vmem:[%s0] sm:$0xff]
  %v27 = vld [vmem:[%s0 + $0x8] sm:$0xff]
  %v28 = vld [vmem:[%s1] sm:$0xf]
  %v29 = vld [vmem:[%s1 + $0x4] sm:$0xf]
  %v30 = vld [vmem:[%s1 + $0x8] sm:$0xf]
  %v31 = vld [vmem:[%s1 + $0xc] sm:$0xf]
  %v32 = vld [vmem:[%s1 + $0x10] sm:$0xf]
  %v33 = vld [vmem:[%s1 + $0x14] sm:$0xf]
  %v34 = vld [vmem:[%s1 + $0x18] sm:$0xf]
  %v35 = vld [vmem:[%s1 + $0x1c] sm:$0xf]
  %v36 = vld [vmem:[%s1 + $0x20] sm:$0xf]
  %v37 = vld [vmem:[%s1 + $0x24] sm:$0xf]
  %v38 = vld [vmem:[%s1 + $0x28] sm:$0xf]
  %v39 = vld [vmem:[%s1 + $0x2c] sm:$0xf]
  %v40 = vld [vmem:[%s1 + $0x30] sm:$0xf]
  %v41 = vld [vmem:[%s1 + $0x34] sm:$0xf]
  %v42 = vld [vmem:[%s1 + $0x38] sm:$0xf]
  %v43 = vld [vmem:[%s1 + $0x3c] sm:$0xf]
  %v44 = vld [vmem:[%s1 + $0x40] sm:$0xf]
  %v45 = vld [vmem:[%s1 + $0x44] sm:$0xf]
  %v48 = vunpack.c.l.b16 %v26
  %v49 = vunpack.c.h.b16 %v26
  %v50 = vunpack.c.l.b16 %v27
  %v51 = vunpack.c.h.b16 %v27
  %v52 = vpack.c.b16 %v50, %v48
  %v53 = vpack.c.b16 %v51, %v49
  %v73 = vunpack.c.l.b16 %v28
  %v74 = vunpack.c.l.b16 %v29
  %v75 = vunpack.c.l.b16 %v30
  %v76 = vunpack.c.l.b16 %v31
  %v77 = vunpack.c.l.b16 %v32
  %v78 = vunpack.c.l.b16 %v33
  %v79 = vunpack.c.l.b16 %v34
  %v80 = vunpack.c.l.b16 %v35
  %v81 = vunpack.c.l.b16 %v36
  %v82 = vunpack.c.l.b16 %v37
  %v83 = vunpack.c.l.b16 %v38
  %v84 = vunpack.c.l.b16 %v39
  %v85 = vunpack.c.l.b16 %v40
  %v86 = vunpack.c.l.b16 %v41
  %v87 = vunpack.c.l.b16 %v42
  %v88 = vunpack.c.l.b16 %v43
  %v89 = vunpack.c.l.b16 %v44
  %v90 = vunpack.c.l.b16 %v45
  %v91 = vpack.c.b16 %v74, %v73
  %v92 = vpack.c.b16 %v76, %v75
  %v93 = vpack.c.b16 %v78, %v77
  %v94 = vpack.c.b16 %v80, %v79
  %v95 = vpack.c.b16 %v82, %v81
  %v96 = vpack.c.b16 %v84, %v83
  %v97 = vpack.c.b16 %v86, %v85
  %v98 = vpack.c.b16 %v88, %v87
  %v99 = vpack.c.b16 %v90, %v89
  %vm109 = vcmask 130048
  %v111 = vsel %vm109, %v53, 0
  %113 = vmatprep.subr.bf16.mxu0 0
  %114 = vmatpush1.bf16.msra.mxu0 %v98
  %115 = vmatprep.subr.bf16.mxu0 0
  %116 = vmatpush1.bf16.msra.mxu0 %v97
  %117 = vmatprep.subr.bf16.mxu0 0
  %118 = vmatpush1.bf16.msra.mxu0 %v96
  %119 = vmatprep.subr.bf16.mxu0 0
  %120 = vmatpush1.bf16.msra.mxu0 %v95
  %121 = vmatprep.subr.bf16.mxu0 0
  %122 = vmatpush1.bf16.msra.mxu0 %v94
  %123 = vmatprep.subr.bf16.mxu0 0
  %124 = vmatpush1.bf16.msra.mxu0 %v93
  %125 = vmatprep.subr.bf16.mxu0 0
  %126 = vmatpush1.bf16.msra.mxu0 %v92
  %127 = vmatprep.subr.bf16.mxu0 0
  %128 = vmatpush1.bf16.msra.mxu0 %v91
  %129 = vmatprep.subr.bf16.mxu0 0
  %130 = vmatpush2.bf16.msra.mxu0 0
  %131 = vmatprep.subr.bf16.mxu0 0
  %132 = vmatpush2.bf16.msra.mxu0 0
  %133 = vmatprep.subr.bf16.mxu0 0
  %134 = vmatpush2.bf16.msra.mxu0 0
  %135 = vmatprep.subr.bf16.mxu0 0
  %136 = vmatpush2.bf16.msra.mxu0 0
  %137 = vmatprep.subr.bf16.mxu0 0
  %138 = vmatpush2.bf16.msra.mxu0 0
  %139 = vmatprep.subr.bf16.mxu0 0
  %140 = vmatpush2.bf16.msra.mxu0 0
  %141 = vmatprep.subr.bf16.mxu0 0
  %142 = vmatpush2.bf16.msra.mxu0 0
  %143 = vmatprep.subr.bf16.mxu0 0
  %144 = vmatpush2.bf16.msra.mxu0 %v99
  %145 = vmatprep.mubr.bf16.mxu0 %v111
  %146 = vmatmul.mubr.bf16.gmra.mxu0 %v52
  %v147 = vpop.f32.mrf.mxu0
  %v148 = vadd.f32 0.0, %v147
  %v149 = vpop.f32.mrf.mxu0
  %v150 = vpop.f32.mrf.mxu0
  %v151 = vadd.f32 0.0, %v150
  %v152 = vpop.f32.mrf.mxu0
  %153 = vdwg.mxu0
  %v154 = vadd.f32 %v24, %v148
  %v155 = vadd.f32 %v25, %v151
  %156 = vst [vmem:[#allocation2] sm:$0xff] %v154
  %157 = vst [vmem:[#allocation2 + $0x8] sm:$0xff] %v155
  // Predicated region
  $region22: #{pspnet_forward.15} parent=0 // pred_check
    %p158 = pneg %p18
  $region23: #{pspnet_forward.15} parent=0 // pred_check_branch
    %160 = sbr.rel (%p158) target = $region25
  $region24: #{pspnet_forward.15} parent=0 // pred_region
    %v161 = vld [vmem:[#allocation2] sm:$0xff]
    %v162 = vld [vmem:[#allocation2 + $0x8] sm:$0xff]
    %v163 = vld [vmem:[%s2] sm:$0xff]
    %v164 = vld [vmem:[%s2 + $0x8] sm:$0xff]
    %166 = vset.pattern.permute.xlu0 0
    %167 = vperm.xlu0 %166, %v163
    %v168 = vpop.permute.xlu0 %167
    %171 = vset.pattern.permute.xlu0 0
    %172 = vperm.xlu0 %171, %v164
    %v173 = vpop.permute.xlu0 %172
    %v175 = vmul.f32 %v161, %v168
    %v176 = vmul.f32 %v162, %v173
    %v177 = vld [vmem:[%s3] sm:$0xff]
    %v178 = vld [vmem:[%s3 + $0x8] sm:$0xff]
    %180 = vset.pattern.permute.xlu0 0
    %181 = vperm.xlu0 %180, %v177
    %v182 = vpop.permute.xlu0 %181
    %185 = vset.pattern.permute.xlu0 0
    %186 = vperm.xlu0 %185, %v178
    %v187 = vpop.permute.xlu0 %186
    %v189 = vadd.f32 %v175, %v182
    %v190 = vadd.f32 %v176, %v187
    %v191 = vmax.f32 %v189, 0.0
    %v192 = vmax.f32 %v190, 0.0
    %v193 = vpack.c.bf16 %v192, %v191
    %v195 = vunpack.c.l.b16 %v193
    %v196 = vunpack.c.h.b16 %v193
    %v197 = vpack.c.b16 %v195, %v195
    %v198 = vpack.c.b16 %v196, %v196
    %201 = vst [vmem:[%s4] sm:$0xf] %v197
    %202 = vst [vmem:[%s4 + $0x4] sm:$0xf] %v198
  $region25: #{pspnet_forward.15} parent=0 // pred_fallthru
    _
  // Predicated region
  $region26: #{pspnet_forward.15} parent=0 // pred_check
    _
  $region27: #{pspnet_forward.15} parent=0 // pred_check_branch
    %204 = sbr.rel (0) target = $region29
  $region28: #{pspnet_forward.15} parent=0 // pred_region
    _
  $region29: #{pspnet_forward.15} parent=0 // pred_fallthru
    _
  // Predicated region
  $region30: #{pspnet_forward.15} parent=0 // pred_check
    _
  $region31: #{pspnet_forward.15} parent=0 // pred_check_branch
    %206 = sbr.rel (0) target = $region33
  $region32: #{pspnet_forward.15} parent=0 // pred_region
    _
  $region33: #{pspnet_forward.15} parent=0 // pred_fallthru
    _

// kernel: pspnet_forward.17
$region0: #{pspnet_forward.17}
  #allocation0 [shape = 'u32[]', space=smem, size = 0x4, offset = 0x4, fixed_abs, tag = 'smem constant byte address 0x4 - core index']
  #allocation1 [shape = 'u32[144,128]{1,0:T(1,128)}', space=vmem, size = 0x12000, scoped, tag = 'internal scratch']
  #allocation2 [shape = 'f32[64,128]{1,0:T(8,128)}', space=vmem, size = 0x8000, scoped, tag = 'scratch operand']
  %s0 = inlined_call_operand.vmem [shape: bf16[64,36], index: 0, kind: input, shape index: {}]
  %s1 = inlined_call_operand.vmem [shape: bf16[36,128], index: 1, kind: input, shape index: {}]
  %s2 = inlined_call_operand.vmem [shape: f32[64,1], index: 2, kind: input, shape index: {}]
  %s3 = inlined_call_operand.vmem [shape: f32[64,1], index: 3, kind: input, shape index: {}]
  %s4 = inlined_call_operand.vmem [shape: bf16[64,128], index: 4, kind: output, shape index: {}]
  %s5 = sld [smem:[#allocation0]]
  $region34: #{pspnet_forward.17} parent=0
    _
  %s7 = ssub.s32 1, %s5
  %s8 = scalar_select 0, %s7, %s5
  // Predicated region
  $region2: #{pspnet_forward.17} parent=0 // pred_check
    _
  $region3: #{pspnet_forward.17} parent=0 // pred_check_branch
    %10 = sbr.rel (0) target = $region5
  $region4: #{pspnet_forward.17} parent=0 // pred_region
    _
  $region5: #{pspnet_forward.17} parent=0 // pred_fallthru
    _
  // Predicated region
  $region6: #{pspnet_forward.17} parent=0 // pred_check
    _
  $region7: #{pspnet_forward.17} parent=0 // pred_check_branch
    %12 = sbr.rel (0) target = $region9
  $region8: #{pspnet_forward.17} parent=0 // pred_region
    _
  $region9: #{pspnet_forward.17} parent=0 // pred_fallthru
    _
  // Predicated region
  $region10: #{pspnet_forward.17} parent=0 // pred_check
    _
  $region11: #{pspnet_forward.17} parent=0 // pred_check_branch
    %14 = sbr.rel (0) target = $region13
  $region12: #{pspnet_forward.17} parent=0 // pred_region
    _
  $region13: #{pspnet_forward.17} parent=0 // pred_fallthru
    _
  // Predicated region
  $region14: #{pspnet_forward.17} parent=0 // pred_check
    _
  $region15: #{pspnet_forward.17} parent=0 // pred_check_branch
    %16 = sbr.rel (0) target = $region17
  $region16: #{pspnet_forward.17} parent=0 // pred_region
    _
  $region17: #{pspnet_forward.17} parent=0 // pred_fallthru
    _
  %p18 = scmp.eq.s32.totalorder 0, 0
  // Predicated region
  $region18: #{pspnet_forward.17} parent=0 // pred_check
    %p19 = pneg %p18
  $region19: #{pspnet_forward.17} parent=0 // pred_check_branch
    %21 = sbr.rel (%p19) target = $region21
  $region20: #{pspnet_forward.17} parent=0 // pred_region
    %22 = vst [vmem:[#allocation2] sm:$0xff] 0.0
    %23 = vst [vmem:[#allocation2 + $0x8] sm:$0xff] 0.0
    %24 = vst [vmem:[#allocation2 + $0x10] sm:$0xff] 0.0
    %25 = vst [vmem:[#allocation2 + $0x18] sm:$0xff] 0.0
    %26 = vst [vmem:[#allocation2 + $0x20] sm:$0xff] 0.0
    %27 = vst [vmem:[#allocation2 + $0x28] sm:$0xff] 0.0
    %28 = vst [vmem:[#allocation2 + $0x30] sm:$0xff] 0.0
    %29 = vst [vmem:[#allocation2 + $0x38] sm:$0xff] 0.0
  $region21: #{pspnet_forward.17} parent=0 // pred_fallthru
    _
  %v30 = vld [vmem:[#allocation2] sm:$0xff]
  %v31 = vld [vmem:[#allocation2 + $0x8] sm:$0xff]
  %v32 = vld [vmem:[#allocation2 + $0x10] sm:$0xff]
  %v33 = vld [vmem:[#allocation2 + $0x18] sm:$0xff]
  %v34 = vld [vmem:[#allocation2 + $0x20] sm:$0xff]
  %v35 = vld [vmem:[#allocation2 + $0x28] sm:$0xff]
  %v36 = vld [vmem:[#allocation2 + $0x30] sm:$0xff]
  %v37 = vld [vmem:[#allocation2 + $0x38] sm:$0xff]
  %v38 = vld [vmem:[%s0] sm:$0xf]
  %v39 = vld [vmem:[%s0 + $0x4] sm:$0xf]
  %v40 = vld [vmem:[%s0 + $0x8] sm:$0xf]
  %v41 = vld [vmem:[%s0 + $0xc] sm:$0xf]
  %v42 = vld [vmem:[%s0 + $0x10] sm:$0xf]
  %v43 = vld [vmem:[%s0 + $0x14] sm:$0xf]
  %v44 = vld [vmem:[%s0 + $0x18] sm:$0xf]
  %v45 = vld [vmem:[%s0 + $0x1c] sm:$0xf]
  %v46 = vld [vmem:[%s1] sm:$0xf]
  %v47 = vld [vmem:[%s1 + $0x4] sm:$0xf]
  %v48 = vld [vmem:[%s1 + $0x8] sm:$0xf]
  %v49 = vld [vmem:[%s1 + $0xc] sm:$0xf]
  %v50 = vld [vmem:[%s1 + $0x10] sm:$0x3]
  %v59 = vunpack.c.l.b16 %v38
  %v60 = vunpack.c.l.b16 %v39
  %v61 = vunpack.c.l.b16 %v40
  %v62 = vunpack.c.l.b16 %v41
  %v63 = vunpack.c.l.b16 %v42
  %v64 = vunpack.c.l.b16 %v43
  %v65 = vunpack.c.l.b16 %v44
  %v66 = vunpack.c.l.b16 %v45
  %v67 = vpack.c.b16 %v60, %v59
  %v68 = vpack.c.b16 %v62, %v61
  %v69 = vpack.c.b16 %v64, %v63
  %v70 = vpack.c.b16 %v66, %v65
  %v76 = vunpack.c.l.b16 %v46
  %v77 = vunpack.c.l.b16 %v47
  %v78 = vunpack.c.l.b16 %v48
  %v79 = vunpack.c.l.b16 %v49
  %v80 = vunpack.c.l.b16 %v50
  %v81 = vpack.c.b16 %v77, %v76
  %v82 = vpack.c.b16 %v79, %v78
  %v83 = vpack.c.b16 %v80, %v80
  %vm86 = vcmask 293888
  %v88 = vsel %vm86, %v67, 0
  %v91 = vsel %vm86, %v68, 0
  %v94 = vsel %vm86, %v69, 0
  %v97 = vsel %vm86, %v70, 0
  %vm99 = vcmask 1041408
  %v101 = vsel %vm99, %v83, 0
  %103 = vmatprep.subr.bf16.mxu0 0
  %104 = vmatpush1.bf16.msra.mxu0 0
  %105 = vmatprep.subr.bf16.mxu0 0
  %106 = vmatpush1.bf16.msra.mxu0 0
  %107 = vmatprep.subr.bf16.mxu0 0
  %108 = vmatpush1.bf16.msra.mxu0 0
  %109 = vmatprep.subr.bf16.mxu0 0
  %110 = vmatpush1.bf16.msra.mxu0 0
  %111 = vmatprep.subr.bf16.mxu0 0
  %112 = vmatpush1.bf16.msra.mxu0 0
  %113 = vmatprep.subr.bf16.mxu0 0
  %114 = vmatpush1.bf16.msra.mxu0 %v101
  %115 = vmatprep.subr.bf16.mxu0 0
  %116 = vmatpush1.bf16.msra.mxu0 %v82
  %117 = vmatprep.subr.bf16.mxu0 0
  %118 = vmatpush1.bf16.msra.mxu0 %v81
  %119 = vmatprep.subr.bf16.mxu0 0
  %120 = vmatpush2.bf16.msra.mxu0 0
  %121 = vmatprep.subr.bf16.mxu0 0
  %122 = vmatpush2.bf16.msra.mxu0 0
  %123 = vmatprep.subr.bf16.mxu0 0
  %124 = vmatpush2.bf16.msra.mxu0 0
  %125 = vmatprep.subr.bf16.mxu0 0
  %126 = vmatpush2.bf16.msra.mxu0 0
  %127 = vmatprep.subr.bf16.mxu0 0
  %128 = vmatpush2.bf16.msra.mxu0 0
  %129 = vmatprep.subr.bf16.mxu0 0
  %130 = vmatpush2.bf16.msra.mxu0 0
  %131 = vmatprep.subr.bf16.mxu0 0
  %132 = vmatpush2.bf16.msra.mxu0 0
  %133 = vmatprep.subr.bf16.mxu0 0
  %134 = vmatpush2.bf16.msra.mxu0 0
  %135 = vmatprep.mubr.bf16.mxu0 0
  %136 = vmatmul.mubr.bf16.gmra.mxu0 %v88
  %v137 = vpop.f32.mrf.mxu0
  %v138 = vadd.f32 0.0, %v137
  %v139 = vpop.f32.mrf.mxu0
  %v140 = vpop.f32.mrf.mxu0
  %v141 = vadd.f32 0.0, %v140
  %v142 = vpop.f32.mrf.mxu0
  %143 = vmatprep.mubr.bf16.mxu0 0
  %144 = vmatmul.mubr.bf16.gmra.mxu0 %v91
  %v145 = vpop.f32.mrf.mxu0
  %v146 = vadd.f32 0.0, %v145
  %v147 = vpop.f32.mrf.mxu0
  %v148 = vpop.f32.mrf.mxu0
  %v149 = vadd.f32 0.0, %v148
  %v150 = vpop.f32.mrf.mxu0
  %151 = vmatprep.mubr.bf16.mxu0 0
  %152 = vmatmul.mubr.bf16.gmra.mxu0 %v94
  %v153 = vpop.f32.mrf.mxu0
  %v154 = vadd.f32 0.0, %v153
  %v155 = vpop.f32.mrf.mxu0
  %v156 = vpop.f32.mrf.mxu0
  %v157 = vadd.f32 0.0, %v156
  %v158 = vpop.f32.mrf.mxu0
  %159 = vmatprep.mubr.bf16.mxu0 0
  %160 = vmatmul.mubr.bf16.gmra.mxu0 %v97
  %v161 = vpop.f32.mrf.mxu0
  %v162 = vadd.f32 0.0, %v161
  %v163 = vpop.f32.mrf.mxu0
  %v164 = vpop.f32.mrf.mxu0
  %v165 = vadd.f32 0.0, %v164
  %v166 = vpop.f32.mrf.mxu0
  %167 = vdwg.mxu0
  %v168 = vadd.f32 %v30, %v138
  %v169 = vadd.f32 %v31, %v141
  %v170 = vadd.f32 %v32, %v146
  %v171 = vadd.f32 %v33, %v149
  %v172 = vadd.f32 %v34, %v154
  %v173 = vadd.f32 %v35, %v157
  %v174 = vadd.f32 %v36, %v162
  %v175 = vadd.f32 %v37, %v165
  %176 = vst [vmem:[#allocation2] sm:$0xff] %v168
  %177 = vst [vmem:[#allocation2 + $0x8] sm:$0xff] %v169
  %178 = vst [vmem:[#allocation2 + $0x10] sm:$0xff] %v170
  %179 = vst [vmem:[#allocation2 + $0x18] sm:$0xff] %v171
  %180 = vst [vmem:[#allocation2 + $0x20] sm:$0xff] %v172
  %181 = vst [vmem:[#allocation2 + $0x28] sm:$0xff] %v173
  %182 = vst [vmem:[#allocation2 + $0x30] sm:$0xff] %v174
  %183 = vst [vmem:[#allocation2 + $0x38] sm:$0xff] %v175
  // Predicated region
  $region22: #{pspnet_forward.17} parent=0 // pred_check
    %p184 = pneg %p18
  $region23: #{pspnet_forward.17} parent=0 // pred_check_branch
    %186 = sbr.rel (%p184) target = $region25
  $region24: #{pspnet_forward.17} parent=0 // pred_region
    %v187 = vld [vmem:[#allocation2] sm:$0xff]
    %v188 = vld [vmem:[#allocation2 + $0x8] sm:$0xff]
    %v189 = vld [vmem:[#allocation2 + $0x10] sm:$0xff]
    %v190 = vld [vmem:[#allocation2 + $0x18] sm:$0xff]
    %v191 = vld [vmem:[#allocation2 + $0x20] sm:$0xff]
    %v192 = vld [vmem:[#allocation2 + $0x28] sm:$0xff]
    %v193 = vld [vmem:[#allocation2 + $0x30] sm:$0xff]
    %v194 = vld [vmem:[#allocation2 + $0x38] sm:$0xff]
    %v195 = vld [vmem:[%s2] sm:$0xff]
    %v196 = vld [vmem:[%s2 + $0x8] sm:$0xff]
    %v197 = vld [vmem:[%s2 + $0x10] sm:$0xff]
    %v198 = vld [vmem:[%s2 + $0x18] sm:$0xff]
    %v199 = vld [vmem:[%s2 + $0x20] sm:$0xff]
    %v200 = vld [vmem:[%s2 + $0x28] sm:$0xff]
    %v201 = vld [vmem:[%s2 + $0x30] sm:$0xff]
    %v202 = vld [vmem:[%s2 + $0x38] sm:$0xff]
    %204 = vset.pattern.permute.xlu0 0
    %205 = vperm.xlu0 %204, %v195
    %v206 = vpop.permute.xlu0 %205
    %209 = vset.pattern.permute.xlu0 0
    %210 = vperm.xlu0 %209, %v196
    %v211 = vpop.permute.xlu0 %210
    %214 = vset.pattern.permute.xlu0 0
    %215 = vperm.xlu0 %214, %v197
    %v216 = vpop.permute.xlu0 %215
    %219 = vset.pattern.permute.xlu0 0
    %220 = vperm.xlu0 %219, %v198
    %v221 = vpop.permute.xlu0 %220
    %224 = vset.pattern.permute.xlu0 0
    %225 = vperm.xlu0 %224, %v199
    %v226 = vpop.permute.xlu0 %225
    %229 = vset.pattern.permute.xlu0 0
    %230 = vperm.xlu0 %229, %v200
    %v231 = vpop.permute.xlu0 %230
    %234 = vset.pattern.permute.xlu0 0
    %235 = vperm.xlu0 %234, %v201
    %v236 = vpop.permute.xlu0 %235
    %239 = vset.pattern.permute.xlu0 0
    %240 = vperm.xlu0 %239, %v202
    %v241 = vpop.permute.xlu0 %240
    %v243 = vmul.f32 %v187, %v206
    %v244 = vmul.f32 %v188, %v211
    %v245 = vmul.f32 %v189, %v216
    %v246 = vmul.f32 %v190, %v221
    %v247 = vmul.f32 %v191, %v226
    %v248 = vmul.f32 %v192, %v231
    %v249 = vmul.f32 %v193, %v236
    %v250 = vmul.f32 %v194, %v241
    %v251 = vld [vmem:[%s3] sm:$0xff]
    %v252 = vld [vmem:[%s3 + $0x8] sm:$0xff]
    %v253 = vld [vmem:[%s3 + $0x10] sm:$0xff]
    %v254 = vld [vmem:[%s3 + $0x18] sm:$0xff]
    %v255 = vld [vmem:[%s3 + $0x20] sm:$0xff]
    %v256 = vld [vmem:[%s3 + $0x28] sm:$0xff]
    %v257 = vld [vmem:[%s3 + $0x30] sm:$0xff]
    %v258 = vld [vmem:[%s3 + $0x38] sm:$0xff]
    %260 = vset.pattern.permute.xlu0 0
    %261 = vperm.xlu0 %260, %v251
    %v262 = vpop.permute.xlu0 %261
    %265 = vset.pattern.permute.xlu0 0
    %266 = vperm.xlu0 %265, %v252
    %v267 = vpop.permute.xlu0 %266
    %270 = vset.pattern.permute.xlu0 0
    %271 = vperm.xlu0 %270, %v253
    %v272 = vpop.permute.xlu0 %271
    %275 = vset.pattern.permute.xlu0 0
    %276 = vperm.xlu0 %275, %v254
    %v277 = vpop.permute.xlu0 %276
    %280 = vset.pattern.permute.xlu0 0
    %281 = vperm.xlu0 %280, %v255
    %v282 = vpop.permute.xlu0 %281
    %285 = vset.pattern.permute.xlu0 0
    %286 = vperm.xlu0 %285, %v256
    %v287 = vpop.permute.xlu0 %286
    %290 = vset.pattern.permute.xlu0 0
    %291 = vperm.xlu0 %290, %v257
    %v292 = vpop.permute.xlu0 %291
    %295 = vset.pattern.permute.xlu0 0
    %296 = vperm.xlu0 %295, %v258
    %v297 = vpop.permute.xlu0 %296
    %v299 = vadd.f32 %v243, %v262
    %v300 = vadd.f32 %v244, %v267
    %v301 = vadd.f32 %v245, %v272
    %v302 = vadd.f32 %v246, %v277
    %v303 = vadd.f32 %v247, %v282
    %v304 = vadd.f32 %v248, %v287
    %v305 = vadd.f32 %v249, %v292
    %v306 = vadd.f32 %v250, %v297
    %v307 = vpack.c.bf16 %v300, %v299
    %v308 = vpack.c.bf16 %v302, %v301
    %v309 = vpack.c.bf16 %v304, %v303
    %v310 = vpack.c.bf16 %v306, %v305
    %v315 = vunpack.c.l.b16 %v307
    %v316 = vunpack.c.h.b16 %v307
    %v317 = vunpack.c.l.b16 %v308
    %v318 = vunpack.c.h.b16 %v308
    %v319 = vunpack.c.l.b16 %v309
    %v320 = vunpack.c.h.b16 %v309
    %v321 = vunpack.c.l.b16 %v310
    %v322 = vunpack.c.h.b16 %v310
    %v323 = vpack.c.b16 %v315, %v315
    %v324 = vpack.c.b16 %v316, %v316
    %v325 = vpack.c.b16 %v317, %v317
    %v326 = vpack.c.b16 %v318, %v318
    %v327 = vpack.c.b16 %v319, %v319
    %v328 = vpack.c.b16 %v320, %v320
    %v329 = vpack.c.b16 %v321, %v321
    %v330 = vpack.c.b16 %v322, %v322
    %339 = vst [vmem:[%s4] sm:$0xf] %v323
    %340 = vst [vmem:[%s4 + $0x4] sm:$0xf] %v324
    %341 = vst [vmem:[%s4 + $0x8] sm:$0xf] %v325
    %342 = vst [vmem:[%s4 + $0xc] sm:$0xf] %v326
    %343 = vst [vmem:[%s4 + $0x10] sm:$0xf] %v327
    %344 = vst [vmem:[%s4 + $0x14] sm:$0xf] %v328
    %345 = vst [vmem:[%s4 + $0x18] sm:$0xf] %v329
    %346 = vst [vmem:[%s4 + $0x1c] sm:$0xf] %v330
  $region25: #{pspnet_forward.17} parent=0 // pred_fallthru
    _
  // Predicated region
  $region26: #{pspnet_forward.17} parent=0 // pred_check
    _
  $region27: #{pspnet_forward.17} parent=0 // pred_check_branch
    %348 = sbr.rel (0) target = $region29
  $region28: #{pspnet_forward.17} parent=0 // pred_region
    _
  $region29: #{pspnet_forward.17} parent=0 // pred_fallthru
    _
  // Predicated region
  $region30: #{pspnet_forward.17} parent=0 // pred_check
    _
  $region31: #{pspnet_forward.17} parent=0 // pred_check_branch
    %350 = sbr.rel (0) target = $region33
  $region32: #{pspnet_forward.17} parent=0 // pred_region
    _
  $region33: #{pspnet_forward.17} parent=0 // pred_fallthru
    _

// kernel: pspnet_forward.16
$region0: #{pspnet_forward.16}
  #allocation0 [shape = 'u32[]', space=smem, size = 0x4, offset = 0x4, fixed_abs, tag = 'smem constant byte address 0x4 - core index']
  #allocation1 [shape = 'u32[144,128]{1,0:T(1,128)}', space=vmem, size = 0x12000, scoped, tag = 'internal scratch']
  #allocation2 [shape = 'f32[32,128]{1,0:T(8,128)}', space=vmem, size = 0x4000, scoped, tag = 'scratch operand']
  %s0 = inlined_call_operand.vmem [shape: bf16[32,144], index: 0, kind: input, shape index: {}]
  %s1 = inlined_call_operand.vmem [shape: bf16[144,128], index: 1, kind: input, shape index: {}]
  %s2 = inlined_call_operand.vmem [shape: f32[32,1], index: 2, kind: input, shape index: {}]
  %s3 = inlined_call_operand.vmem [shape: f32[32,1], index: 3, kind: input, shape index: {}]
  %s4 = inlined_call_operand.vmem [shape: bf16[32,128], index: 4, kind: output, shape index: {}]
  %s5 = sld [smem:[#allocation0]]
  $region34: #{pspnet_forward.16} parent=0
    _
  %s7 = ssub.s32 1, %s5
  %s8 = scalar_select 0, %s7, %s5
  // Predicated region
  $region2: #{pspnet_forward.16} parent=0 // pred_check
    _
  $region3: #{pspnet_forward.16} parent=0 // pred_check_branch
    %10 = sbr.rel (0) target = $region5
  $region4: #{pspnet_forward.16} parent=0 // pred_region
    _
  $region5: #{pspnet_forward.16} parent=0 // pred_fallthru
    _
  // Predicated region
  $region6: #{pspnet_forward.16} parent=0 // pred_check
    _
  $region7: #{pspnet_forward.16} parent=0 // pred_check_branch
    %12 = sbr.rel (0) target = $region9
  $region8: #{pspnet_forward.16} parent=0 // pred_region
    _
  $region9: #{pspnet_forward.16} parent=0 // pred_fallthru
    _
  // Predicated region
  $region10: #{pspnet_forward.16} parent=0 // pred_check
    _
  $region11: #{pspnet_forward.16} parent=0 // pred_check_branch
    %14 = sbr.rel (0) target = $region13
  $region12: #{pspnet_forward.16} parent=0 // pred_region
    _
  $region13: #{pspnet_forward.16} parent=0 // pred_fallthru
    _
  // Predicated region
  $region14: #{pspnet_forward.16} parent=0 // pred_check
    _
  $region15: #{pspnet_forward.16} parent=0 // pred_check_branch
    %16 = sbr.rel (0) target = $region17
  $region16: #{pspnet_forward.16} parent=0 // pred_region
    _
  $region17: #{pspnet_forward.16} parent=0 // pred_fallthru
    _
  %p18 = scmp.eq.s32.totalorder 0, 0
  // Predicated region
  $region18: #{pspnet_forward.16} parent=0 // pred_check
    %p19 = pneg %p18
  $region19: #{pspnet_forward.16} parent=0 // pred_check_branch
    %21 = sbr.rel (%p19) target = $region21
  $region20: #{pspnet_forward.16} parent=0 // pred_region
    %22 = vst [vmem:[#allocation2] sm:$0xff] 0.0
    %23 = vst [vmem:[#allocation2 + $0x8] sm:$0xff] 0.0
    %24 = vst [vmem:[#allocation2 + $0x10] sm:$0xff] 0.0
    %25 = vst [vmem:[#allocation2 + $0x18] sm:$0xff] 0.0
  $region21: #{pspnet_forward.16} parent=0 // pred_fallthru
    _
  %v26 = vld [vmem:[#allocation2] sm:$0xff]
  %v27 = vld [vmem:[#allocation2 + $0x8] sm:$0xff]
  %v28 = vld [vmem:[#allocation2 + $0x10] sm:$0xff]
  %v29 = vld [vmem:[#allocation2 + $0x18] sm:$0xff]
  %v30 = vld [vmem:[%s0] sm:$0xff]
  %v31 = vld [vmem:[%s0 + $0x8] sm:$0xff]
  %v32 = vld [vmem:[%s0 + $0x10] sm:$0xff]
  %v33 = vld [vmem:[%s0 + $0x18] sm:$0xff]
  %v34 = vld [vmem:[%s1] sm:$0xf]
  %v35 = vld [vmem:[%s1 + $0x4] sm:$0xf]
  %v36 = vld [vmem:[%s1 + $0x8] sm:$0xf]
  %v37 = vld [vmem:[%s1 + $0xc] sm:$0xf]
  %v38 = vld [vmem:[%s1 + $0x10] sm:$0xf]
  %v39 = vld [vmem:[%s1 + $0x14] sm:$0xf]
  %v40 = vld [vmem:[%s1 + $0x18] sm:$0xf]
  %v41 = vld [vmem:[%s1 + $0x1c] sm:$0xf]
  %v42 = vld [vmem:[%s1 + $0x20] sm:$0xf]
  %v43 = vld [vmem:[%s1 + $0x24] sm:$0xf]
  %v44 = vld [vmem:[%s1 + $0x28] sm:$0xf]
  %v45 = vld [vmem:[%s1 + $0x2c] sm:$0xf]
  %v46 = vld [vmem:[%s1 + $0x30] sm:$0xf]
  %v47 = vld [vmem:[%s1 + $0x34] sm:$0xf]
  %v48 = vld [vmem:[%s1 + $0x38] sm:$0xf]
  %v49 = vld [vmem:[%s1 + $0x3c] sm:$0xf]
  %v50 = vld [vmem:[%s1 + $0x40] sm:$0xf]
  %v51 = vld [vmem:[%s1 + $0x44] sm:$0xf]
  %v56 = vunpack.c.l.b16 %v30
  %v57 = vunpack.c.h.b16 %v30
  %v58 = vunpack.c.l.b16 %v31
  %v59 = vunpack.c.h.b16 %v31
  %v60 = vunpack.c.l.b16 %v32
  %v61 = vunpack.c.h.b16 %v32
  %v62 = vunpack.c.l.b16 %v33
  %v63 = vunpack.c.h.b16 %v33
  %v64 = vpack.c.b16 %v58, %v56
  %v65 = vpack.c.b16 %v59, %v57
  %v66 = vpack.c.b16 %v62, %v60
  %v67 = vpack.c.b16 %v63, %v61
  %v88 = vunpack.c.l.b16 %v34
  %v89 = vunpack.c.l.b16 %v35
  %v90 = vunpack.c.l.b16 %v36
  %v91 = vunpack.c.l.b16 %v37
  %v92 = vunpack.c.l.b16 %v38
  %v93 = vunpack.c.l.b16 %v39
  %v94 = vunpack.c.l.b16 %v40
  %v95 = vunpack.c.l.b16 %v41
  %v96 = vunpack.c.l.b16 %v42
  %v97 = vunpack.c.l.b16 %v43
  %v98 = vunpack.c.l.b16 %v44
  %v99 = vunpack.c.l.b16 %v45
  %v100 = vunpack.c.l.b16 %v46
  %v101 = vunpack.c.l.b16 %v47
  %v102 = vunpack.c.l.b16 %v48
  %v103 = vunpack.c.l.b16 %v49
  %v104 = vunpack.c.l.b16 %v50
  %v105 = vunpack.c.l.b16 %v51
  %v106 = vpack.c.b16 %v89, %v88
  %v107 = vpack.c.b16 %v91, %v90
  %v108 = vpack.c.b16 %v93, %v92
  %v109 = vpack.c.b16 %v95, %v94
  %v110 = vpack.c.b16 %v97, %v96
  %v111 = vpack.c.b16 %v99, %v98
  %v112 = vpack.c.b16 %v101, %v100
  %v113 = vpack.c.b16 %v103, %v102
  %v114 = vpack.c.b16 %v105, %v104
  %vm124 = vcmask 130048
  %v126 = vsel %vm124, %v65, 0
  %v129 = vsel %vm124, %v67, 0
  %131 = vmatprep.subr.bf16.mxu0 0
  %132 = vmatpush1.bf16.msra.mxu0 %v113
  %133 = vmatprep.subr.bf16.mxu0 0
  %134 = vmatpush1.bf16.msra.mxu0 %v112
  %135 = vmatprep.subr.bf16.mxu0 0
  %136 = vmatpush1.bf16.msra.mxu0 %v111
  %137 = vmatprep.subr.bf16.mxu0 0
  %138 = vmatpush1.bf16.msra.mxu0 %v110
  %139 = vmatprep.subr.bf16.mxu0 0
  %140 = vmatpush1.bf16.msra.mxu0 %v109
  %141 = vmatprep.subr.bf16.mxu0 0
  %142 = vmatpush1.bf16.msra.mxu0 %v108
  %143 = vmatprep.subr.bf16.mxu0 0
  %144 = vmatpush1.bf16.msra.mxu0 %v107
  %145 = vmatprep.subr.bf16.mxu0 0
  %146 = vmatpush1.bf16.msra.mxu0 %v106
  %147 = vmatprep.subr.bf16.mxu0 0
  %148 = vmatpush2.bf16.msra.mxu0 0
  %149 = vmatprep.subr.bf16.mxu0 0
  %150 = vmatpush2.bf16.msra.mxu0 0
  %151 = vmatprep.subr.bf16.mxu0 0
  %152 = vmatpush2.bf16.msra.mxu0 0
  %153 = vmatprep.subr.bf16.mxu0 0
  %154 = vmatpush2.bf16.msra.mxu0 0
  %155 = vmatprep.subr.bf16.mxu0 0
  %156 = vmatpush2.bf16.msra.mxu0 0
  %157 = vmatprep.subr.bf16.mxu0 0
  %158 = vmatpush2.bf16.msra.mxu0 0
  %159 = vmatprep.subr.bf16.mxu0 0
  %160 = vmatpush2.bf16.msra.mxu0 0
  %161 = vmatprep.subr.bf16.mxu0 0
  %162 = vmatpush2.bf16.msra.mxu0 %v114
  %163 = vmatprep.mubr.bf16.mxu0 %v126
  %164 = vmatmul.mubr.bf16.gmra.mxu0 %v64
  %v165 = vpop.f32.mrf.mxu0
  %v166 = vadd.f32 0.0, %v165
  %v167 = vpop.f32.mrf.mxu0
  %v168 = vpop.f32.mrf.mxu0
  %v169 = vadd.f32 0.0, %v168
  %v170 = vpop.f32.mrf.mxu0
  %171 = vmatprep.mubr.bf16.mxu0 %v129
  %172 = vmatmul.mubr.bf16.gmra.mxu0 %v66
  %v173 = vpop.f32.mrf.mxu0
  %v174 = vadd.f32 0.0, %v173
  %v175 = vpop.f32.mrf.mxu0
  %v176 = vpop.f32.mrf.mxu0
  %v177 = vadd.f32 0.0, %v176
  %v178 = vpop.f32.mrf.mxu0
  %179 = vdwg.mxu0
  %v180 = vadd.f32 %v26, %v166
  %v181 = vadd.f32 %v27, %v169
  %v182 = vadd.f32 %v28, %v174
  %v183 = vadd.f32 %v29, %v177
  %184 = vst [vmem:[#allocation2] sm:$0xff] %v180
  %185 = vst [vmem:[#allocation2 + $0x8] sm:$0xff] %v181
  %186 = vst [vmem:[#allocation2 + $0x10] sm:$0xff] %v182
  %187 = vst [vmem:[#allocation2 + $0x18] sm:$0xff] %v183
  // Predicated region
  $region22: #{pspnet_forward.16} parent=0 // pred_check
    %p188 = pneg %p18
  $region23: #{pspnet_forward.16} parent=0 // pred_check_branch
    %190 = sbr.rel (%p188) target = $region25
  $region24: #{pspnet_forward.16} parent=0 // pred_region
    %v191 = vld [vmem:[#allocation2] sm:$0xff]
    %v192 = vld [vmem:[#allocation2 + $0x8] sm:$0xff]
    %v193 = vld [vmem:[#allocation2 + $0x10] sm:$0xff]
    %v194 = vld [vmem:[#allocation2 + $0x18] sm:$0xff]
    %v195 = vld [vmem:[%s2] sm:$0xff]
    %v196 = vld [vmem:[%s2 + $0x8] sm:$0xff]
    %v197 = vld [vmem:[%s2 + $0x10] sm:$0xff]
    %v198 = vld [vmem:[%s2 + $0x18] sm:$0xff]
    %200 = vset.pattern.permute.xlu0 0
    %201 = vperm.xlu0 %200, %v195
    %v202 = vpop.permute.xlu0 %201
    %205 = vset.pattern.permute.xlu0 0
    %206 = vperm.xlu0 %205, %v196
    %v207 = vpop.permute.xlu0 %206
    %210 = vset.pattern.permute.xlu0 0
    %211 = vperm.xlu0 %210, %v197
    %v212 = vpop.permute.xlu0 %211
    %215 = vset.pattern.permute.xlu0 0
    %216 = vperm.xlu0 %215, %v198
    %v217 = vpop.permute.xlu0 %216
    %v219 = vmul.f32 %v191, %v202
    %v220 = vmul.f32 %v192, %v207
    %v221 = vmul.f32 %v193, %v212
    %v222 = vmul.f32 %v194, %v217
    %v223 = vld [vmem:[%s3] sm:$0xff]
    %v224 = vld [vmem:[%s3 + $0x8] sm:$0xff]
    %v225 = vld [vmem:[%s3 + $0x10] sm:$0xff]
    %v226 = vld [vmem:[%s3 + $0x18] sm:$0xff]
    %228 = vset.pattern.permute.xlu0 0
    %229 = vperm.xlu0 %228, %v223
    %v230 = vpop.permute.xlu0 %229
    %233 = vset.pattern.permute.xlu0 0
    %234 = vperm.xlu0 %233, %v224
    %v235 = vpop.permute.xlu0 %234
    %238 = vset.pattern.permute.xlu0 0
    %239 = vperm.xlu0 %238, %v225
    %v240 = vpop.permute.xlu0 %239
    %243 = vset.pattern.permute.xlu0 0
    %244 = vperm.xlu0 %243, %v226
    %v245 = vpop.permute.xlu0 %244
    %v247 = vadd.f32 %v219, %v230
    %v248 = vadd.f32 %v220, %v235
    %v249 = vadd.f32 %v221, %v240
    %v250 = vadd.f32 %v222, %v245
    %v251 = vmax.f32 %v247, 0.0
    %v252 = vmax.f32 %v248, 0.0
    %v253 = vmax.f32 %v249, 0.0
    %v254 = vmax.f32 %v250, 0.0
    %v255 = vpack.c.bf16 %v252, %v251
    %v256 = vpack.c.bf16 %v254, %v253
    %v259 = vunpack.c.l.b16 %v255
    %v260 = vunpack.c.h.b16 %v255
    %v261 = vunpack.c.l.b16 %v256
    %v262 = vunpack.c.h.b16 %v256
    %v263 = vpack.c.b16 %v259, %v259
    %v264 = vpack.c.b16 %v260, %v260
    %v265 = vpack.c.b16 %v261, %v261
    %v266 = vpack.c.b16 %v262, %v262
    %271 = vst [vmem:[%s4] sm:$0xf] %v263
    %272 = vst [vmem:[%s4 + $0x4] sm:$0xf] %v264
    %273 = vst [vmem:[%s4 + $0x8] sm:$0xf] %v265
    %274 = vst [vmem:[%s4 + $0xc] sm:$0xf] %v266
  $region25: #{pspnet_forward.16} parent=0 // pred_fallthru
    _
  // Predicated region
  $region26: #{pspnet_forward.16} parent=0 // pred_check
    _
  $region27: #{pspnet_forward.16} parent=0 // pred_check_branch
    %276 = sbr.rel (0) target = $region29
  $region28: #{pspnet_forward.16} parent=0 // pred_region
    _
  $region29: #{pspnet_forward.16} parent=0 // pred_fallthru
    _
  // Predicated region
  $region30: #{pspnet_forward.16} parent=0 // pred_check
    _
  $region31: #{pspnet_forward.16} parent=0 // pred_check_branch
    %278 = sbr.rel (0) target = $region33
  $region32: #{pspnet_forward.16} parent=0 // pred_region
    _
  $region33: #{pspnet_forward.16} parent=0 // pred_fallthru
    _

// kernel: pspnet_forward.18
$region0: #{pspnet_forward.18}
  #allocation0 [shape = 'u32[]', space=smem, size = 0x4, offset = 0x4, fixed_abs, tag = 'smem constant byte address 0x4 - core index']
  #allocation1 [shape = 'u32[144,128]{1,0:T(1,128)}', space=vmem, size = 0x12000, scoped, tag = 'internal scratch']
  #allocation2 [shape = 'f32[32,128]{1,0:T(8,128)}', space=vmem, size = 0x4000, scoped, tag = 'scratch operand']
  %s0 = inlined_call_operand.vmem [shape: bf16[32,32], index: 0, kind: input, shape index: {}]
  %s1 = inlined_call_operand.vmem [shape: bf16[32,128], index: 1, kind: input, shape index: {}]
  %s2 = inlined_call_operand.vmem [shape: f32[32,1], index: 2, kind: input, shape index: {}]
  %s3 = inlined_call_operand.vmem [shape: f32[32,1], index: 3, kind: input, shape index: {}]
  %s4 = inlined_call_operand.vmem [shape: bf16[32,128], index: 4, kind: output, shape index: {}]
  %s5 = sld [smem:[#allocation0]]
  $region34: #{pspnet_forward.18} parent=0
    _
  %s7 = ssub.s32 1, %s5
  %s8 = scalar_select 0, %s7, %s5
  // Predicated region
  $region2: #{pspnet_forward.18} parent=0 // pred_check
    _
  $region3: #{pspnet_forward.18} parent=0 // pred_check_branch
    %10 = sbr.rel (0) target = $region5
  $region4: #{pspnet_forward.18} parent=0 // pred_region
    _
  $region5: #{pspnet_forward.18} parent=0 // pred_fallthru
    _
  // Predicated region
  $region6: #{pspnet_forward.18} parent=0 // pred_check
    _
  $region7: #{pspnet_forward.18} parent=0 // pred_check_branch
    %12 = sbr.rel (0) target = $region9
  $region8: #{pspnet_forward.18} parent=0 // pred_region
    _
  $region9: #{pspnet_forward.18} parent=0 // pred_fallthru
    _
  // Predicated region
  $region10: #{pspnet_forward.18} parent=0 // pred_check
    _
  $region11: #{pspnet_forward.18} parent=0 // pred_check_branch
    %14 = sbr.rel (0) target = $region13
  $region12: #{pspnet_forward.18} parent=0 // pred_region
    _
  $region13: #{pspnet_forward.18} parent=0 // pred_fallthru
    _
  // Predicated region
  $region14: #{pspnet_forward.18} parent=0 // pred_check
    _
  $region15: #{pspnet_forward.18} parent=0 // pred_check_branch
    %16 = sbr.rel (0) target = $region17
  $region16: #{pspnet_forward.18} parent=0 // pred_region
    _
  $region17: #{pspnet_forward.18} parent=0 // pred_fallthru
    _
  %p18 = scmp.eq.s32.totalorder 0, 0
  // Predicated region
  $region18: #{pspnet_forward.18} parent=0 // pred_check
    %p19 = pneg %p18
  $region19: #{pspnet_forward.18} parent=0 // pred_check_branch
    %21 = sbr.rel (%p19) target = $region21
  $region20: #{pspnet_forward.18} parent=0 // pred_region
    %22 = vst [vmem:[#allocation2] sm:$0xff] 0.0
    %23 = vst [vmem:[#allocation2 + $0x8] sm:$0xff] 0.0
    %24 = vst [vmem:[#allocation2 + $0x10] sm:$0xff] 0.0
    %25 = vst [vmem:[#allocation2 + $0x18] sm:$0xff] 0.0
  $region21: #{pspnet_forward.18} parent=0 // pred_fallthru
    _
  %v26 = vld [vmem:[#allocation2] sm:$0xff]
  %v27 = vld [vmem:[#allocation2 + $0x8] sm:$0xff]
  %v28 = vld [vmem:[#allocation2 + $0x10] sm:$0xff]
  %v29 = vld [vmem:[#allocation2 + $0x18] sm:$0xff]
  %v30 = vld [vmem:[%s0] sm:$0xf]
  %v31 = vld [vmem:[%s0 + $0x4] sm:$0xf]
  %v32 = vld [vmem:[%s0 + $0x8] sm:$0xf]
  %v33 = vld [vmem:[%s0 + $0xc] sm:$0xf]
  %v34 = vld [vmem:[%s1] sm:$0xf]
  %v35 = vld [vmem:[%s1 + $0x4] sm:$0xf]
  %v36 = vld [vmem:[%s1 + $0x8] sm:$0xf]
  %v37 = vld [vmem:[%s1 + $0xc] sm:$0xf]
  %v42 = vunpack.c.l.b16 %v30
  %v43 = vunpack.c.l.b16 %v31
  %v44 = vunpack.c.l.b16 %v32
  %v45 = vunpack.c.l.b16 %v33
  %v46 = vpack.c.b16 %v43, %v42
  %v47 = vpack.c.b16 %v45, %v44
  %v52 = vunpack.c.l.b16 %v34
  %v53 = vunpack.c.l.b16 %v35
  %v54 = vunpack.c.l.b16 %v36
  %v55 = vunpack.c.l.b16 %v37
  %v56 = vpack.c.b16 %v53, %v52
  %v57 = vpack.c.b16 %v55, %v54
  %vm60 = vcmask 261120
  %v62 = vsel %vm60, %v46, 0
  %v65 = vsel %vm60, %v47, 0
  %67 = vmatprep.subr.bf16.mxu0 0
  %68 = vmatpush1.bf16.msra.mxu0 0
  %69 = vmatprep.subr.bf16.mxu0 0
  %70 = vmatpush1.bf16.msra.mxu0 0
  %71 = vmatprep.subr.bf16.mxu0 0
  %72 = vmatpush1.bf16.msra.mxu0 0
  %73 = vmatprep.subr.bf16.mxu0 0
  %74 = vmatpush1.bf16.msra.mxu0 0
  %75 = vmatprep.subr.bf16.mxu0 0
  %76 = vmatpush1.bf16.msra.mxu0 0
  %77 = vmatprep.subr.bf16.mxu0 0
  %78 = vmatpush1.bf16.msra.mxu0 0
  %79 = vmatprep.subr.bf16.mxu0 0
  %80 = vmatpush1.bf16.msra.mxu0 %v57
  %81 = vmatprep.subr.bf16.mxu0 0
  %82 = vmatpush1.bf16.msra.mxu0 %v56
  %83 = vmatprep.subr.bf16.mxu0 0
  %84 = vmatpush2.bf16.msra.mxu0 0
  %85 = vmatprep.subr.bf16.mxu0 0
  %86 = vmatpush2.bf16.msra.mxu0 0
  %87 = vmatprep.subr.bf16.mxu0 0
  %88 = vmatpush2.bf16.msra.mxu0 0
  %89 = vmatprep.subr.bf16.mxu0 0
  %90 = vmatpush2.bf16.msra.mxu0 0
  %91 = vmatprep.subr.bf16.mxu0 0
  %92 = vmatpush2.bf16.msra.mxu0 0
  %93 = vmatprep.subr.bf16.mxu0 0
  %94 = vmatpush2.bf16.msra.mxu0 0
  %95 = vmatprep.subr.bf16.mxu0 0
  %96 = vmatpush2.bf16.msra.mxu0 0
  %97 = vmatprep.subr.bf16.mxu0 0
  %98 = vmatpush2.bf16.msra.mxu0 0
  %99 = vmatprep.mubr.bf16.mxu0 0
  %100 = vmatmul.mubr.bf16.gmra.mxu0 %v62
  %v101 = vpop.f32.mrf.mxu0
  %v102 = vadd.f32 0.0, %v101
  %v103 = vpop.f32.mrf.mxu0
  %v104 = vpop.f32.mrf.mxu0
  %v105 = vadd.f32 0.0, %v104
  %v106 = vpop.f32.mrf.mxu0
  %107 = vmatprep.mubr.bf16.mxu0 0
  %108 = vmatmul.mubr.bf16.gmra.mxu0 %v65
  %v109 = vpop.f32.mrf.mxu0
  %v110 = vadd.f32 0.0, %v109
  %v111 = vpop.f32.mrf.mxu0
  %v112 = vpop.f32.mrf.mxu0
  %v113 = vadd.f32 0.0, %v112
  %v114 = vpop.f32.mrf.mxu0
  %115 = vdwg.mxu0
  %v116 = vadd.f32 %v26, %v102
  %v117 = vadd.f32 %v27, %v105
  %v118 = vadd.f32 %v28, %v110
  %v119 = vadd.f32 %v29, %v113
  %120 = vst [vmem:[#allocation2] sm:$0xff] %v116
  %121 = vst [vmem:[#allocation2 + $0x8] sm:$0xff] %v117
  %122 = vst [vmem:[#allocation2 + $0x10] sm:$0xff] %v118
  %123 = vst [vmem:[#allocation2 + $0x18] sm:$0xff] %v119
  // Predicated region
  $region22: #{pspnet_forward.18} parent=0 // pred_check
    %p124 = pneg %p18
  $region23: #{pspnet_forward.18} parent=0 // pred_check_branch
    %126 = sbr.rel (%p124) target = $region25
  $region24: #{pspnet_forward.18} parent=0 // pred_region
    %v127 = vld [vmem:[#allocation2] sm:$0xff]
    %v128 = vld [vmem:[#allocation2 + $0x8] sm:$0xff]
    %v129 = vld [vmem:[#allocation2 + $0x10] sm:$0xff]
    %v130 = vld [vmem:[#allocation2 + $0x18] sm:$0xff]
    %v131 = vld [vmem:[%s2] sm:$0xff]
    %v132 = vld [vmem:[%s2 + $0x8] sm:$0xff]
    %v133 = vld [vmem:[%s2 + $0x10] sm:$0xff]
    %v134 = vld [vmem:[%s2 + $0x18] sm:$0xff]
    %136 = vset.pattern.permute.xlu0 0
    %137 = vperm.xlu0 %136, %v131
    %v138 = vpop.permute.xlu0 %137
    %141 = vset.pattern.permute.xlu0 0
    %142 = vperm.xlu0 %141, %v132
    %v143 = vpop.permute.xlu0 %142
    %146 = vset.pattern.permute.xlu0 0
    %147 = vperm.xlu0 %146, %v133
    %v148 = vpop.permute.xlu0 %147
    %151 = vset.pattern.permute.xlu0 0
    %152 = vperm.xlu0 %151, %v134
    %v153 = vpop.permute.xlu0 %152
    %v155 = vmul.f32 %v127, %v138
    %v156 = vmul.f32 %v128, %v143
    %v157 = vmul.f32 %v129, %v148
    %v158 = vmul.f32 %v130, %v153
    %v159 = vld [vmem:[%s3] sm:$0xff]
    %v160 = vld [vmem:[%s3 + $0x8] sm:$0xff]
    %v161 = vld [vmem:[%s3 + $0x10] sm:$0xff]
    %v162 = vld [vmem:[%s3 + $0x18] sm:$0xff]
    %164 = vset.pattern.permute.xlu0 0
    %165 = vperm.xlu0 %164, %v159
    %v166 = vpop.permute.xlu0 %165
    %169 = vset.pattern.permute.xlu0 0
    %170 = vperm.xlu0 %169, %v160
    %v171 = vpop.permute.xlu0 %170
    %174 = vset.pattern.permute.xlu0 0
    %175 = vperm.xlu0 %174, %v161
    %v176 = vpop.permute.xlu0 %175
    %179 = vset.pattern.permute.xlu0 0
    %180 = vperm.xlu0 %179, %v162
    %v181 = vpop.permute.xlu0 %180
    %v183 = vadd.f32 %v155, %v166
    %v184 = vadd.f32 %v156, %v171
    %v185 = vadd.f32 %v157, %v176
    %v186 = vadd.f32 %v158, %v181
    %v187 = vmax.f32 %v183, 0.0
    %v188 = vmax.f32 %v184, 0.0
    %v189 = vmax.f32 %v185, 0.0
    %v190 = vmax.f32 %v186, 0.0
    %v191 = vpack.c.bf16 %v188, %v187
    %v192 = vpack.c.bf16 %v190, %v189
    %v195 = vunpack.c.l.b16 %v191
    %v196 = vunpack.c.h.b16 %v191
    %v197 = vunpack.c.l.b16 %v192
    %v198 = vunpack.c.h.b16 %v192
    %v199 = vpack.c.b16 %v195, %v195
    %v200 = vpack.c.b16 %v196, %v196
    %v201 = vpack.c.b16 %v197, %v197
    %v202 = vpack.c.b16 %v198, %v198
    %207 = vst [vmem:[%s4] sm:$0xf] %v199
    %208 = vst [vmem:[%s4 + $0x4] sm:$0xf] %v200
    %209 = vst [vmem:[%s4 + $0x8] sm:$0xf] %v201
    %210 = vst [vmem:[%s4 + $0xc] sm:$0xf] %v202
  $region25: #{pspnet_forward.18} parent=0 // pred_fallthru
    _
  // Predicated region
  $region26: #{pspnet_forward.18} parent=0 // pred_check
    _
  $region27: #{pspnet_forward.18} parent=0 // pred_check_branch
    %212 = sbr.rel (0) target = $region29
  $region28: #{pspnet_forward.18} parent=0 // pred_region
    _
  $region29: #{pspnet_forward.18} parent=0 // pred_fallthru
    _
  // Predicated region
  $region30: #{pspnet_forward.18} parent=0 // pred_check
    _
  $region31: #{pspnet_forward.18} parent=0 // pred_check_branch
    %214 = sbr.rel (0) target = $region33
  $region32: #{pspnet_forward.18} parent=0 // pred_region
    _
  $region33: #{pspnet_forward.18} parent=0 // pred_fallthru
    _

// kernel: pspnet_forward.19
$region0: #{pspnet_forward.19}
  #allocation0 [shape = 'u32[]', space=smem, size = 0x4, offset = 0x4, fixed_abs, tag = 'smem constant byte address 0x4 - core index']
  #allocation1 [shape = 'u32[144,128]{1,0:T(1,128)}', space=vmem, size = 0x12000, scoped, tag = 'internal scratch']
  #allocation2 [shape = 'f32[16,256]{1,0:T(8,128)}', space=vmem, size = 0x4000, scoped, tag = 'scratch operand']
  %s0 = inlined_call_operand.vmem [shape: bf16[16,50], index: 0, kind: input, shape index: {}]
  %s1 = inlined_call_operand.vmem [shape: bf16[50,256], index: 1, kind: input, shape index: {}]
  %s2 = inlined_call_operand.vmem [shape: f32[16,1], index: 2, kind: input, shape index: {}]
  %s3 = inlined_call_operand.vmem [shape: f32[16,1], index: 3, kind: input, shape index: {}]
  %s4 = inlined_call_operand.vmem [shape: bf16[16,256], index: 4, kind: output, shape index: {}]
  %s5 = sld [smem:[#allocation0]]
  $region34: #{pspnet_forward.19} parent=0
    _
  %s7 = ssub.s32 1, %s5
  %s8 = scalar_select 0, %s7, %s5
  // Predicated region
  $region2: #{pspnet_forward.19} parent=0 // pred_check
    _
  $region3: #{pspnet_forward.19} parent=0 // pred_check_branch
    %10 = sbr.rel (0) target = $region5
  $region4: #{pspnet_forward.19} parent=0 // pred_region
    _
  $region5: #{pspnet_forward.19} parent=0 // pred_fallthru
    _
  // Predicated region
  $region6: #{pspnet_forward.19} parent=0 // pred_check
    _
  $region7: #{pspnet_forward.19} parent=0 // pred_check_branch
    %12 = sbr.rel (0) target = $region9
  $region8: #{pspnet_forward.19} parent=0 // pred_region
    _
  $region9: #{pspnet_forward.19} parent=0 // pred_fallthru
    _
  // Predicated region
  $region10: #{pspnet_forward.19} parent=0 // pred_check
    _
  $region11: #{pspnet_forward.19} parent=0 // pred_check_branch
    %14 = sbr.rel (0) target = $region13
  $region12: #{pspnet_forward.19} parent=0 // pred_region
    _
  $region13: #{pspnet_forward.19} parent=0 // pred_fallthru
    _
  // Predicated region
  $region14: #{pspnet_forward.19} parent=0 // pred_check
    _
  $region15: #{pspnet_forward.19} parent=0 // pred_check_branch
    %16 = sbr.rel (0) target = $region17
  $region16: #{pspnet_forward.19} parent=0 // pred_region
    _
  $region17: #{pspnet_forward.19} parent=0 // pred_fallthru
    _
  %p18 = scmp.eq.s32.totalorder 0, 0
  // Predicated region
  $region18: #{pspnet_forward.19} parent=0 // pred_check
    %p19 = pneg %p18
  $region19: #{pspnet_forward.19} parent=0 // pred_check_branch
    %21 = sbr.rel (%p19) target = $region21
  $region20: #{pspnet_forward.19} parent=0 // pred_region
    %22 = vst [vmem:[#allocation2] sm:$0xff] 0.0
    %23 = vst [vmem:[#allocation2 + $0x8] sm:$0xff] 0.0
    %24 = vst [vmem:[#allocation2 + $0x10] sm:$0xff] 0.0
    %25 = vst [vmem:[#allocation2 + $0x18] sm:$0xff] 0.0
  $region21: #{pspnet_forward.19} parent=0 // pred_fallthru
    _
  %v26 = vld [vmem:[#allocation2] sm:$0xff]
  %v27 = vld [vmem:[#allocation2 + $0x8] sm:$0xff]
  %v28 = vld [vmem:[#allocation2 + $0x10] sm:$0xff]
  %v29 = vld [vmem:[#allocation2 + $0x18] sm:$0xff]
  %v30 = vld [vmem:[%s0] sm:$0xf]
  %v31 = vld [vmem:[%s0 + $0x4] sm:$0xf]
  %v32 = vld [vmem:[%s1] sm:$0xff]
  %v33 = vld [vmem:[%s1 + $0x8] sm:$0xff]
  %v34 = vld [vmem:[%s1 + $0x10] sm:$0xff]
  %v35 = vld [vmem:[%s1 + $0x18] sm:$0xff]
  %v36 = vld [vmem:[%s1 + $0x20] sm:$0xff]
  %v37 = vld [vmem:[%s1 + $0x28] sm:$0xff]
  %v38 = vld [vmem:[%s1 + $0x30] sm:$0x11]
  %v41 = vunpack.c.l.b16 %v30
  %v42 = vunpack.c.l.b16 %v31
  %v43 = vpack.c.b16 %v42, %v41
  %v51 = vunpack.c.l.b16 %v32
  %v52 = vunpack.c.h.b16 %v32
  %v53 = vunpack.c.l.b16 %v33
  %v54 = vunpack.c.h.b16 %v33
  %v55 = vunpack.c.l.b16 %v34
  %v56 = vunpack.c.h.b16 %v34
  %v57 = vunpack.c.l.b16 %v35
  %v58 = vunpack.c.h.b16 %v35
  %v59 = vunpack.c.l.b16 %v36
  %v60 = vunpack.c.h.b16 %v36
  %v61 = vunpack.c.l.b16 %v37
  %v62 = vunpack.c.h.b16 %v37
  %v63 = vunpack.c.l.b16 %v38
  %v64 = vunpack.c.h.b16 %v38
  %v65 = vpack.c.b16 %v53, %v51
  %v66 = vpack.c.b16 %v54, %v52
  %v67 = vpack.c.b16 %v57, %v55
  %v68 = vpack.c.b16 %v58, %v56
  %v69 = vpack.c.b16 %v61, %v59
  %v70 = vpack.c.b16 %v62, %v60
  %v71 = vpack.c.b16 %v63, %v63
  %v72 = vpack.c.b16 %v64, %v64
  %vm79 = vcmask 408576
  %v81 = vsel %vm79, %v43, 0
  %vm83 = vcmask 1040384
  %v85 = vsel %vm83, %v71, 0
  %v88 = vsel %vm83, %v72, 0
  %90 = vmatprep.subr.bf16.mxu0 0
  %91 = vmatpush1.bf16.msra.mxu0 0
  %92 = vmatprep.subr.bf16.mxu0 0
  %93 = vmatpush1.bf16.msra.mxu0 0
  %94 = vmatprep.subr.bf16.mxu0 0
  %95 = vmatpush1.bf16.msra.mxu0 0
  %96 = vmatprep.subr.bf16.mxu0 0
  %97 = vmatpush1.bf16.msra.mxu0 0
  %98 = vmatprep.subr.bf16.mxu0 %v88
  %99 = vmatpush1.bf16.msra.mxu0 %v85
  %100 = vmatprep.subr.bf16.mxu0 %v70
  %101 = vmatpush1.bf16.msra.mxu0 %v69
  %102 = vmatprep.subr.bf16.mxu0 %v68
  %103 = vmatpush1.bf16.msra.mxu0 %v67
  %104 = vmatprep.subr.bf16.mxu0 %v66
  %105 = vmatpush1.bf16.msra.mxu0 %v65
  %106 = vmatprep.subr.bf16.mxu0 0
  %107 = vmatpush2.bf16.msra.mxu0 0
  %108 = vmatprep.subr.bf16.mxu0 0
  %109 = vmatpush2.bf16.msra.mxu0 0
  %110 = vmatprep.subr.bf16.mxu0 0
  %111 = vmatpush2.bf16.msra.mxu0 0
  %112 = vmatprep.subr.bf16.mxu0 0
  %113 = vmatpush2.bf16.msra.mxu0 0
  %114 = vmatprep.subr.bf16.mxu0 0
  %115 = vmatpush2.bf16.msra.mxu0 0
  %116 = vmatprep.subr.bf16.mxu0 0
  %117 = vmatpush2.bf16.msra.mxu0 0
  %118 = vmatprep.subr.bf16.mxu0 0
  %119 = vmatpush2.bf16.msra.mxu0 0
  %120 = vmatprep.subr.bf16.mxu0 0
  %121 = vmatpush2.bf16.msra.mxu0 0
  %122 = vmatprep.mubr.bf16.mxu0 0
  %123 = vmatmul.mubr.bf16.gmra.mxu0 %v81
  %v124 = vpop.f32.mrf.mxu0
  %v125 = vadd.f32 0.0, %v124
  %v126 = vpop.f32.mrf.mxu0
  %v127 = vadd.f32 0.0, %v126
  %v128 = vpop.f32.mrf.mxu0
  %v129 = vadd.f32 0.0, %v128
  %v130 = vpop.f32.mrf.mxu0
  %v131 = vadd.f32 0.0, %v130
  %132 = vdwg.mxu0
  %v133 = vadd.f32 %v26, %v125
  %v134 = vadd.f32 %v27, %v127
  %v135 = vadd.f32 %v28, %v129
  %v136 = vadd.f32 %v29, %v131
  %137 = vst [vmem:[#allocation2] sm:$0xff] %v133
  %138 = vst [vmem:[#allocation2 + $0x8] sm:$0xff] %v134
  %139 = vst [vmem:[#allocation2 + $0x10] sm:$0xff] %v135
  %140 = vst [vmem:[#allocation2 + $0x18] sm:$0xff] %v136
  // Predicated region
  $region22: #{pspnet_forward.19} parent=0 // pred_check
    %p141 = pneg %p18
  $region23: #{pspnet_forward.19} parent=0 // pred_check_branch
    %143 = sbr.rel (%p141) target = $region25
  $region24: #{pspnet_forward.19} parent=0 // pred_region
    %v144 = vld [vmem:[#allocation2] sm:$0xff]
    %v145 = vld [vmem:[#allocation2 + $0x8] sm:$0xff]
    %v146 = vld [vmem:[#allocation2 + $0x10] sm:$0xff]
    %v147 = vld [vmem:[#allocation2 + $0x18] sm:$0xff]
    %v148 = vld [vmem:[%s2] sm:$0xff]
    %v149 = vld [vmem:[%s2 + $0x8] sm:$0xff]
    %151 = vset.pattern.permute.xlu0 0
    %152 = vperm.xlu0 %151, %v148
    %v153 = vpop.permute.xlu0 %152
    %156 = vset.pattern.permute.xlu0 0
    %157 = vperm.xlu0 %156, %v149
    %v158 = vpop.permute.xlu0 %157
    %v160 = vmul.f32 %v144, %v153
    %v161 = vmul.f32 %v145, %v153
    %v162 = vmul.f32 %v146, %v158
    %v163 = vmul.f32 %v147, %v158
    %v164 = vld [vmem:[%s3] sm:$0xff]
    %v165 = vld [vmem:[%s3 + $0x8] sm:$0xff]
    %167 = vset.pattern.permute.xlu0 0
    %168 = vperm.xlu0 %167, %v164
    %v169 = vpop.permute.xlu0 %168
    %172 = vset.pattern.permute.xlu0 0
    %173 = vperm.xlu0 %172, %v165
    %v174 = vpop.permute.xlu0 %173
    %v176 = vadd.f32 %v160, %v169
    %v177 = vadd.f32 %v161, %v169
    %v178 = vadd.f32 %v162, %v174
    %v179 = vadd.f32 %v163, %v174
    %v180 = vpack.c.bf16 %v178, %v176
    %v181 = vpack.c.bf16 %v179, %v177
    %v184 = vunpack.c.l.b16 %v180
    %v185 = vunpack.c.l.b16 %v181
    %v186 = vunpack.c.h.b16 %v180
    %v187 = vunpack.c.h.b16 %v181
    %v188 = vpack.c.b16 %v185, %v184
    %v189 = vpack.c.b16 %v187, %v186
    %192 = vst [vmem:[%s4] sm:$0xff] %v188
    %193 = vst [vmem:[%s4 + $0x8] sm:$0xff] %v189
  $region25: #{pspnet_forward.19} parent=0 // pred_fallthru
    _
  // Predicated region
  $region26: #{pspnet_forward.19} parent=0 // pred_check
    _
  $region27: #{pspnet_forward.19} parent=0 // pred_check_branch
    %195 = sbr.rel (0) target = $region29
  $region28: #{pspnet_forward.19} parent=0 // pred_region
    _
  $region29: #{pspnet_forward.19} parent=0 // pred_fallthru
    _
  // Predicated region
  $region30: #{pspnet_forward.19} parent=0 // pred_check
    _
  $region31: #{pspnet_forward.19} parent=0 // pred_check_branch
    %197 = sbr.rel (0) target = $region33
  $region32: #{pspnet_forward.19} parent=0 // pred_region
    _
  $region33: #{pspnet_forward.19} parent=0 // pred_fallthru
    _

// kernel: pspnet_forward.20
$region0: #{pspnet_forward.20}
  #allocation0 [shape = 'u32[]', space=smem, size = 0x4, offset = 0x4, fixed_abs, tag = 'smem constant byte address 0x4 - core index']
  #allocation1 [shape = 'u32[144,128]{1,0:T(1,128)}', space=vmem, size = 0x12000, scoped, tag = 'internal scratch']
  #allocation2 [shape = 'f32[8,128]{1,0:T(8,128)}', space=vmem, size = 0x1000, scoped, tag = 'scratch operand']
  %s0 = inlined_call_operand.vmem [shape: bf16[8,1024], index: 0, kind: input, shape index: {}]
  %s1 = inlined_call_operand.vmem [shape: bf16[1024,128], index: 1, kind: input, shape index: {}]
  %s2 = inlined_call_operand.vmem [shape: f32[8,1], index: 2, kind: input, shape index: {}]
  %s3 = inlined_call_operand.vmem [shape: f32[8,1], index: 3, kind: input, shape index: {}]
  %s4 = inlined_call_operand.vmem [shape: bf16[8,128], index: 4, kind: output, shape index: {}]
  %s5 = sld [smem:[#allocation0]]
  $region57: #{pspnet_forward.20} parent=0
    _
  %s7 = ssub.s32 1, %s5
  %s8 = scalar_select 0, %s7, %s5
  loop: start=0, step=1, limit=4
  $region2: #{pspnet_forward.20} parent=0 // loop_pre_header
    _
  $region3: #{pspnet_forward.20} parent=0 // loop_header
    %s10 = sphi 0, %s14
    %p11 = scmp.ge.s32.totalorder %s10, 4
    %s17 = sphi 0, %s29
    %s18 = sphi 0, %s25
    %s19 = sphi 0, %s17
    %s20 = sphi 0, %s18
    %s21 = sphi 0, %s19
    %s22 = sphi 0, %s20
    %s32 = sphi 0, %s34
    %s35 = sphi 0, %s32
    %s36 = sphi 0, %s35
    %s52 = sphi 0, %s36
    %s60 = sphi 0, %s62
    %s63 = sphi 0, %s60
    %s64 = sphi 0, %s63
    %s80 = sphi 0, %s64
    %s84 = sphi 0, %s84
    %s86 = sphi 0, %s84
    %s87 = sphi 0, %s86
    %s101 = sphi 0, %s87
    %s105 = sphi 0, %s105
    %s107 = sphi 0, %s105
    %s108 = sphi 0, %s107
    %s122 = sphi 0, %s108
    %s128 = sphi 0, %s130
    %s131 = sphi 0, %s128
    %s132 = sphi 0, %s131
    %s148 = sphi 0, %s132
  $region4: #{pspnet_forward.20} parent=0 // loop_header_branch
    %13 = sbr.rel (%p11) target = $region8
  $region5: #{pspnet_forward.20} parent=0 // loop_body
    %s15 = ssub.s32 %s10, 1
    %s16 = ssub.s32 %s10, 2
    %s23 = sadd.s32 1, %s18
    %p24 = scmp.ge.s32.totalorder %s23, 2
    %s25 = scalar_select %p24, 0, %s23
    %s26 = sadd.s32 1, %s17
    %s27 = scalar_select %p24, %s26, %s17
    %p28 = scmp.ge.s32.totalorder %s27, 1
    %s29 = scalar_select %p28, 0, %s27
    %s30 = ssub.s32 %s18, %s25
    %p31 = scmp.eq.s32.totalorder %s30, 0
    %s33 = sadd.s32 %s32, 1
    %s34 = scalar_select %p31, %s32, %s33
    %p37 = pneg %p31
    %p38 = scmp.eq.s32.totalorder %s10, 1
    %p39 = por %p37, %p38
    %p40 = scmp.ne.s32.totalorder %s32, %s35
    %p41 = scmp.eq.s32.totalorder %s10, 0
    %p42 = por %p40, %p41
    %p43 = scmp.ne.s32.totalorder %s32, %s35
    %p44 = scmp.eq.s32.totalorder %s15, 1
    %p45 = por %p43, %p44
    %p46 = scmp.ne.s32.totalorder %s35, %s36
    %p47 = scmp.eq.s32.totalorder %s15, 0
    %p48 = por %p46, %p47
    %p49 = scmp.ne.s32.totalorder %s35, %s36
    %p50 = scmp.eq.s32.totalorder %s16, 1
    %p51 = por %p49, %p50
    %p53 = scmp.ne.s32.totalorder %s36, %s52
    %p54 = scmp.eq.s32.totalorder %s16, 0
    %p55 = por %p53, %p54
    %s56 = ssub.s32 %s18, %s25
    %s57 = ssub.s32 %s17, %s29
    %s58 = sor.u32 %s56, %s57
    %p59 = scmp.eq.s32.totalorder %s58, 0
    %s61 = sadd.s32 %s60, 1
    %s62 = scalar_select %p59, %s60, %s61
    %p65 = pneg %p59
    %p66 = scmp.eq.s32.totalorder %s10, 1
    %p67 = por %p65, %p66
    %p68 = scmp.ne.s32.totalorder %s60, %s63
    %p69 = scmp.eq.s32.totalorder %s10, 0
    %p70 = por %p68, %p69
    %p71 = scmp.ne.s32.totalorder %s60, %s63
    %p72 = scmp.eq.s32.totalorder %s15, 1
    %p73 = por %p71, %p72
    %p74 = scmp.ne.s32.totalorder %s63, %s64
    %p75 = scmp.eq.s32.totalorder %s15, 0
    %p76 = por %p74, %p75
    %p77 = scmp.ne.s32.totalorder %s63, %s64
    %p78 = scmp.eq.s32.totalorder %s16, 1
    %p79 = por %p77, %p78
    %p81 = scmp.ne.s32.totalorder %s64, %s80
    %p82 = scmp.eq.s32.totalorder %s16, 0
    %p83 = por %p81, %p82
    %s85 = sadd.s32 %s84, 1
    %p88 = scmp.eq.s32.totalorder %s10, 1
    %p89 = scmp.ne.s32.totalorder %s84, %s86
    %p90 = scmp.eq.s32.totalorder %s10, 0
    %p91 = por %p89, %p90
    %p92 = scmp.ne.s32.totalorder %s84, %s86
    %p93 = scmp.eq.s32.totalorder %s15, 1
    %p94 = por %p92, %p93
    %p95 = scmp.ne.s32.totalorder %s86, %s87
    %p96 = scmp.eq.s32.totalorder %s15, 0
    %p97 = por %p95, %p96
    %p98 = scmp.ne.s32.totalorder %s86, %s87
    %p99 = scmp.eq.s32.totalorder %s16, 1
    %p100 = por %p98, %p99
    %p102 = scmp.ne.s32.totalorder %s87, %s101
    %p103 = scmp.eq.s32.totalorder %s16, 0
    %p104 = por %p102, %p103
    %s106 = sadd.s32 %s105, 1
    %p109 = scmp.eq.s32.totalorder %s10, 1
    %p110 = scmp.ne.s32.totalorder %s105, %s107
    %p111 = scmp.eq.s32.totalorder %s10, 0
    %p112 = por %p110, %p111
    %p113 = scmp.ne.s32.totalorder %s105, %s107
    %p114 = scmp.eq.s32.totalorder %s15, 1
    %p115 = por %p113, %p114
    %p116 = scmp.ne.s32.totalorder %s107, %s108
    %p117 = scmp.eq.s32.totalorder %s15, 0
    %p118 = por %p116, %p117
    %p119 = scmp.ne.s32.totalorder %s107, %s108
    %p120 = scmp.eq.s32.totalorder %s16, 1
    %p121 = por %p119, %p120
    %p123 = scmp.ne.s32.totalorder %s108, %s122
    %p124 = scmp.eq.s32.totalorder %s16, 0
    %p125 = por %p123, %p124
    %s126 = ssub.s32 %s17, %s29
    %p127 = scmp.eq.s32.totalorder %s126, 0
    %s129 = sadd.s32 %s128, 1
    %s130 = scalar_select %p127, %s128, %s129
    %p133 = pneg %p127
    %p134 = scmp.eq.s32.totalorder %s10, 1
    %p135 = por %p133, %p134
    %p136 = scmp.ne.s32.totalorder %s128, %s131
    %p137 = scmp.eq.s32.totalorder %s10, 0
    %p138 = por %p136, %p137
    %p139 = scmp.ne.s32.totalorder %s128, %s131
    %p140 = scmp.eq.s32.totalorder %s15, 1
    %p141 = por %p139, %p140
    %p142 = scmp.ne.s32.totalorder %s131, %s132
    %p143 = scmp.eq.s32.totalorder %s15, 0
    %p144 = por %p142, %p143
    %p145 = scmp.ne.s32.totalorder %s131, %s132
    %p146 = scmp.eq.s32.totalorder %s16, 1
    %p147 = por %p145, %p146
    %p149 = scmp.ne.s32.totalorder %s132, %s148
    %p150 = scmp.eq.s32.totalorder %s16, 0
    %p151 = por %p149, %p150
    %p152 = scmp.le.s32.totalorder 1, %s10
    %p153 = scmp.lt.s32.totalorder %s10, 3
    %p154 = pnand %p152, %p153
    %p155 = pneg %p154
    // Predicated region
    $region9: #{pspnet_forward.20} parent=5 // pred_check
      _
    $region10: #{pspnet_forward.20} parent=5 // pred_check_branch
      %157 = sbr.rel (%p154) target = $region12
    $region11: #{pspnet_forward.20} parent=5 // pred_region
      %s158 = ssub.s32 %s10, 1
      // Predicated region
      $region13: #{pspnet_forward.20} parent=11 // pred_check
        %p159 = pneg %p97
      $region14: #{pspnet_forward.20} parent=11 // pred_check_branch
        %161 = sbr.rel (%p159) target = $region16
      $region15: #{pspnet_forward.20} parent=11 // pred_region
        _
      $region16: #{pspnet_forward.20} parent=11 // pred_fallthru
        _
      // Predicated region
      $region17: #{pspnet_forward.20} parent=11 // pred_check
        %p162 = pneg %p118
      $region18: #{pspnet_forward.20} parent=11 // pred_check_branch
        %164 = sbr.rel (%p162) target = $region20
      $region19: #{pspnet_forward.20} parent=11 // pred_region
        _
      $region20: #{pspnet_forward.20} parent=11 // pred_fallthru
        _
    $region12: #{pspnet_forward.20} parent=5 // pred_fallthru
      _
    %p165 = scmp.lt.s32.totalorder %s10, 2
    // Predicated region
    $region21: #{pspnet_forward.20} parent=5 // pred_check
      %p166 = pneg %p165
    $region22: #{pspnet_forward.20} parent=5 // pred_check_branch
      %168 = sbr.rel (%p166) target = $region24
    $region23: #{pspnet_forward.20} parent=5 // pred_region
      // Predicated region
      $region25: #{pspnet_forward.20} parent=23 // pred_check
        %p169 = pneg %p42
      $region26: #{pspnet_forward.20} parent=23 // pred_check_branch
        %171 = sbr.rel (%p169) target = $region28
      $region27: #{pspnet_forward.20} parent=23 // pred_region
        %s172 = smul.u32 4, %s18
        %p173 = scmp.lt.s32.totalorder %s172, 7
        %s174 = scalar_select %p173, %s172, 7
        %s175 = smul.addr %s174, 4
        %s176 = scalar_lea.vmem %s0, %s175
        %s177 = smul.u32 4, %s18
      $region28: #{pspnet_forward.20} parent=23 // pred_fallthru
        _
      // Predicated region
      $region29: #{pspnet_forward.20} parent=23 // pred_check
        %p178 = pneg %p70
      $region30: #{pspnet_forward.20} parent=23 // pred_check_branch
        %180 = sbr.rel (%p178) target = $region32
      $region31: #{pspnet_forward.20} parent=23 // pred_region
        %s181 = smul.u32 64, %s18
        %p182 = scmp.lt.s32.totalorder %s181, 127
        %s183 = scalar_select %p182, %s181, 127
        %p184 = scmp.lt.s32.totalorder %s17, 0
        %s185 = scalar_select %p184, %s17, 0
        %s186 = sadd.s32 %s185, %s183
        %s187 = smul.addr %s186, 4
        %s188 = scalar_lea.vmem %s1, %s187
        %s189 = smul.u32 64, %s18
      $region32: #{pspnet_forward.20} parent=23 // pred_fallthru
        _
    $region24: #{pspnet_forward.20} parent=5 // pred_fallthru
      _
    %p190 = scmp.le.s32.totalorder 1, %s10
    %p191 = scmp.lt.s32.totalorder %s10, 3
    %p192 = pnand %p190, %p191
    %p193 = pneg %p192
    // Predicated region
    $region33: #{pspnet_forward.20} parent=5 // pred_check
      _
    $region34: #{pspnet_forward.20} parent=5 // pred_check_branch
      %195 = sbr.rel (%p192) target = $region36
    $region35: #{pspnet_forward.20} parent=5 // pred_region
      %s196 = ssub.s32 %s10, 1
      %s197 = smul.u32 4, %s20
      %p198 = scmp.lt.s32.totalorder %s197, 7
      %s199 = scalar_select %p198, %s197, 7
      %s200 = smul.addr %s199, 4
      %s201 = scalar_lea.vmem %s0, %s200
      %p202 = pneg %p48
      %p203 = pneg %p45
      %s204 = smul.u32 64, %s20
      %p205 = scmp.lt.s32.totalorder %s204, 127
      %s206 = scalar_select %p205, %s204, 127
      %p207 = scmp.lt.s32.totalorder %s19, 0
      %s208 = scalar_select %p207, %s19, 0
      %s209 = sadd.s32 %s208, %s206
      %s210 = smul.addr %s209, 4
      %s211 = scalar_lea.vmem %s1, %s210
      %p212 = pneg %p76
      %p213 = pneg %p73
      %p214 = pneg %p97
      %p215 = pneg %p94
      %p216 = pneg %p118
      %p217 = pneg %p115
      %p218 = pneg %p144
      %p219 = pneg %p141
      %p220 = scmp.lt.s32.totalorder %s19, 0
      %s221 = scalar_select %p220, %s19, 0
      %s222 = smul.addr %s221, 4
      %s223 = scalar_lea.vmem %s4, %s222
      %s224 = smul.u32 4, %s20
      %p225 = scmp.lt.s32.totalorder %s224, 7
      %s226 = scalar_select %p225, %s224, 7
      %s227 = smul.addr %s226, 4
      %s228 = scalar_lea.vmem %s0, %s227
      %s229 = smul.u32 4, %s20
      %s230 = smul.u32 64, %s20
      %p231 = scmp.lt.s32.totalorder %s230, 127
      %s232 = scalar_select %p231, %s230, 127
      %p233 = scmp.lt.s32.totalorder %s19, 0
      %s234 = scalar_select %p233, %s19, 0
      %s235 = sadd.s32 %s234, %s232
      %s236 = smul.addr %s235, 4
      %s237 = scalar_lea.vmem %s1, %s236
      %s238 = smul.u32 64, %s20
      %p239 = scmp.lt.s32.totalorder %s19, 0
      %s240 = scalar_select %p239, %s19, 0
      %s241 = smul.addr %s240, 4
      %s242 = scalar_lea.vmem %s4, %s241
      %p244 = scmp.eq.s32.totalorder %s20, 0
      // Predicated region
      $region37: #{pspnet_forward.20} parent=35 // pred_check
        %p245 = pneg %p244
      $region38: #{pspnet_forward.20} parent=35 // pred_check_branch
        %247 = sbr.rel (%p245) target = $region40
      $region39: #{pspnet_forward.20} parent=35 // pred_region
        %248 = vst [vmem:[#allocation2] sm:$0xff] 0.0
      $region40: #{pspnet_forward.20} parent=35 // pred_fallthru
        _
      %v249 = vld [vmem:[#allocation2] sm:$0xff]
      %v250 = vld [vmem:[%s228] sm:$0xff]
      %v251 = vld [vmem:[%s228 + $0x8] sm:$0xff]
      %v252 = vld [vmem:[%s237] sm:$0xf]
      %v253 = vld [vmem:[%s237 + $0x4] sm:$0xf]
      %v254 = vld [vmem:[%s237 + $0x8] sm:$0xf]
      %v255 = vld [vmem:[%s237 + $0xc] sm:$0xf]
      %v256 = vld [vmem:[%s237 + $0x10] sm:$0xf]
      %v257 = vld [vmem:[%s237 + $0x14] sm:$0xf]
      %v258 = vld [vmem:[%s237 + $0x18] sm:$0xf]
      %v259 = vld [vmem:[%s237 + $0x1c] sm:$0xf]
      %v260 = vld [vmem:[%s237 + $0x20] sm:$0xf]
      %v261 = vld [vmem:[%s237 + $0x24] sm:$0xf]
      %v262 = vld [vmem:[%s237 + $0x28] sm:$0xf]
      %v263 = vld [vmem:[%s237 + $0x2c] sm:$0xf]
      %v264 = vld [vmem:[%s237 + $0x30] sm:$0xf]
      %v265 = vld [vmem:[%s237 + $0x34] sm:$0xf]
      %v266 = vld [vmem:[%s237 + $0x38] sm:$0xf]
      %v267 = vld [vmem:[%s237 + $0x3c] sm:$0xf]
      %v268 = vld [vmem:[%s237 + $0x40] sm:$0xf]
      %v269 = vld [vmem:[%s237 + $0x44] sm:$0xf]
      %v270 = vld [vmem:[%s237 + $0x48] sm:$0xf]
      %v271 = vld [vmem:[%s237 + $0x4c] sm:$0xf]
      %v272 = vld [vmem:[%s237 + $0x50] sm:$0xf]
      %v273 = vld [vmem:[%s237 + $0x54] sm:$0xf]
      %v274 = vld [vmem:[%s237 + $0x58] sm:$0xf]
      %v275 = vld [vmem:[%s237 + $0x5c] sm:$0xf]
      %v276 = vld [vmem:[%s237 + $0x60] sm:$0xf]
      %v277 = vld [vmem:[%s237 + $0x64] sm:$0xf]
      %v278 = vld [vmem:[%s237 + $0x68] sm:$0xf]
      %v279 = vld [vmem:[%s237 + $0x6c] sm:$0xf]
      %v280 = vld [vmem:[%s237 + $0x70] sm:$0xf]
      %v281 = vld [vmem:[%s237 + $0x74] sm:$0xf]
      %v282 = vld [vmem:[%s237 + $0x78] sm:$0xf]
      %v283 = vld [vmem:[%s237 + $0x7c] sm:$0xf]
      %v284 = vld [vmem:[%s237 + $0x80] sm:$0xf]
      %v285 = vld [vmem:[%s237 + $0x84] sm:$0xf]
      %v286 = vld [vmem:[%s237 + $0x88] sm:$0xf]
      %v287 = vld [vmem:[%s237 + $0x8c] sm:$0xf]
      %v288 = vld [vmem:[%s237 + $0x90] sm:$0xf]
      %v289 = vld [vmem:[%s237 + $0x94] sm:$0xf]
      %v290 = vld [vmem:[%s237 + $0x98] sm:$0xf]
      %v291 = vld [vmem:[%s237 + $0x9c] sm:$0xf]
      %v292 = vld [vmem:[%s237 + $0xa0] sm:$0xf]
      %v293 = vld [vmem:[%s237 + $0xa4] sm:$0xf]
      %v294 = vld [vmem:[%s237 + $0xa8] sm:$0xf]
      %v295 = vld [vmem:[%s237 + $0xac] sm:$0xf]
      %v296 = vld [vmem:[%s237 + $0xb0] sm:$0xf]
      %v297 = vld [vmem:[%s237 + $0xb4] sm:$0xf]
      %v298 = vld [vmem:[%s237 + $0xb8] sm:$0xf]
      %v299 = vld [vmem:[%s237 + $0xbc] sm:$0xf]
      %v300 = vld [vmem:[%s237 + $0xc0] sm:$0xf]
      %v301 = vld [vmem:[%s237 + $0xc4] sm:$0xf]
      %v302 = vld [vmem:[%s237 + $0xc8] sm:$0xf]
      %v303 = vld [vmem:[%s237 + $0xcc] sm:$0xf]
      %v304 = vld [vmem:[%s237 + $0xd0] sm:$0xf]
      %v305 = vld [vmem:[%s237 + $0xd4] sm:$0xf]
      %v306 = vld [vmem:[%s237 + $0xd8] sm:$0xf]
      %v307 = vld [vmem:[%s237 + $0xdc] sm:$0xf]
      %v308 = vld [vmem:[%s237 + $0xe0] sm:$0xf]
      %v309 = vld [vmem:[%s237 + $0xe4] sm:$0xf]
      %v310 = vld [vmem:[%s237 + $0xe8] sm:$0xf]
      %v311 = vld [vmem:[%s237 + $0xec] sm:$0xf]
      %v312 = vld [vmem:[%s237 + $0xf0] sm:$0xf]
      %v313 = vld [vmem:[%s237 + $0xf4] sm:$0xf]
      %v314 = vld [vmem:[%s237 + $0xf8] sm:$0xf]
      %v315 = vld [vmem:[%s237 + $0xfc] sm:$0xf]
      %v318 = vunpack.c.l.b16 %v250
      %v319 = vunpack.c.h.b16 %v250
      %v320 = vunpack.c.l.b16 %v251
      %v321 = vunpack.c.h.b16 %v251
      %v322 = vpack.c.b16 %v318, %v318
      %v323 = vpack.c.b16 %v319, %v319
      %v324 = vpack.c.b16 %v320, %v320
      %v325 = vpack.c.b16 %v321, %v321
      %v394 = vunpack.c.l.b16 %v252
      %v395 = vunpack.c.l.b16 %v253
      %v396 = vunpack.c.l.b16 %v254
      %v397 = vunpack.c.l.b16 %v255
      %v398 = vunpack.c.l.b16 %v256
      %v399 = vunpack.c.l.b16 %v257
      %v400 = vunpack.c.l.b16 %v258
      %v401 = vunpack.c.l.b16 %v259
      %v402 = vunpack.c.l.b16 %v260
      %v403 = vunpack.c.l.b16 %v261
      %v404 = vunpack.c.l.b16 %v262
      %v405 = vunpack.c.l.b16 %v263
      %v406 = vunpack.c.l.b16 %v264
      %v407 = vunpack.c.l.b16 %v265
      %v408 = vunpack.c.l.b16 %v266
      %v409 = vunpack.c.l.b16 %v267
      %v410 = vunpack.c.l.b16 %v268
      %v411 = vunpack.c.l.b16 %v269
      %v412 = vunpack.c.l.b16 %v270
      %v413 = vunpack.c.l.b16 %v271
      %v414 = vunpack.c.l.b16 %v272
      %v415 = vunpack.c.l.b16 %v273
      %v416 = vunpack.c.l.b16 %v274
      %v417 = vunpack.c.l.b16 %v275
      %v418 = vunpack.c.l.b16 %v276
      %v419 = vunpack.c.l.b16 %v277
      %v420 = vunpack.c.l.b16 %v278
      %v421 = vunpack.c.l.b16 %v279
      %v422 = vunpack.c.l.b16 %v280
      %v423 = vunpack.c.l.b16 %v281
      %v424 = vunpack.c.l.b16 %v282
      %v425 = vunpack.c.l.b16 %v283
      %v426 = vunpack.c.l.b16 %v284
      %v427 = vunpack.c.l.b16 %v285
      %v428 = vunpack.c.l.b16 %v286
      %v429 = vunpack.c.l.b16 %v287
      %v430 = vunpack.c.l.b16 %v288
      %v431 = vunpack.c.l.b16 %v289
      %v432 = vunpack.c.l.b16 %v290
      %v433 = vunpack.c.l.b16 %v291
      %v434 = vunpack.c.l.b16 %v292
      %v435 = vunpack.c.l.b16 %v293
      %v436 = vunpack.c.l.b16 %v294
      %v437 = vunpack.c.l.b16 %v295
      %v438 = vunpack.c.l.b16 %v296
      %v439 = vunpack.c.l.b16 %v297
      %v440 = vunpack.c.l.b16 %v298
      %v441 = vunpack.c.l.b16 %v299
      %v442 = vunpack.c.l.b16 %v300
      %v443 = vunpack.c.l.b16 %v301
      %v444 = vunpack.c.l.b16 %v302
      %v445 = vunpack.c.l.b16 %v303
      %v446 = vunpack.c.l.b16 %v304
      %v447 = vunpack.c.l.b16 %v305
      %v448 = vunpack.c.l.b16 %v306
      %v449 = vunpack.c.l.b16 %v307
      %v450 = vunpack.c.l.b16 %v308
      %v451 = vunpack.c.l.b16 %v309
      %v452 = vunpack.c.l.b16 %v310
      %v453 = vunpack.c.l.b16 %v311
      %v454 = vunpack.c.l.b16 %v312
      %v455 = vunpack.c.l.b16 %v313
      %v456 = vunpack.c.l.b16 %v314
      %v457 = vunpack.c.l.b16 %v315
      %v458 = vpack.c.b16 %v395, %v394
      %v459 = vpack.c.b16 %v397, %v396
      %v460 = vpack.c.b16 %v399, %v398
      %v461 = vpack.c.b16 %v401, %v400
      %v462 = vpack.c.b16 %v403, %v402
      %v463 = vpack.c.b16 %v405, %v404
      %v464 = vpack.c.b16 %v407, %v406
      %v465 = vpack.c.b16 %v409, %v408
      %v466 = vpack.c.b16 %v411, %v410
      %v467 = vpack.c.b16 %v413, %v412
      %v468 = vpack.c.b16 %v415, %v414
      %v469 = vpack.c.b16 %v417, %v416
      %v470 = vpack.c.b16 %v419, %v418
      %v471 = vpack.c.b16 %v421, %v420
      %v472 = vpack.c.b16 %v423, %v422
      %v473 = vpack.c.b16 %v425, %v424
      %v474 = vpack.c.b16 %v427, %v426
      %v475 = vpack.c.b16 %v429, %v428
      %v476 = vpack.c.b16 %v431, %v430
      %v477 = vpack.c.b16 %v433, %v432
      %v478 = vpack.c.b16 %v435, %v434
      %v479 = vpack.c.b16 %v437, %v436
      %v480 = vpack.c.b16 %v439, %v438
      %v481 = vpack.c.b16 %v441, %v440
      %v482 = vpack.c.b16 %v443, %v442
      %v483 = vpack.c.b16 %v445, %v444
      %v484 = vpack.c.b16 %v447, %v446
      %v485 = vpack.c.b16 %v449, %v448
      %v486 = vpack.c.b16 %v451, %v450
      %v487 = vpack.c.b16 %v453, %v452
      %v488 = vpack.c.b16 %v455, %v454
      %v489 = vpack.c.b16 %v457, %v456
      %522 = vmatprep.subr.bf16.mxu0 0
      %523 = vmatpush1.bf16.msra.mxu0 %v465
      %524 = vmatprep.subr.bf16.mxu0 0
      %525 = vmatpush1.bf16.msra.mxu0 %v464
      %526 = vmatprep.subr.bf16.mxu0 0
      %527 = vmatpush1.bf16.msra.mxu0 %v463
      %528 = vmatprep.subr.bf16.mxu0 0
      %529 = vmatpush1.bf16.msra.mxu0 %v462
      %530 = vmatprep.subr.bf16.mxu0 0
      %531 = vmatpush1.bf16.msra.mxu0 %v461
      %532 = vmatprep.subr.bf16.mxu0 0
      %533 = vmatpush1.bf16.msra.mxu0 %v460
      %534 = vmatprep.subr.bf16.mxu0 0
      %535 = vmatpush1.bf16.msra.mxu0 %v459
      %536 = vmatprep.subr.bf16.mxu0 0
      %537 = vmatpush1.bf16.msra.mxu0 %v458
      %538 = vmatprep.subr.bf16.mxu0 0
      %539 = vmatpush2.bf16.msra.mxu0 %v473
      %540 = vmatprep.subr.bf16.mxu0 0
      %541 = vmatpush2.bf16.msra.mxu0 %v472
      %542 = vmatprep.subr.bf16.mxu0 0
      %543 = vmatpush2.bf16.msra.mxu0 %v471
      %544 = vmatprep.subr.bf16.mxu0 0
      %545 = vmatpush2.bf16.msra.mxu0 %v470
      %546 = vmatprep.subr.bf16.mxu0 0
      %547 = vmatpush2.bf16.msra.mxu0 %v469
      %548 = vmatprep.subr.bf16.mxu0 0
      %549 = vmatpush2.bf16.msra.mxu0 %v468
      %550 = vmatprep.subr.bf16.mxu0 0
      %551 = vmatpush2.bf16.msra.mxu0 %v467
      %552 = vmatprep.subr.bf16.mxu0 0
      %553 = vmatpush2.bf16.msra.mxu0 %v466
      %554 = vmatprep.mubr.bf16.mxu0 %v323
      %555 = vmatmul.mubr.bf16.gmra.mxu0 %v322
      %v556 = vpop.f32.mrf.mxu0
      %v557 = vadd.f32 0.0, %v556
      %v558 = vpop.f32.mrf.mxu0
      %v559 = vpop.f32.mrf.mxu0
      %v560 = vpop.f32.mrf.mxu0
      %561 = vdwg.mxu0
      %562 = vmatprep.subr.bf16.mxu0 0
      %563 = vmatpush1.bf16.msra.mxu0 %v481
      %564 = vmatprep.subr.bf16.mxu0 0
      %565 = vmatpush1.bf16.msra.mxu0 %v480
      %566 = vmatprep.subr.bf16.mxu0 0
      %567 = vmatpush1.bf16.msra.mxu0 %v479
      %568 = vmatprep.subr.bf16.mxu0 0
      %569 = vmatpush1.bf16.msra.mxu0 %v478
      %570 = vmatprep.subr.bf16.mxu0 0
      %571 = vmatpush1.bf16.msra.mxu0 %v477
      %572 = vmatprep.subr.bf16.mxu0 0
      %573 = vmatpush1.bf16.msra.mxu0 %v476
      %574 = vmatprep.subr.bf16.mxu0 0
      %575 = vmatpush1.bf16.msra.mxu0 %v475
      %576 = vmatprep.subr.bf16.mxu0 0
      %577 = vmatpush1.bf16.msra.mxu0 %v474
      %578 = vmatprep.subr.bf16.mxu0 0
      %579 = vmatpush2.bf16.msra.mxu0 %v489
      %580 = vmatprep.subr.bf16.mxu0 0
      %581 = vmatpush2.bf16.msra.mxu0 %v488
      %582 = vmatprep.subr.bf16.mxu0 0
      %583 = vmatpush2.bf16.msra.mxu0 %v487
      %584 = vmatprep.subr.bf16.mxu0 0
      %585 = vmatpush2.bf16.msra.mxu0 %v486
      %586 = vmatprep.subr.bf16.mxu0 0
      %587 = vmatpush2.bf16.msra.mxu0 %v485
      %588 = vmatprep.subr.bf16.mxu0 0
      %589 = vmatpush2.bf16.msra.mxu0 %v484
      %590 = vmatprep.subr.bf16.mxu0 0
      %591 = vmatpush2.bf16.msra.mxu0 %v483
      %592 = vmatprep.subr.bf16.mxu0 0
      %593 = vmatpush2.bf16.msra.mxu0 %v482
      %594 = vmatprep.mubr.bf16.mxu0 %v325
      %595 = vmatmul.mubr.bf16.gmra.mxu0 %v324
      %v596 = vpop.f32.mrf.mxu0
      %v597 = vadd.f32 %v557, %v596
      %v598 = vpop.f32.mrf.mxu0
      %v599 = vpop.f32.mrf.mxu0
      %v600 = vpop.f32.mrf.mxu0
      %601 = vdwg.mxu0
      %v602 = vadd.f32 %v249, %v597
      %603 = vst [vmem:[#allocation2] sm:$0xff] %v602
      %p604 = scmp.eq.s32.totalorder %s20, 1
      // Predicated region
      $region41: #{pspnet_forward.20} parent=35 // pred_check
        %p605 = pneg %p604
      $region42: #{pspnet_forward.20} parent=35 // pred_check_branch
        %607 = sbr.rel (%p605) target = $region44
      $region43: #{pspnet_forward.20} parent=35 // pred_region
        %v608 = vld [vmem:[#allocation2] sm:$0xff]
        %v609 = vld [vmem:[%s2] sm:$0xff]
        %611 = vset.pattern.permute.xlu0 0
        %612 = vperm.xlu0 %611, %v609
        %v613 = vpop.permute.xlu0 %612
        %v615 = vmul.f32 %v608, %v613
        %v616 = vld [vmem:[%s3] sm:$0xff]
        %618 = vset.pattern.permute.xlu0 0
        %619 = vperm.xlu0 %618, %v616
        %v620 = vpop.permute.xlu0 %619
        %v622 = vadd.f32 %v615, %v620
        %v623 = vmax.f32 %v622, 0.0
        %v624 = vpack.c.bf16 %v623, %v623
        %625 = vst [vmem:[%s242] sm:$0xf] %v624
      $region44: #{pspnet_forward.20} parent=35 // pred_fallthru
        _
      %p626 = scmp.lt.s32.totalorder %s19, 0
      %s627 = scalar_select %p626, %s19, 0
      %s628 = smul.addr %s627, 4
      %s629 = scalar_lea.vmem %s4, %s628
      // Predicated region
      $region45: #{pspnet_forward.20} parent=35 // pred_check
        %p630 = pneg %p141
      $region46: #{pspnet_forward.20} parent=35 // pred_check_branch
        %632 = sbr.rel (%p630) target = $region48
      $region47: #{pspnet_forward.20} parent=35 // pred_region
        _
      $region48: #{pspnet_forward.20} parent=35 // pred_fallthru
        _
      // Predicated region
      $region49: #{pspnet_forward.20} parent=35 // pred_check
        %p633 = pneg %p141
      $region50: #{pspnet_forward.20} parent=35 // pred_check_branch
        %635 = sbr.rel (%p633) target = $region52
      $region51: #{pspnet_forward.20} parent=35 // pred_region
        %p636 = scmp.lt.s32.totalorder %s19, 0
        %s637 = scalar_select %p636, %s19, 0
        %s638 = smul.addr %s637, 4
        %s639 = scalar_lea.vmem %s4, %s638
      $region52: #{pspnet_forward.20} parent=35 // pred_fallthru
        _
    $region36: #{pspnet_forward.20} parent=5 // pred_fallthru
      _
    %p640 = scmp.le.s32.totalorder 2, %s10
    // Predicated region
    $region53: #{pspnet_forward.20} parent=5 // pred_check
      %p641 = pneg %p640
    $region54: #{pspnet_forward.20} parent=5 // pred_check_branch
      %643 = sbr.rel (%p641) target = $region56
    $region55: #{pspnet_forward.20} parent=5 // pred_region
      %s644 = ssub.s32 %s10, 2
    $region56: #{pspnet_forward.20} parent=5 // pred_fallthru
      _
  $region6: #{pspnet_forward.20} parent=0 // loop_footer
    %s14 = sadd.s32 1, %s10
  $region7: #{pspnet_forward.20} parent=0 // loop_footer_branch
    %9 = sbr.rel target = $region3
  $region8: #{pspnet_forward.20} parent=0 // loop_exit
    _

// kernel: pspnet_forward.21
$region0: #{pspnet_forward.21}
  #allocation0 [shape = 'u32[]', space=smem, size = 0x4, offset = 0x4, fixed_abs, tag = 'smem constant byte address 0x4 - core index']
  #allocation1 [shape = 'u32[144,128]{1,0:T(1,128)}', space=vmem, size = 0x12000, scoped, tag = 'internal scratch']
  #allocation2 [shape = 'f32[4,128]{1,0:T(4,128)}', space=vmem, size = 0x800, scoped, tag = 'scratch operand']
  %s0 = inlined_call_operand.vmem [shape: bf16[4,8], index: 0, kind: input, shape index: {}]
  %s1 = inlined_call_operand.vmem [shape: bf16[8,128], index: 1, kind: input, shape index: {}]
  %s2 = inlined_call_operand.vmem [shape: f32[4,1], index: 2, kind: input, shape index: {}]
  %s3 = inlined_call_operand.vmem [shape: f32[4,1], index: 3, kind: input, shape index: {}]
  %s4 = inlined_call_operand.vmem [shape: f32[4,128], index: 4, kind: output, shape index: {}]
  %s5 = sld [smem:[#allocation0]]
  $region34: #{pspnet_forward.21} parent=0
    _
  %s7 = ssub.s32 1, %s5
  %s8 = scalar_select 0, %s7, %s5
  // Predicated region
  $region2: #{pspnet_forward.21} parent=0 // pred_check
    _
  $region3: #{pspnet_forward.21} parent=0 // pred_check_branch
    %10 = sbr.rel (0) target = $region5
  $region4: #{pspnet_forward.21} parent=0 // pred_region
    _
  $region5: #{pspnet_forward.21} parent=0 // pred_fallthru
    _
  // Predicated region
  $region6: #{pspnet_forward.21} parent=0 // pred_check
    _
  $region7: #{pspnet_forward.21} parent=0 // pred_check_branch
    %12 = sbr.rel (0) target = $region9
  $region8: #{pspnet_forward.21} parent=0 // pred_region
    _
  $region9: #{pspnet_forward.21} parent=0 // pred_fallthru
    _
  // Predicated region
  $region10: #{pspnet_forward.21} parent=0 // pred_check
    _
  $region11: #{pspnet_forward.21} parent=0 // pred_check_branch
    %14 = sbr.rel (0) target = $region13
  $region12: #{pspnet_forward.21} parent=0 // pred_region
    _
  $region13: #{pspnet_forward.21} parent=0 // pred_fallthru
    _
  // Predicated region
  $region14: #{pspnet_forward.21} parent=0 // pred_check
    _
  $region15: #{pspnet_forward.21} parent=0 // pred_check_branch
    %16 = sbr.rel (0) target = $region17
  $region16: #{pspnet_forward.21} parent=0 // pred_region
    _
  $region17: #{pspnet_forward.21} parent=0 // pred_fallthru
    _
  %p18 = scmp.eq.s32.totalorder 0, 0
  // Predicated region
  $region18: #{pspnet_forward.21} parent=0 // pred_check
    %p19 = pneg %p18
  $region19: #{pspnet_forward.21} parent=0 // pred_check_branch
    %21 = sbr.rel (%p19) target = $region21
  $region20: #{pspnet_forward.21} parent=0 // pred_region
    %22 = vst [vmem:[#allocation2] sm:$0xf] 0.0
  $region21: #{pspnet_forward.21} parent=0 // pred_fallthru
    _
  %v23 = vld [vmem:[#allocation2] sm:$0xf]
  %v24 = vld [vmem:[%s0] sm:$0x3]
  %v25 = vld [vmem:[%s1] sm:$0xf]
  %vm26 = vcmask 64512
  %v28 = vsel %vm26, %v24, 0
  %vm30 = vcmask 1043456
  %v32 = vsel %vm30, %v25, 0
  %34 = vmatprep.subr.bf16.mxu0 0
  %35 = vmatpush1.bf16.msra.mxu0 0
  %36 = vmatprep.subr.bf16.mxu0 0
  %37 = vmatpush1.bf16.msra.mxu0 0
  %38 = vmatprep.subr.bf16.mxu0 0
  %39 = vmatpush1.bf16.msra.mxu0 0
  %40 = vmatprep.subr.bf16.mxu0 0
  %41 = vmatpush1.bf16.msra.mxu0 0
  %42 = vmatprep.subr.bf16.mxu0 0
  %43 = vmatpush1.bf16.msra.mxu0 0
  %44 = vmatprep.subr.bf16.mxu0 0
  %45 = vmatpush1.bf16.msra.mxu0 0
  %46 = vmatprep.subr.bf16.mxu0 0
  %47 = vmatpush1.bf16.msra.mxu0 0
  %48 = vmatprep.subr.bf16.mxu0 0
  %49 = vmatpush1.bf16.msra.mxu0 %v32
  %50 = vmatprep.subr.bf16.mxu0 0
  %51 = vmatpush2.bf16.msra.mxu0 0
  %52 = vmatprep.subr.bf16.mxu0 0
  %53 = vmatpush2.bf16.msra.mxu0 0
  %54 = vmatprep.subr.bf16.mxu0 0
  %55 = vmatpush2.bf16.msra.mxu0 0
  %56 = vmatprep.subr.bf16.mxu0 0
  %57 = vmatpush2.bf16.msra.mxu0 0
  %58 = vmatprep.subr.bf16.mxu0 0
  %59 = vmatpush2.bf16.msra.mxu0 0
  %60 = vmatprep.subr.bf16.mxu0 0
  %61 = vmatpush2.bf16.msra.mxu0 0
  %62 = vmatprep.subr.bf16.mxu0 0
  %63 = vmatpush2.bf16.msra.mxu0 0
  %64 = vmatprep.subr.bf16.mxu0 0
  %65 = vmatpush2.bf16.msra.mxu0 0
  %66 = vmatprep.mubr.bf16.mxu0 0
  %67 = vmatmul.mubr.bf16.gmra.mxu0 %v28
  %v68 = vpop.f32.mrf.mxu0
  %v69 = vadd.f32 0.0, %v68
  %v70 = vpop.f32.mrf.mxu0
  %v71 = vpop.f32.mrf.mxu0
  %v72 = vpop.f32.mrf.mxu0
  %73 = vdwg.mxu0
  %v74 = vadd.f32 %v23, %v69
  %75 = vst [vmem:[#allocation2] sm:$0xf] %v74
  // Predicated region
  $region22: #{pspnet_forward.21} parent=0 // pred_check
    %p76 = pneg %p18
  $region23: #{pspnet_forward.21} parent=0 // pred_check_branch
    %78 = sbr.rel (%p76) target = $region25
  $region24: #{pspnet_forward.21} parent=0 // pred_region
    %v79 = vld [vmem:[#allocation2] sm:$0xf]
    %v80 = vld [vmem:[%s2] sm:$0xf]
    %82 = vset.pattern.permute.xlu0 0
    %83 = vperm.xlu0 %82, %v80
    %v84 = vpop.permute.xlu0 %83
    %v86 = vmul.f32 %v79, %v84
    %v87 = vld [vmem:[%s3] sm:$0xf]
    %89 = vset.pattern.permute.xlu0 0
    %90 = vperm.xlu0 %89, %v87
    %v91 = vpop.permute.xlu0 %90
    %v93 = vadd.f32 %v86, %v91
    %94 = vst [vmem:[%s4] sm:$0xf] %v93
  $region25: #{pspnet_forward.21} parent=0 // pred_fallthru
    _
  // Predicated region
  $region26: #{pspnet_forward.21} parent=0 // pred_check
    _
  $region27: #{pspnet_forward.21} parent=0 // pred_check_branch
    %96 = sbr.rel (0) target = $region29
  $region28: #{pspnet_forward.21} parent=0 // pred_region
    _
  $region29: #{pspnet_forward.21} parent=0 // pred_fallthru
    _
  // Predicated region
  $region30: #{pspnet_forward.21} parent=0 // pred_check
    _
  $region31: #{pspnet_forward.21} parent=0 // pred_check_branch
    %98 = sbr.rel (0) target = $region33
  $region32: #{pspnet_forward.21} parent=0 // pred_region
    _
  $region33: #{pspnet_forward.21} parent=0 // pred_fallthru
    _

// kernel: pspnet_forward.22
$region0: #{pspnet_forward.22}
  #allocation0 [shape = 'u32[]', space=smem, size = 0x4, offset = 0x4, fixed_abs, tag = 'smem constant byte address 0x4 - core index']
  #allocation1 [shape = 'u32[144,128]{1,0:T(1,128)}', space=vmem, size = 0x12000, scoped, tag = 'internal scratch']
  #allocation2 [shape = 'f32[48,128]{1,0:T(8,128)}', space=vmem, size = 0x6000, scoped, tag = 'scratch operand']
  %s0 = inlined_call_operand.vmem [shape: bf16[48,6], index: 0, kind: input, shape index: {}]
  %s1 = inlined_call_operand.vmem [shape: bf16[6,128], index: 1, kind: input, shape index: {}]
  %s2 = inlined_call_operand.vmem [shape: f32[48,1], index: 2, kind: input, shape index: {}]
  %s3 = inlined_call_operand.vmem [shape: f32[48,1], index: 3, kind: input, shape index: {}]
  %s4 = inlined_call_operand.vmem [shape: f32[48,128], index: 4, kind: output, shape index: {}]
  %s5 = sld [smem:[#allocation0]]
  $region34: #{pspnet_forward.22} parent=0
    _
  %s7 = ssub.s32 1, %s5
  %s8 = scalar_select 0, %s7, %s5
  // Predicated region
  $region2: #{pspnet_forward.22} parent=0 // pred_check
    _
  $region3: #{pspnet_forward.22} parent=0 // pred_check_branch
    %10 = sbr.rel (0) target = $region5
  $region4: #{pspnet_forward.22} parent=0 // pred_region
    _
  $region5: #{pspnet_forward.22} parent=0 // pred_fallthru
    _
  // Predicated region
  $region6: #{pspnet_forward.22} parent=0 // pred_check
    _
  $region7: #{pspnet_forward.22} parent=0 // pred_check_branch
    %12 = sbr.rel (0) target = $region9
  $region8: #{pspnet_forward.22} parent=0 // pred_region
    _
  $region9: #{pspnet_forward.22} parent=0 // pred_fallthru
    _
  // Predicated region
  $region10: #{pspnet_forward.22} parent=0 // pred_check
    _
  $region11: #{pspnet_forward.22} parent=0 // pred_check_branch
    %14 = sbr.rel (0) target = $region13
  $region12: #{pspnet_forward.22} parent=0 // pred_region
    _
  $region13: #{pspnet_forward.22} parent=0 // pred_fallthru
    _
  // Predicated region
  $region14: #{pspnet_forward.22} parent=0 // pred_check
    _
  $region15: #{pspnet_forward.22} parent=0 // pred_check_branch
    %16 = sbr.rel (0) target = $region17
  $region16: #{pspnet_forward.22} parent=0 // pred_region
    _
  $region17: #{pspnet_forward.22} parent=0 // pred_fallthru
    _
  %p18 = scmp.eq.s32.totalorder 0, 0
  // Predicated region
  $region18: #{pspnet_forward.22} parent=0 // pred_check
    %p19 = pneg %p18
  $region19: #{pspnet_forward.22} parent=0 // pred_check_branch
    %21 = sbr.rel (%p19) target = $region21
  $region20: #{pspnet_forward.22} parent=0 // pred_region
    %22 = vst [vmem:[#allocation2] sm:$0xff] 0.0
    %23 = vst [vmem:[#allocation2 + $0x8] sm:$0xff] 0.0
    %24 = vst [vmem:[#allocation2 + $0x10] sm:$0xff] 0.0
    %25 = vst [vmem:[#allocation2 + $0x18] sm:$0xff] 0.0
    %26 = vst [vmem:[#allocation2 + $0x20] sm:$0xff] 0.0
    %27 = vst [vmem:[#allocation2 + $0x28] sm:$0xff] 0.0
  $region21: #{pspnet_forward.22} parent=0 // pred_fallthru
    _
  %v28 = vld [vmem:[#allocation2] sm:$0xff]
  %v29 = vld [vmem:[#allocation2 + $0x8] sm:$0xff]
  %v30 = vld [vmem:[#allocation2 + $0x10] sm:$0xff]
  %v31 = vld [vmem:[#allocation2 + $0x18] sm:$0xff]
  %v32 = vld [vmem:[#allocation2 + $0x20] sm:$0xff]
  %v33 = vld [vmem:[#allocation2 + $0x28] sm:$0xff]
  %v34 = vld [vmem:[%s0] sm:$0xf]
  %v35 = vld [vmem:[%s0 + $0x4] sm:$0xf]
  %v36 = vld [vmem:[%s0 + $0x8] sm:$0xf]
  %v37 = vld [vmem:[%s0 + $0xc] sm:$0xf]
  %v38 = vld [vmem:[%s0 + $0x10] sm:$0xf]
  %v39 = vld [vmem:[%s0 + $0x14] sm:$0xf]
  %v40 = vld [vmem:[%s1] sm:$0x7]
  %v47 = vunpack.c.l.b16 %v34
  %v48 = vunpack.c.l.b16 %v35
  %v49 = vunpack.c.l.b16 %v36
  %v50 = vunpack.c.l.b16 %v37
  %v51 = vunpack.c.l.b16 %v38
  %v52 = vunpack.c.l.b16 %v39
  %v53 = vpack.c.b16 %v48, %v47
  %v54 = vpack.c.b16 %v50, %v49
  %v55 = vpack.c.b16 %v52, %v51
  %vm56 = vcmask 48128
  %v58 = vsel %vm56, %v53, 0
  %v61 = vsel %vm56, %v54, 0
  %v64 = vsel %vm56, %v55, 0
  %vm66 = vcmask 1042432
  %v68 = vsel %vm66, %v40, 0
  %70 = vmatprep.subr.bf16.mxu0 0
  %71 = vmatpush1.bf16.msra.mxu0 0
  %72 = vmatprep.subr.bf16.mxu0 0
  %73 = vmatpush1.bf16.msra.mxu0 0
  %74 = vmatprep.subr.bf16.mxu0 0
  %75 = vmatpush1.bf16.msra.mxu0 0
  %76 = vmatprep.subr.bf16.mxu0 0
  %77 = vmatpush1.bf16.msra.mxu0 0
  %78 = vmatprep.subr.bf16.mxu0 0
  %79 = vmatpush1.bf16.msra.mxu0 0
  %80 = vmatprep.subr.bf16.mxu0 0
  %81 = vmatpush1.bf16.msra.mxu0 0
  %82 = vmatprep.subr.bf16.mxu0 0
  %83 = vmatpush1.bf16.msra.mxu0 0
  %84 = vmatprep.subr.bf16.mxu0 0
  %85 = vmatpush1.bf16.msra.mxu0 %v68
  %86 = vmatprep.subr.bf16.mxu0 0
  %87 = vmatpush2.bf16.msra.mxu0 0
  %88 = vmatprep.subr.bf16.mxu0 0
  %89 = vmatpush2.bf16.msra.mxu0 0
  %90 = vmatprep.subr.bf16.mxu0 0
  %91 = vmatpush2.bf16.msra.mxu0 0
  %92 = vmatprep.subr.bf16.mxu0 0
  %93 = vmatpush2.bf16.msra.mxu0 0
  %94 = vmatprep.subr.bf16.mxu0 0
  %95 = vmatpush2.bf16.msra.mxu0 0
  %96 = vmatprep.subr.bf16.mxu0 0
  %97 = vmatpush2.bf16.msra.mxu0 0
  %98 = vmatprep.subr.bf16.mxu0 0
  %99 = vmatpush2.bf16.msra.mxu0 0
  %100 = vmatprep.subr.bf16.mxu0 0
  %101 = vmatpush2.bf16.msra.mxu0 0
  %102 = vmatprep.mubr.bf16.mxu0 0
  %103 = vmatmul.mubr.bf16.gmra.mxu0 %v58
  %v104 = vpop.f32.mrf.mxu0
  %v105 = vadd.f32 0.0, %v104
  %v106 = vpop.f32.mrf.mxu0
  %v107 = vpop.f32.mrf.mxu0
  %v108 = vadd.f32 0.0, %v107
  %v109 = vpop.f32.mrf.mxu0
  %110 = vmatprep.mubr.bf16.mxu0 0
  %111 = vmatmul.mubr.bf16.gmra.mxu0 %v61
  %v112 = vpop.f32.mrf.mxu0
  %v113 = vadd.f32 0.0, %v112
  %v114 = vpop.f32.mrf.mxu0
  %v115 = vpop.f32.mrf.mxu0
  %v116 = vadd.f32 0.0, %v115
  %v117 = vpop.f32.mrf.mxu0
  %118 = vmatprep.mubr.bf16.mxu0 0
  %119 = vmatmul.mubr.bf16.gmra.mxu0 %v64
  %v120 = vpop.f32.mrf.mxu0
  %v121 = vadd.f32 0.0, %v120
  %v122 = vpop.f32.mrf.mxu0
  %v123 = vpop.f32.mrf.mxu0
  %v124 = vadd.f32 0.0, %v123
  %v125 = vpop.f32.mrf.mxu0
  %126 = vdwg.mxu0
  %v127 = vadd.f32 %v28, %v105
  %v128 = vadd.f32 %v29, %v108
  %v129 = vadd.f32 %v30, %v113
  %v130 = vadd.f32 %v31, %v116
  %v131 = vadd.f32 %v32, %v121
  %v132 = vadd.f32 %v33, %v124
  %133 = vst [vmem:[#allocation2] sm:$0xff] %v127
  %134 = vst [vmem:[#allocation2 + $0x8] sm:$0xff] %v128
  %135 = vst [vmem:[#allocation2 + $0x10] sm:$0xff] %v129
  %136 = vst [vmem:[#allocation2 + $0x18] sm:$0xff] %v130
  %137 = vst [vmem:[#allocation2 + $0x20] sm:$0xff] %v131
  %138 = vst [vmem:[#allocation2 + $0x28] sm:$0xff] %v132
  // Predicated region
  $region22: #{pspnet_forward.22} parent=0 // pred_check
    %p139 = pneg %p18
  $region23: #{pspnet_forward.22} parent=0 // pred_check_branch
    %141 = sbr.rel (%p139) target = $region25
  $region24: #{pspnet_forward.22} parent=0 // pred_region
    %v142 = vld [vmem:[#allocation2] sm:$0xff]
    %v143 = vld [vmem:[#allocation2 + $0x8] sm:$0xff]
    %v144 = vld [vmem:[#allocation2 + $0x10] sm:$0xff]
    %v145 = vld [vmem:[#allocation2 + $0x18] sm:$0xff]
    %v146 = vld [vmem:[#allocation2 + $0x20] sm:$0xff]
    %v147 = vld [vmem:[#allocation2 + $0x28] sm:$0xff]
    %v148 = vld [vmem:[%s2] sm:$0xff]
    %v149 = vld [vmem:[%s2 + $0x8] sm:$0xff]
    %v150 = vld [vmem:[%s2 + $0x10] sm:$0xff]
    %v151 = vld [vmem:[%s2 + $0x18] sm:$0xff]
    %v152 = vld [vmem:[%s2 + $0x20] sm:$0xff]
    %v153 = vld [vmem:[%s2 + $0x28] sm:$0xff]
    %155 = vset.pattern.permute.xlu0 0
    %156 = vperm.xlu0 %155, %v148
    %v157 = vpop.permute.xlu0 %156
    %160 = vset.pattern.permute.xlu0 0
    %161 = vperm.xlu0 %160, %v149
    %v162 = vpop.permute.xlu0 %161
    %165 = vset.pattern.permute.xlu0 0
    %166 = vperm.xlu0 %165, %v150
    %v167 = vpop.permute.xlu0 %166
    %170 = vset.pattern.permute.xlu0 0
    %171 = vperm.xlu0 %170, %v151
    %v172 = vpop.permute.xlu0 %171
    %175 = vset.pattern.permute.xlu0 0
    %176 = vperm.xlu0 %175, %v152
    %v177 = vpop.permute.xlu0 %176
    %180 = vset.pattern.permute.xlu0 0
    %181 = vperm.xlu0 %180, %v153
    %v182 = vpop.permute.xlu0 %181
    %v184 = vmul.f32 %v142, %v157
    %v185 = vmul.f32 %v143, %v162
    %v186 = vmul.f32 %v144, %v167
    %v187 = vmul.f32 %v145, %v172
    %v188 = vmul.f32 %v146, %v177
    %v189 = vmul.f32 %v147, %v182
    %v190 = vld [vmem:[%s3] sm:$0xff]
    %v191 = vld [vmem:[%s3 + $0x8] sm:$0xff]
    %v192 = vld [vmem:[%s3 + $0x10] sm:$0xff]
    %v193 = vld [vmem:[%s3 + $0x18] sm:$0xff]
    %v194 = vld [vmem:[%s3 + $0x20] sm:$0xff]
    %v195 = vld [vmem:[%s3 + $0x28] sm:$0xff]
    %197 = vset.pattern.permute.xlu0 0
    %198 = vperm.xlu0 %197, %v190
    %v199 = vpop.permute.xlu0 %198
    %202 = vset.pattern.permute.xlu0 0
    %203 = vperm.xlu0 %202, %v191
    %v204 = vpop.permute.xlu0 %203
    %207 = vset.pattern.permute.xlu0 0
    %208 = vperm.xlu0 %207, %v192
    %v209 = vpop.permute.xlu0 %208
    %212 = vset.pattern.permute.xlu0 0
    %213 = vperm.xlu0 %212, %v193
    %v214 = vpop.permute.xlu0 %213
    %217 = vset.pattern.permute.xlu0 0
    %218 = vperm.xlu0 %217, %v194
    %v219 = vpop.permute.xlu0 %218
    %222 = vset.pattern.permute.xlu0 0
    %223 = vperm.xlu0 %222, %v195
    %v224 = vpop.permute.xlu0 %223
    %v226 = vadd.f32 %v184, %v199
    %v227 = vadd.f32 %v185, %v204
    %v228 = vadd.f32 %v186, %v209
    %v229 = vadd.f32 %v187, %v214
    %v230 = vadd.f32 %v188, %v219
    %v231 = vadd.f32 %v189, %v224
    %232 = vst [vmem:[%s4] sm:$0xff] %v226
    %233 = vst [vmem:[%s4 + $0x8] sm:$0xff] %v227
    %234 = vst [vmem:[%s4 + $0x10] sm:$0xff] %v228
    %235 = vst [vmem:[%s4 + $0x18] sm:$0xff] %v229
    %236 = vst [vmem:[%s4 + $0x20] sm:$0xff] %v230
    %237 = vst [vmem:[%s4 + $0x28] sm:$0xff] %v231
  $region25: #{pspnet_forward.22} parent=0 // pred_fallthru
    _
  // Predicated region
  $region26: #{pspnet_forward.22} parent=0 // pred_check
    _
  $region27: #{pspnet_forward.22} parent=0 // pred_check_branch
    %239 = sbr.rel (0) target = $region29
  $region28: #{pspnet_forward.22} parent=0 // pred_region
    _
  $region29: #{pspnet_forward.22} parent=0 // pred_fallthru
    _
  // Predicated region
  $region30: #{pspnet_forward.22} parent=0 // pred_check
    _
  $region31: #{pspnet_forward.22} parent=0 // pred_check_branch
    %241 = sbr.rel (0) target = $region33
  $region32: #{pspnet_forward.22} parent=0 // pred_region
    _
  $region33: #{pspnet_forward.22} parent=0 // pred_fallthru
    _

// kernel: pspnet_forward.23
$region0: #{pspnet_forward.23}
  #allocation0 [shape = 'u32[]', space=smem, size = 0x4, offset = 0x4, fixed_abs, tag = 'smem constant byte address 0x4 - core index']
  #allocation1 [shape = 'u32[144,128]{1,0:T(1,128)}', space=vmem, size = 0x12000, scoped, tag = 'internal scratch']
  #allocation2 [shape = 'f32[48,384]{1,0:T(8,128)}', space=vmem, size = 0x12000, scoped, tag = 'scratch operand']
  %s0 = inlined_call_operand.vmem [shape: bf16[48,6], index: 0, kind: input, shape index: {}]
  %s1 = inlined_call_operand.vmem [shape: bf16[6,384], index: 1, kind: input, shape index: {}]
  %s2 = inlined_call_operand.vmem [shape: f32[48,1], index: 2, kind: input, shape index: {}]
  %s3 = inlined_call_operand.vmem [shape: f32[48,1], index: 3, kind: input, shape index: {}]
  %s4 = inlined_call_operand.vmem [shape: f32[48,384], index: 4, kind: output, shape index: {}]
  %s5 = sld [smem:[#allocation0]]
  $region34: #{pspnet_forward.23} parent=0
    _
  %s7 = ssub.s32 1, %s5
  %s8 = scalar_select 0, %s7, %s5
  // Predicated region
  $region2: #{pspnet_forward.23} parent=0 // pred_check
    _
  $region3: #{pspnet_forward.23} parent=0 // pred_check_branch
    %10 = sbr.rel (0) target = $region5
  $region4: #{pspnet_forward.23} parent=0 // pred_region
    _
  $region5: #{pspnet_forward.23} parent=0 // pred_fallthru
    _
  // Predicated region
  $region6: #{pspnet_forward.23} parent=0 // pred_check
    _
  $region7: #{pspnet_forward.23} parent=0 // pred_check_branch
    %12 = sbr.rel (0) target = $region9
  $region8: #{pspnet_forward.23} parent=0 // pred_region
    _
  $region9: #{pspnet_forward.23} parent=0 // pred_fallthru
    _
  // Predicated region
  $region10: #{pspnet_forward.23} parent=0 // pred_check
    _
  $region11: #{pspnet_forward.23} parent=0 // pred_check_branch
    %14 = sbr.rel (0) target = $region13
  $region12: #{pspnet_forward.23} parent=0 // pred_region
    _
  $region13: #{pspnet_forward.23} parent=0 // pred_fallthru
    _
  // Predicated region
  $region14: #{pspnet_forward.23} parent=0 // pred_check
    _
  $region15: #{pspnet_forward.23} parent=0 // pred_check_branch
    %16 = sbr.rel (0) target = $region17
  $region16: #{pspnet_forward.23} parent=0 // pred_region
    _
  $region17: #{pspnet_forward.23} parent=0 // pred_fallthru
    _
  %p18 = scmp.eq.s32.totalorder 0, 0
  // Predicated region
  $region18: #{pspnet_forward.23} parent=0 // pred_check
    %p19 = pneg %p18
  $region19: #{pspnet_forward.23} parent=0 // pred_check_branch
    %21 = sbr.rel (%p19) target = $region21
  $region20: #{pspnet_forward.23} parent=0 // pred_region
    %22 = vst [vmem:[#allocation2] sm:$0xff] 0.0
    %23 = vst [vmem:[#allocation2 + $0x8] sm:$0xff] 0.0
    %24 = vst [vmem:[#allocation2 + $0x10] sm:$0xff] 0.0
    %25 = vst [vmem:[#allocation2 + $0x18] sm:$0xff] 0.0
    %26 = vst [vmem:[#allocation2 + $0x20] sm:$0xff] 0.0
    %27 = vst [vmem:[#allocation2 + $0x28] sm:$0xff] 0.0
    %28 = vst [vmem:[#allocation2 + $0x30] sm:$0xff] 0.0
    %29 = vst [vmem:[#allocation2 + $0x38] sm:$0xff] 0.0
    %30 = vst [vmem:[#allocation2 + $0x40] sm:$0xff] 0.0
    %31 = vst [vmem:[#allocation2 + $0x48] sm:$0xff] 0.0
    %32 = vst [vmem:[#allocation2 + $0x50] sm:$0xff] 0.0
    %33 = vst [vmem:[#allocation2 + $0x58] sm:$0xff] 0.0
    %34 = vst [vmem:[#allocation2 + $0x60] sm:$0xff] 0.0
    %35 = vst [vmem:[#allocation2 + $0x68] sm:$0xff] 0.0
    %36 = vst [vmem:[#allocation2 + $0x70] sm:$0xff] 0.0
    %37 = vst [vmem:[#allocation2 + $0x78] sm:$0xff] 0.0
    %38 = vst [vmem:[#allocation2 + $0x80] sm:$0xff] 0.0
    %39 = vst [vmem:[#allocation2 + $0x88] sm:$0xff] 0.0
  $region21: #{pspnet_forward.23} parent=0 // pred_fallthru
    _
  %v40 = vld [vmem:[#allocation2] sm:$0xff]
  %v41 = vld [vmem:[#allocation2 + $0x8] sm:$0xff]
  %v42 = vld [vmem:[#allocation2 + $0x10] sm:$0xff]
  %v43 = vld [vmem:[#allocation2 + $0x18] sm:$0xff]
  %v44 = vld [vmem:[#allocation2 + $0x20] sm:$0xff]
  %v45 = vld [vmem:[#allocation2 + $0x28] sm:$0xff]
  %v46 = vld [vmem:[#allocation2 + $0x30] sm:$0xff]
  %v47 = vld [vmem:[#allocation2 + $0x38] sm:$0xff]
  %v48 = vld [vmem:[#allocation2 + $0x40] sm:$0xff]
  %v49 = vld [vmem:[#allocation2 + $0x48] sm:$0xff]
  %v50 = vld [vmem:[#allocation2 + $0x50] sm:$0xff]
  %v51 = vld [vmem:[#allocation2 + $0x58] sm:$0xff]
  %v52 = vld [vmem:[#allocation2 + $0x60] sm:$0xff]
  %v53 = vld [vmem:[#allocation2 + $0x68] sm:$0xff]
  %v54 = vld [vmem:[#allocation2 + $0x70] sm:$0xff]
  %v55 = vld [vmem:[#allocation2 + $0x78] sm:$0xff]
  %v56 = vld [vmem:[#allocation2 + $0x80] sm:$0xff]
  %v57 = vld [vmem:[#allocation2 + $0x88] sm:$0xff]
  %v58 = vld [vmem:[%s0] sm:$0xf]
  %v59 = vld [vmem:[%s0 + $0x4] sm:$0xf]
  %v60 = vld [vmem:[%s0 + $0x8] sm:$0xf]
  %v61 = vld [vmem:[%s0 + $0xc] sm:$0xf]
  %v62 = vld [vmem:[%s0 + $0x10] sm:$0xf]
  %v63 = vld [vmem:[%s0 + $0x14] sm:$0xf]
  %v64 = vld [vmem:[%s1] sm:$0x77]
  %v65 = vld [vmem:[%s1 + $0x8] sm:$0x7]
  %v72 = vunpack.c.l.b16 %v58
  %v73 = vunpack.c.l.b16 %v59
  %v74 = vunpack.c.l.b16 %v60
  %v75 = vunpack.c.l.b16 %v61
  %v76 = vunpack.c.l.b16 %v62
  %v77 = vunpack.c.l.b16 %v63
  %v78 = vpack.c.b16 %v73, %v72
  %v79 = vpack.c.b16 %v75, %v74
  %v80 = vpack.c.b16 %v77, %v76
  %v83 = vunpack.c.l.b16 %v64
  %v84 = vunpack.c.h.b16 %v64
  %v85 = vunpack.c.l.b16 %v65
  %v86 = vpack.c.b16 %v83, %v83
  %v87 = vpack.c.b16 %v84, %v84
  %v88 = vpack.c.b16 %v85, %v85
  %vm89 = vcmask 48128
  %v91 = vsel %vm89, %v78, 0
  %v94 = vsel %vm89, %v79, 0
  %v97 = vsel %vm89, %v80, 0
  %vm99 = vcmask 1042432
  %v101 = vsel %vm99, %v86, 0
  %v104 = vsel %vm99, %v87, 0
  %v107 = vsel %vm99, %v88, 0
  %109 = vmatprep.subr.bf16.mxu0 0
  %110 = vmatpush1.bf16.msra.mxu0 0
  %111 = vmatprep.subr.bf16.mxu0 0
  %112 = vmatpush1.bf16.msra.mxu0 0
  %113 = vmatprep.subr.bf16.mxu0 0
  %114 = vmatpush1.bf16.msra.mxu0 0
  %115 = vmatprep.subr.bf16.mxu0 0
  %116 = vmatpush1.bf16.msra.mxu0 0
  %117 = vmatprep.subr.bf16.mxu0 0
  %118 = vmatpush1.bf16.msra.mxu0 0
  %119 = vmatprep.subr.bf16.mxu0 0
  %120 = vmatpush1.bf16.msra.mxu0 0
  %121 = vmatprep.subr.bf16.mxu0 0
  %122 = vmatpush1.bf16.msra.mxu0 0
  %123 = vmatprep.subr.bf16.mxu0 %v104
  %124 = vmatpush1.bf16.msra.mxu0 %v101
  %125 = vmatprep.subr.bf16.mxu0 0
  %126 = vmatpush2.bf16.msra.mxu0 0
  %127 = vmatprep.subr.bf16.mxu0 0
  %128 = vmatpush2.bf16.msra.mxu0 0
  %129 = vmatprep.subr.bf16.mxu0 0
  %130 = vmatpush2.bf16.msra.mxu0 0
  %131 = vmatprep.subr.bf16.mxu0 0
  %132 = vmatpush2.bf16.msra.mxu0 0
  %133 = vmatprep.subr.bf16.mxu0 0
  %134 = vmatpush2.bf16.msra.mxu0 0
  %135 = vmatprep.subr.bf16.mxu0 0
  %136 = vmatpush2.bf16.msra.mxu0 0
  %137 = vmatprep.subr.bf16.mxu0 0
  %138 = vmatpush2.bf16.msra.mxu0 0
  %139 = vmatprep.subr.bf16.mxu0 0
  %140 = vmatpush2.bf16.msra.mxu0 0
  %141 = vmatprep.mubr.bf16.mxu0 0
  %142 = vmatmul.mubr.bf16.gmra.mxu0 %v91
  %v143 = vpop.f32.mrf.mxu0
  %v144 = vadd.f32 0.0, %v143
  %v145 = vpop.f32.mrf.mxu0
  %v146 = vadd.f32 0.0, %v145
  %v147 = vpop.f32.mrf.mxu0
  %v148 = vadd.f32 0.0, %v147
  %v149 = vpop.f32.mrf.mxu0
  %v150 = vadd.f32 0.0, %v149
  %151 = vmatprep.mubr.bf16.mxu0 0
  %152 = vmatmul.mubr.bf16.gmra.mxu0 %v94
  %v153 = vpop.f32.mrf.mxu0
  %v154 = vadd.f32 0.0, %v153
  %v155 = vpop.f32.mrf.mxu0
  %v156 = vadd.f32 0.0, %v155
  %v157 = vpop.f32.mrf.mxu0
  %v158 = vadd.f32 0.0, %v157
  %v159 = vpop.f32.mrf.mxu0
  %v160 = vadd.f32 0.0, %v159
  %161 = vmatprep.mubr.bf16.mxu0 0
  %162 = vmatmul.mubr.bf16.gmra.mxu0 %v97
  %v163 = vpop.f32.mrf.mxu0
  %v164 = vadd.f32 0.0, %v163
  %v165 = vpop.f32.mrf.mxu0
  %v166 = vadd.f32 0.0, %v165
  %v167 = vpop.f32.mrf.mxu0
  %v168 = vadd.f32 0.0, %v167
  %v169 = vpop.f32.mrf.mxu0
  %v170 = vadd.f32 0.0, %v169
  %171 = vdwg.mxu0
  %172 = vmatprep.subr.bf16.mxu0 0
  %173 = vmatpush1.bf16.msra.mxu0 0
  %174 = vmatprep.subr.bf16.mxu0 0
  %175 = vmatpush1.bf16.msra.mxu0 0
  %176 = vmatprep.subr.bf16.mxu0 0
  %177 = vmatpush1.bf16.msra.mxu0 0
  %178 = vmatprep.subr.bf16.mxu0 0
  %179 = vmatpush1.bf16.msra.mxu0 0
  %180 = vmatprep.subr.bf16.mxu0 0
  %181 = vmatpush1.bf16.msra.mxu0 0
  %182 = vmatprep.subr.bf16.mxu0 0
  %183 = vmatpush1.bf16.msra.mxu0 0
  %184 = vmatprep.subr.bf16.mxu0 0
  %185 = vmatpush1.bf16.msra.mxu0 0
  %186 = vmatprep.subr.bf16.mxu0 0
  %187 = vmatpush1.bf16.msra.mxu0 %v107
  %188 = vmatprep.subr.bf16.mxu0 0
  %189 = vmatpush2.bf16.msra.mxu0 0
  %190 = vmatprep.subr.bf16.mxu0 0
  %191 = vmatpush2.bf16.msra.mxu0 0
  %192 = vmatprep.subr.bf16.mxu0 0
  %193 = vmatpush2.bf16.msra.mxu0 0
  %194 = vmatprep.subr.bf16.mxu0 0
  %195 = vmatpush2.bf16.msra.mxu0 0
  %196 = vmatprep.subr.bf16.mxu0 0
  %197 = vmatpush2.bf16.msra.mxu0 0
  %198 = vmatprep.subr.bf16.mxu0 0
  %199 = vmatpush2.bf16.msra.mxu0 0
  %200 = vmatprep.subr.bf16.mxu0 0
  %201 = vmatpush2.bf16.msra.mxu0 0
  %202 = vmatprep.subr.bf16.mxu0 0
  %203 = vmatpush2.bf16.msra.mxu0 0
  %204 = vmatprep.mubr.bf16.mxu0 0
  %205 = vmatmul.mubr.bf16.gmra.mxu0 %v91
  %v206 = vpop.f32.mrf.mxu0
  %v207 = vadd.f32 0.0, %v206
  %v208 = vpop.f32.mrf.mxu0
  %v209 = vpop.f32.mrf.mxu0
  %v210 = vadd.f32 0.0, %v209
  %v211 = vpop.f32.mrf.mxu0
  %212 = vmatprep.mubr.bf16.mxu0 0
  %213 = vmatmul.mubr.bf16.gmra.mxu0 %v94
  %v214 = vpop.f32.mrf.mxu0
  %v215 = vadd.f32 0.0, %v214
  %v216 = vpop.f32.mrf.mxu0
  %v217 = vpop.f32.mrf.mxu0
  %v218 = vadd.f32 0.0, %v217
  %v219 = vpop.f32.mrf.mxu0
  %220 = vmatprep.mubr.bf16.mxu0 0
  %221 = vmatmul.mubr.bf16.gmra.mxu0 %v97
  %v222 = vpop.f32.mrf.mxu0
  %v223 = vadd.f32 0.0, %v222
  %v224 = vpop.f32.mrf.mxu0
  %v225 = vpop.f32.mrf.mxu0
  %v226 = vadd.f32 0.0, %v225
  %v227 = vpop.f32.mrf.mxu0
  %228 = vdwg.mxu0
  %v229 = vadd.f32 %v40, %v144
  %v230 = vadd.f32 %v41, %v146
  %v231 = vadd.f32 %v42, %v207
  %v232 = vadd.f32 %v43, %v148
  %v233 = vadd.f32 %v44, %v150
  %v234 = vadd.f32 %v45, %v210
  %v235 = vadd.f32 %v46, %v154
  %v236 = vadd.f32 %v47, %v156
  %v237 = vadd.f32 %v48, %v215
  %v238 = vadd.f32 %v49, %v158
  %v239 = vadd.f32 %v50, %v160
  %v240 = vadd.f32 %v51, %v218
  %v241 = vadd.f32 %v52, %v164
  %v242 = vadd.f32 %v53, %v166
  %v243 = vadd.f32 %v54, %v223
  %v244 = vadd.f32 %v55, %v168
  %v245 = vadd.f32 %v56, %v170
  %v246 = vadd.f32 %v57, %v226
  %247 = vst [vmem:[#allocation2] sm:$0xff] %v229
  %248 = vst [vmem:[#allocation2 + $0x8] sm:$0xff] %v230
  %249 = vst [vmem:[#allocation2 + $0x10] sm:$0xff] %v231
  %250 = vst [vmem:[#allocation2 + $0x18] sm:$0xff] %v232
  %251 = vst [vmem:[#allocation2 + $0x20] sm:$0xff] %v233
  %252 = vst [vmem:[#allocation2 + $0x28] sm:$0xff] %v234
  %253 = vst [vmem:[#allocation2 + $0x30] sm:$0xff] %v235
  %254 = vst [vmem:[#allocation2 + $0x38] sm:$0xff] %v236
  %255 = vst [vmem:[#allocation2 + $0x40] sm:$0xff] %v237
  %256 = vst [vmem:[#allocation2 + $0x48] sm:$0xff] %v238
  %257 = vst [vmem:[#allocation2 + $0x50] sm:$0xff] %v239
  %258 = vst [vmem:[#allocation2 + $0x58] sm:$0xff] %v240
  %259 = vst [vmem:[#allocation2 + $0x60] sm:$0xff] %v241
  %260 = vst [vmem:[#allocation2 + $0x68] sm:$0xff] %v242
  %261 = vst [vmem:[#allocation2 + $0x70] sm:$0xff] %v243
  %262 = vst [vmem:[#allocation2 + $0x78] sm:$0xff] %v244
  %263 = vst [vmem:[#allocation2 + $0x80] sm:$0xff] %v245
  %264 = vst [vmem:[#allocation2 + $0x88] sm:$0xff] %v246
  // Predicated region
  $region22: #{pspnet_forward.23} parent=0 // pred_check
    %p265 = pneg %p18
  $region23: #{pspnet_forward.23} parent=0 // pred_check_branch
    %267 = sbr.rel (%p265) target = $region25
  $region24: #{pspnet_forward.23} parent=0 // pred_region
    %v268 = vld [vmem:[#allocation2] sm:$0xff]
    %v269 = vld [vmem:[#allocation2 + $0x8] sm:$0xff]
    %v270 = vld [vmem:[#allocation2 + $0x10] sm:$0xff]
    %v271 = vld [vmem:[#allocation2 + $0x18] sm:$0xff]
    %v272 = vld [vmem:[#allocation2 + $0x20] sm:$0xff]
    %v273 = vld [vmem:[#allocation2 + $0x28] sm:$0xff]
    %v274 = vld [vmem:[#allocation2 + $0x30] sm:$0xff]
    %v275 = vld [vmem:[#allocation2 + $0x38] sm:$0xff]
    %v276 = vld [vmem:[#allocation2 + $0x40] sm:$0xff]
    %v277 = vld [vmem:[#allocation2 + $0x48] sm:$0xff]
    %v278 = vld [vmem:[#allocation2 + $0x50] sm:$0xff]
    %v279 = vld [vmem:[#allocation2 + $0x58] sm:$0xff]
    %v280 = vld [vmem:[#allocation2 + $0x60] sm:$0xff]
    %v281 = vld [vmem:[#allocation2 + $0x68] sm:$0xff]
    %v282 = vld [vmem:[#allocation2 + $0x70] sm:$0xff]
    %v283 = vld [vmem:[#allocation2 + $0x78] sm:$0xff]
    %v284 = vld [vmem:[#allocation2 + $0x80] sm:$0xff]
    %v285 = vld [vmem:[#allocation2 + $0x88] sm:$0xff]
    %v286 = vld [vmem:[%s2] sm:$0xff]
    %v287 = vld [vmem:[%s2 + $0x8] sm:$0xff]
    %v288 = vld [vmem:[%s2 + $0x10] sm:$0xff]
    %v289 = vld [vmem:[%s2 + $0x18] sm:$0xff]
    %v290 = vld [vmem:[%s2 + $0x20] sm:$0xff]
    %v291 = vld [vmem:[%s2 + $0x28] sm:$0xff]
    %293 = vset.pattern.permute.xlu0 0
    %294 = vperm.xlu0 %293, %v286
    %v295 = vpop.permute.xlu0 %294
    %298 = vset.pattern.permute.xlu0 0
    %299 = vperm.xlu0 %298, %v287
    %v300 = vpop.permute.xlu0 %299
    %303 = vset.pattern.permute.xlu0 0
    %304 = vperm.xlu0 %303, %v288
    %v305 = vpop.permute.xlu0 %304
    %308 = vset.pattern.permute.xlu0 0
    %309 = vperm.xlu0 %308, %v289
    %v310 = vpop.permute.xlu0 %309
    %313 = vset.pattern.permute.xlu0 0
    %314 = vperm.xlu0 %313, %v290
    %v315 = vpop.permute.xlu0 %314
    %318 = vset.pattern.permute.xlu0 0
    %319 = vperm.xlu0 %318, %v291
    %v320 = vpop.permute.xlu0 %319
    %v322 = vmul.f32 %v268, %v295
    %v323 = vmul.f32 %v269, %v295
    %v324 = vmul.f32 %v270, %v295
    %v325 = vmul.f32 %v271, %v300
    %v326 = vmul.f32 %v272, %v300
    %v327 = vmul.f32 %v273, %v300
    %v328 = vmul.f32 %v274, %v305
    %v329 = vmul.f32 %v275, %v305
    %v330 = vmul.f32 %v276, %v305
    %v331 = vmul.f32 %v277, %v310
    %v332 = vmul.f32 %v278, %v310
    %v333 = vmul.f32 %v279, %v310
    %v334 = vmul.f32 %v280, %v315
    %v335 = vmul.f32 %v281, %v315
    %v336 = vmul.f32 %v282, %v315
    %v337 = vmul.f32 %v283, %v320
    %v338 = vmul.f32 %v284, %v320
    %v339 = vmul.f32 %v285, %v320
    %v340 = vld [vmem:[%s3] sm:$0xff]
    %v341 = vld [vmem:[%s3 + $0x8] sm:$0xff]
    %v342 = vld [vmem:[%s3 + $0x10] sm:$0xff]
    %v343 = vld [vmem:[%s3 + $0x18] sm:$0xff]
    %v344 = vld [vmem:[%s3 + $0x20] sm:$0xff]
    %v345 = vld [vmem:[%s3 + $0x28] sm:$0xff]
    %347 = vset.pattern.permute.xlu0 0
    %348 = vperm.xlu0 %347, %v340
    %v349 = vpop.permute.xlu0 %348
    %352 = vset.pattern.permute.xlu0 0
    %353 = vperm.xlu0 %352, %v341
    %v354 = vpop.permute.xlu0 %353
    %357 = vset.pattern.permute.xlu0 0
    %358 = vperm.xlu0 %357, %v342
    %v359 = vpop.permute.xlu0 %358
    %362 = vset.pattern.permute.xlu0 0
    %363 = vperm.xlu0 %362, %v343
    %v364 = vpop.permute.xlu0 %363
    %367 = vset.pattern.permute.xlu0 0
    %368 = vperm.xlu0 %367, %v344
    %v369 = vpop.permute.xlu0 %368
    %372 = vset.pattern.permute.xlu0 0
    %373 = vperm.xlu0 %372, %v345
    %v374 = vpop.permute.xlu0 %373
    %v376 = vadd.f32 %v322, %v349
    %v377 = vadd.f32 %v323, %v349
    %v378 = vadd.f32 %v324, %v349
    %v379 = vadd.f32 %v325, %v354
    %v380 = vadd.f32 %v326, %v354
    %v381 = vadd.f32 %v327, %v354
    %v382 = vadd.f32 %v328, %v359
    %v383 = vadd.f32 %v329, %v359
    %v384 = vadd.f32 %v330, %v359
    %v385 = vadd.f32 %v331, %v364
    %v386 = vadd.f32 %v332, %v364
    %v387 = vadd.f32 %v333, %v364
    %v388 = vadd.f32 %v334, %v369
    %v389 = vadd.f32 %v335, %v369
    %v390 = vadd.f32 %v336, %v369
    %v391 = vadd.f32 %v337, %v374
    %v392 = vadd.f32 %v338, %v374
    %v393 = vadd.f32 %v339, %v374
    %394 = vst [vmem:[%s4] sm:$0xff] %v376
    %395 = vst [vmem:[%s4 + $0x8] sm:$0xff] %v377
    %396 = vst [vmem:[%s4 + $0x10] sm:$0xff] %v378
    %397 = vst [vmem:[%s4 + $0x18] sm:$0xff] %v379
    %398 = vst [vmem:[%s4 + $0x20] sm:$0xff] %v380
    %399 = vst [vmem:[%s4 + $0x28] sm:$0xff] %v381
    %400 = vst [vmem:[%s4 + $0x30] sm:$0xff] %v382
    %401 = vst [vmem:[%s4 + $0x38] sm:$0xff] %v383
    %402 = vst [vmem:[%s4 + $0x40] sm:$0xff] %v384
    %403 = vst [vmem:[%s4 + $0x48] sm:$0xff] %v385
    %404 = vst [vmem:[%s4 + $0x50] sm:$0xff] %v386
    %405 = vst [vmem:[%s4 + $0x58] sm:$0xff] %v387
    %406 = vst [vmem:[%s4 + $0x60] sm:$0xff] %v388
    %407 = vst [vmem:[%s4 + $0x68] sm:$0xff] %v389
    %408 = vst [vmem:[%s4 + $0x70] sm:$0xff] %v390
    %409 = vst [vmem:[%s4 + $0x78] sm:$0xff] %v391
    %410 = vst [vmem:[%s4 + $0x80] sm:$0xff] %v392
    %411 = vst [vmem:[%s4 + $0x88] sm:$0xff] %v393
  $region25: #{pspnet_forward.23} parent=0 // pred_fallthru
    _
  // Predicated region
  $region26: #{pspnet_forward.23} parent=0 // pred_check
    _
  $region27: #{pspnet_forward.23} parent=0 // pred_check_branch
    %413 = sbr.rel (0) target = $region29
  $region28: #{pspnet_forward.23} parent=0 // pred_region
    _
  $region29: #{pspnet_forward.23} parent=0 // pred_fallthru
    _
  // Predicated region
  $region30: #{pspnet_forward.23} parent=0 // pred_check
    _
  $region31: #{pspnet_forward.23} parent=0 // pred_check_branch
    %415 = sbr.rel (0) target = $region33
  $region32: #{pspnet_forward.23} parent=0 // pred_region
    _
  $region33: #{pspnet_forward.23} parent=0 // pred_fallthru
    _

</llo_original>
